<compile_context>
chip_gen: v7x
topology: tpu7x:2x2x1
jax: 0.10.0
libtpu: 0.0.40
codegen_flags: <defaults>
</compile_context>

<pallas_src>
import functools

import jax
import jax.numpy as jnp
from jax import lax
from jax.experimental import pallas as pl
from jax.experimental.pallas import tpu as pltpu


def _round_up(x, m):
    return -(-x // m) * m


# ---------------------------------------------------------------------------
# Fused kernel.
#   grid = (B // TB, N_pad // TN); axis 0 "parallel" (batch blocks),
#   axis 1 "arbitrary" (point-tile reduction, innermost).
#   x_ref: (TB, TN, k) bf16 channels-last tile.
#   out_ref: (TB, k*k) f32, written only at the last point-tile.
#   pooled_ref: (TB, 1024) f32 VMEM scratch (running max per batch block).
# ---------------------------------------------------------------------------
def _stnkd_kernel(x_ref,
                  w1_ref, b1_ref, w2_ref, b2_ref, w3_ref, b3_ref,
                  fw1_ref, fb1_ref, fw2_ref, fb2_ref, fw3_ref, fb3_ref,
                  out_ref,
                  pooled_ref,
                  *, cn):
    tb, tn, k = x_ref.shape
    n_chunks = tn // cn
    ni = pl.program_id(1)

    @pl.when(ni == 0)
    def _init():
        pooled_ref[...] = jnp.full(pooled_ref.shape, -jnp.inf, pooled_ref.dtype)

    def conv_chunk(c, running_max):
        start = c * cn
        if not isinstance(c, int):
            start = pl.multiple_of(start, cn)
        # Fold (batch block, chunk of points) into the matmul M dimension.
        x = x_ref[:, pl.ds(start, cn), :].reshape(tb * cn, k)                # bf16
        h = jnp.dot(x, w1_ref[...], preferred_element_type=jnp.float32) + b1_ref[...]
        h = jnp.maximum(h, 0.0).astype(jnp.bfloat16)
        h = jnp.dot(h, w2_ref[...], preferred_element_type=jnp.float32) + b2_ref[...]
        h = jnp.maximum(h, 0.0).astype(jnp.bfloat16)
        h = jnp.dot(h, w3_ref[...], preferred_element_type=jnp.float32)     # (rows, 1024)
        # conv3 bias + ReLU deferred past the max (per-channel bias and the
        # monotone ReLU commute with the max over points) -> two fewer VPU
        # passes over the big f32 intermediate.
        return jnp.maximum(running_max, jnp.max(h.reshape(tb, cn, -1), axis=1))

    init = jnp.full((tb, 1024), -jnp.inf, dtype=jnp.float32)
    if n_chunks == 1:
        tile_max = conv_chunk(0, init)
    else:
        tile_max = lax.fori_loop(0, n_chunks, conv_chunk, init)
    pooled_ref[...] = jnp.maximum(pooled_ref[...], tile_max)

    @pl.when(ni == pl.num_programs(1) - 1)
    def _finalize():
        # Deferred conv3 bias + ReLU, then fc1/fc2 (ReLU) + fc3.  The flattened
        # identity is already folded into fb3, so no extra add.
        g = jnp.maximum(pooled_ref[...] + b3_ref[...], 0.0).astype(jnp.bfloat16)
        f = jnp.dot(g, fw1_ref[...], preferred_element_type=jnp.float32) + fb1_ref[...]
        f = jnp.maximum(f, 0.0).astype(jnp.bfloat16)
        f = jnp.dot(f, fw2_ref[...], preferred_element_type=jnp.float32) + fb2_ref[...]
        f = jnp.maximum(f, 0.0).astype(jnp.bfloat16)
        out_ref[...] = (jnp.dot(f, fw3_ref[...], preferred_element_type=jnp.float32)
                        + fb3_ref[...])


# ---------------------------------------------------------------------------
# Tile selection.
#   TB: batch elements per grid step (full B, or an 8-multiple split into >=2
#       blocks when B is large, so both v7x TensorCores get work).
#   CN: points per inner chunk  -> ~512 matmul rows (~2 MiB f32 conv3 temp).
#   TN: points per grid step    -> ~8192 matmul rows (amortizes step overhead).
#   All point tiles are multiples of 8; N is padded up to N_pad = TN * steps.
# ---------------------------------------------------------------------------
def _pick_tiles(B, N):
    if B % 8 == 0 and B >= 16:
        TB = 8
        while B % (TB * 2) == 0 and TB * 2 <= min(B // 2, 128):
            TB *= 2
    else:
        TB = B                      # full-extent batch block (always legal)

    CN = _round_up(max(1, 512 // max(TB, 1)), 8)
    if N <= CN:
        CN = _round_up(N, 8)
        return TB, CN, CN, CN

    TN_target = CN * max(1, 8192 // (TB * CN))
    n_steps = -(-N // TN_target)                      # ceil
    TN = _round_up(-(-N // n_steps), CN)
    return TB, CN, TN, TN * n_steps


# ---------------------------------------------------------------------------
# Forward wrapper
# ---------------------------------------------------------------------------
def stnkd_forward(x_bkn, params, k):
    """x_bkn: (B, k, N) float32 (PyTorch NCW layout). Returns (B, k, k) float32."""
    B, k_in, N = x_bkn.shape
    assert k_in == k
    (w1, b1, w2, b2, w3, b3, fw1, fb1, fw2, fb2, fw3, fb3) = params

    bf16 = jnp.bfloat16
    # Channels-last + bf16 cast: every pointwise conv becomes a plain
    # (rows, C_in) @ (C_in, C_out) MXU matmul with lane-dense outputs.
    x = jnp.transpose(x_bkn, (0, 2, 1)).astype(bf16)                         # (B, N, k)

    TB, CN, TN, N_pad = _pick_tiles(B, N)
    if N_pad != N:
        # Replicate the last real point ("edge" padding): exact for the max.
        x = jnp.pad(x, ((0, 0), (0, N_pad - N), (0, 0)), mode="edge")

    w1b, w2b, w3b = (w.astype(bf16) for w in (w1, w2, w3))
    fw1b, fw2b, fw3b = (w.astype(bf16) for w in (fw1, fw2, fw3))
    # Fold the flattened identity into the fc3 bias.
    fb3i = fb3 + jnp.eye(k, dtype=jnp.float32).reshape(1, k * k)

    weights = (w1b, b1, w2b, b2, w3b, b3, fw1b, fb1, fw2b, fb2, fw3b, fb3i)

    def _const_spec(a):
        zeros = (0,) * a.ndim
        return pl.BlockSpec(a.shape, lambda bi, ni, _z=zeros: _z)

    grid = (B // TB, N_pad // TN)

    w_bytes = sum(int(a.size) * a.dtype.itemsize for a in weights)
    cost = pl.CostEstimate(
        flops=(2 * B * N_pad * (k * 64 + 64 * 128 + 128 * 1024)
               + 2 * B * (1024 * 512 + 512 * 256 + 256 * k * k)),
        transcendentals=0,
        bytes_accessed=int(x.size) * x.dtype.itemsize + w_bytes + B * k * k * 4,
    )

    out_flat = pl.pallas_call(
        functools.partial(_stnkd_kernel, cn=CN),
        out_shape=jax.ShapeDtypeStruct((B, k * k), jnp.float32),
        grid_spec=pltpu.PrefetchScalarGridSpec(
            num_scalar_prefetch=0,
            grid=grid,
            in_specs=[pl.BlockSpec((TB, TN, k), lambda bi, ni: (bi, ni, 0))]
                     + [_const_spec(a) for a in weights],
            out_specs=pl.BlockSpec((TB, k * k), lambda bi, ni: (bi, 0)),
            scratch_shapes=[pltpu.VMEM((TB, 1024), jnp.float32)],
        ),
        compiler_params=pltpu.CompilerParams(
            dimension_semantics=("parallel", "arbitrary"),
            vmem_limit_bytes=48 << 20,
        ),
        cost_estimate=cost,
    )(x, *weights)

    return out_flat.reshape(B, k, k)


# ---------------------------------------------------------------------------
# Synthetic parameters (deterministic)
# ---------------------------------------------------------------------------
def init_params(key, k):
    """Conv1d(cin, cout, 1) / Linear(cin, cout) weights stored as (cin, cout) so
    each layer is `x @ W + b`; biases stored as (1, cout)."""
    dims = [
        (k, 64), (64, 128), (128, 1024),        # conv1..3
        (1024, 512), (512, 256), (256, k * k),  # fc1..3
    ]
    params = []
    for i, (cin, cout) in enumerate(dims):
        kw, kb, key = jax.random.split(jax.random.fold_in(key, i), 3)
        scale = 1.0 / jnp.sqrt(jnp.float32(cin))
        w = jax.random.uniform(kw, (cin, cout), jnp.float32, -scale, scale)
        b = jax.random.uniform(kb, (1, cout), jnp.float32, -scale, scale)
        params.extend([w, b])
    return tuple(params)


# ---------------------------------------------------------------------------
# Pure-JAX reference (same bf16-matmul / f32-accumulate recipe as the kernel)
# ---------------------------------------------------------------------------
def stnkd_reference(x_bkn, params, k):
    (w1, b1, w2, b2, w3, b3, fw1, fb1, fw2, fb2, fw3, fb3) = params
    bf16, f32 = jnp.bfloat16, jnp.float32
    x = jnp.transpose(x_bkn, (0, 2, 1)).astype(bf16)                         # (B, N, k)
    h = jax.nn.relu(jnp.einsum('bnc,cd->bnd', x, w1.astype(bf16),
                               preferred_element_type=f32) + b1)
    h = jax.nn.relu(jnp.einsum('bnc,cd->bnd', h.astype(bf16), w2.astype(bf16),
                               preferred_element_type=f32) + b2)
    h = jax.nn.relu(jnp.einsum('bnc,cd->bnd', h.astype(bf16), w3.astype(bf16),
                               preferred_element_type=f32) + b3)
    g = jnp.max(h, axis=1)                                                   # (B, 1024)
    f = jax.nn.relu(jnp.dot(g.astype(bf16), fw1.astype(bf16),
                            preferred_element_type=f32) + fb1)
    f = jax.nn.relu(jnp.dot(f.astype(bf16), fw2.astype(bf16),
                            preferred_element_type=f32) + fb2)
    f = jnp.dot(f.astype(bf16), fw3.astype(bf16), preferred_element_type=f32) + fb3
    f = f + jnp.eye(k, dtype=f32).reshape(1, k * k)
    return f.reshape(-1, k, k)


if __name__ == "__main__":
    K = 16        # feature-transform dimension (module default is 64; small here)
    B = 2         # batch size
    N = 32        # number of points

    key = jax.random.PRNGKey(0)
    kx, kp = jax.random.split(key)
    x = jax.random.normal(kx, (B, K, N), dtype=jnp.float32)   # PyTorch NCW layout
    params = init_params(kp, K)

    fwd = jax.jit(functools.partial(stnkd_forward, k=K))
    out = jax.block_until_ready(fwd(x, params))
    assert out.shape == (B, K, K), out.shape

    ref = stnkd_reference(x, params, K)
    assert jnp.allclose(out, ref, atol=1e-2, rtol=1e-2), "mismatch vs reference"

    print("KERNEL_OK")
</pallas_src>

<mosaic_0001>
module attributes {stable_mosaic.version = 11 : i64} {
  func.func @_stnkd_kernel(%arg0: i32, %arg1: i32, %arg2: memref<2x32x16xbf16, #tpu.memory_space<vmem>>, %arg3: memref<16x64xbf16, #tpu.memory_space<vmem>>, %arg4: memref<1x64xf32, #tpu.memory_space<vmem>>, %arg5: memref<64x128xbf16, #tpu.memory_space<vmem>>, %arg6: memref<1x128xf32, #tpu.memory_space<vmem>>, %arg7: memref<128x1024xbf16, #tpu.memory_space<vmem>>, %arg8: memref<1x1024xf32, #tpu.memory_space<vmem>>, %arg9: memref<1024x512xbf16, #tpu.memory_space<vmem>>, %arg10: memref<1x512xf32, #tpu.memory_space<vmem>>, %arg11: memref<512x256xbf16, #tpu.memory_space<vmem>>, %arg12: memref<1x256xf32, #tpu.memory_space<vmem>>, %arg13: memref<256x256xbf16, #tpu.memory_space<vmem>>, %arg14: memref<1x256xf32, #tpu.memory_space<vmem>>, %arg15: memref<2x256xf32, #tpu.memory_space<vmem>>, %arg16: memref<2x1024xf32, #tpu.memory_space<vmem>>) attributes {dimension_semantics = [#tpu.dimension_semantics<parallel>, #tpu.dimension_semantics<arbitrary>], iteration_bounds = array<i64: 1, 1>, scalar_prefetch = 0 : i64, scratch_operands = 1 : i64, tpu.core_type = #tpu.core_type<tc>, window_params = [{transform_indices = @transform_0, window_bounds = array<i64: 2, 32, 16>}, {pipeline_mode = #tpu.pipeline_mode<synchronous>, transform_indices = @transform_1, window_bounds = array<i64: 16, 64>}, {pipeline_mode = #tpu.pipeline_mode<synchronous>, transform_indices = @transform_2, window_bounds = array<i64: 1, 64>}, {pipeline_mode = #tpu.pipeline_mode<synchronous>, transform_indices = @transform_3, window_bounds = array<i64: 64, 128>}, {pipeline_mode = #tpu.pipeline_mode<synchronous>, transform_indices = @transform_4, window_bounds = array<i64: 1, 128>}, {pipeline_mode = #tpu.pipeline_mode<synchronous>, transform_indices = @transform_5, window_bounds = array<i64: 128, 1024>}, {pipeline_mode = #tpu.pipeline_mode<synchronous>, transform_indices = @transform_6, window_bounds = array<i64: 1, 1024>}, {pipeline_mode = #tpu.pipeline_mode<synchronous>, transform_indices = @transform_7, window_bounds = array<i64: 1024, 512>}, {pipeline_mode = #tpu.pipeline_mode<synchronous>, transform_indices = @transform_8, window_bounds = array<i64: 1, 512>}, {pipeline_mode = #tpu.pipeline_mode<synchronous>, transform_indices = @transform_9, window_bounds = array<i64: 512, 256>}, {pipeline_mode = #tpu.pipeline_mode<synchronous>, transform_indices = @transform_10, window_bounds = array<i64: 1, 256>}, {pipeline_mode = #tpu.pipeline_mode<synchronous>, transform_indices = @transform_11, window_bounds = array<i64: 256, 256>}, {pipeline_mode = #tpu.pipeline_mode<synchronous>, transform_indices = @transform_12, window_bounds = array<i64: 1, 256>}, {transform_indices = @transform_13, window_bounds = array<i64: 2, 256>}]} {
    %c0_i32 = arith.constant 0 : i32
    %0 = arith.cmpi eq, %arg1, %c0_i32 : i32
    %1 = arith.extui %0 : i1 to i32
    %c0_i32_0 = arith.constant 0 : i32
    %2 = arith.cmpi ne, %1, %c0_i32_0 : i32
    scf.if %2 {
      %cst_25 = arith.constant 0xFF800000 : f32
      %33 = vector.broadcast %cst_25 : f32 to vector<2x1024xf32>
      %c0_26 = arith.constant 0 : index
      %c0_27 = arith.constant 0 : index
      %34 = vector.load %arg16[%c0_26, %c0_27] : memref<2x1024xf32, #tpu.memory_space<vmem>>, vector<2x1024xf32>
      tpu.vector_store %arg16[%c0_26, %c0_27], %33 {strides = array<i32>} : memref<2x1024xf32, #tpu.memory_space<vmem>>, vector<2x1024xf32>,
    } else {
    }
    %cst = arith.constant 0xFF800000 : f32
    %3 = vector.broadcast %cst : f32 to vector<2x1024xf32>
    %c0 = arith.constant 0 : index
    %c0_1 = arith.constant 0 : index
    %c0_2 = arith.constant 0 : index
    %4 = vector.load %arg2[%c0, %c0_1, %c0_2] : memref<2x32x16xbf16, #tpu.memory_space<vmem>>, vector<2x32x16xbf16>
    %5 = vector.shape_cast %4 : vector<2x32x16xbf16> to vector<64x16xbf16>
    %c0_3 = arith.constant 0 : index
    %c0_4 = arith.constant 0 : index
    %6 = vector.load %arg3[%c0_3, %c0_4] : memref<16x64xbf16, #tpu.memory_space<vmem>>, vector<16x64xbf16>
    %cst_5 = arith.constant dense<0.000000e+00> : vector<64x64xf32>
    %7 = tpu.matmul %5, %6, %cst_5 {dimension_numbers = #tpu.dot_dimension_numbers<[1], [0], [0], [1], [0, 0, 1, 1], [], []>} : vector<64x16xbf16>, vector<16x64xbf16>, vector<64x64xf32> -> vector<64x64xf32>
    %c0_6 = arith.constant 0 : index
    %c0_7 = arith.constant 0 : index
    %8 = vector.load %arg4[%c0_6, %c0_7] : memref<1x64xf32, #tpu.memory_space<vmem>>, vector<1x64xf32>
    %9 = vector.broadcast %8 : vector<1x64xf32> to vector<64x64xf32>
    %10 = arith.addf %7, %9 : vector<64x64xf32>
    %cst_8 = arith.constant 0.000000e+00 : f32
    %11 = vector.broadcast %cst_8 : f32 to vector<64x64xf32>
    %12 = arith.maximumf %10, %11 : vector<64x64xf32>
    %13 = arith.truncf %12 : vector<64x64xf32> to vector<64x64xbf16>
    %c0_9 = arith.constant 0 : index
    %c0_10 = arith.constant 0 : index
    %14 = vector.load %arg5[%c0_9, %c0_10] : memref<64x128xbf16, #tpu.memory_space<vmem>>, vector<64x128xbf16>
    %cst_11 = arith.constant dense<0.000000e+00> : vector<64x128xf32>
    %15 = tpu.matmul %13, %14, %cst_11 {dimension_numbers = #tpu.dot_dimension_numbers<[1], [0], [0], [1], [0, 0, 1, 1], [], []>} : vector<64x64xbf16>, vector<64x128xbf16>, vector<64x128xf32> -> vector<64x128xf32>
    %c0_12 = arith.constant 0 : index
    %c0_13 = arith.constant 0 : index
    %16 = vector.load %arg6[%c0_12, %c0_13] : memref<1x128xf32, #tpu.memory_space<vmem>>, vector<1x128xf32>
    %17 = vector.broadcast %16 : vector<1x128xf32> to vector<64x128xf32>
    %18 = arith.addf %15, %17 : vector<64x128xf32>
    %cst_14 = arith.constant 0.000000e+00 : f32
    %19 = vector.broadcast %cst_14 : f32 to vector<64x128xf32>
    %20 = arith.maximumf %18, %19 : vector<64x128xf32>
    %21 = arith.truncf %20 : vector<64x128xf32> to vector<64x128xbf16>
    %c0_15 = arith.constant 0 : index
    %c0_16 = arith.constant 0 : index
    %22 = vector.load %arg7[%c0_15, %c0_16] : memref<128x1024xbf16, #tpu.memory_space<vmem>>, vector<128x1024xbf16>
    %cst_17 = arith.constant dense<0.000000e+00> : vector<64x1024xf32>
    %23 = tpu.matmul %21, %22, %cst_17 {dimension_numbers = #tpu.dot_dimension_numbers<[1], [0], [0], [1], [0, 0, 1, 1], [], []>} : vector<64x128xbf16>, vector<128x1024xbf16>, vector<64x1024xf32> -> vector<64x1024xf32>
    %24 = vector.shape_cast %23 : vector<64x1024xf32> to vector<2x32x1024xf32>
    %cst_18 = arith.constant dense<0xFF800000> : vector<2x1024xf32>
    %25 = vector.multi_reduction <maximumf>, %24, %cst_18 [1] : vector<2x32x1024xf32> to vector<2x1024xf32>
    %26 = arith.maximumf %3, %25 : vector<2x1024xf32>
    %c0_19 = arith.constant 0 : index
    %c0_20 = arith.constant 0 : index
    %27 = vector.load %arg16[%c0_19, %c0_20] : memref<2x1024xf32, #tpu.memory_space<vmem>>, vector<2x1024xf32>
    %28 = arith.maximumf %27, %26 : vector<2x1024xf32>
    %c0_21 = arith.constant 0 : index
    %c0_22 = arith.constant 0 : index
    %29 = vector.load %arg16[%c0_21, %c0_22] : memref<2x1024xf32, #tpu.memory_space<vmem>>, vector<2x1024xf32>
    tpu.vector_store %arg16[%c0_21, %c0_22], %28 {strides = array<i32>} : memref<2x1024xf32, #tpu.memory_space<vmem>>, vector<2x1024xf32>,
    %c0_i32_23 = arith.constant 0 : i32
    %30 = arith.cmpi eq, %arg1, %c0_i32_23 : i32
    %31 = arith.extui %30 : i1 to i32
    %c0_i32_24 = arith.constant 0 : i32
    %32 = arith.cmpi ne, %31, %c0_i32_24 : i32
    scf.if %32 {
      %c0_25 = arith.constant 0 : index
      %c0_26 = arith.constant 0 : index
      %33 = vector.load %arg16[%c0_25, %c0_26] : memref<2x1024xf32, #tpu.memory_space<vmem>>, vector<2x1024xf32>
      %c0_27 = arith.constant 0 : index
      %c0_28 = arith.constant 0 : index
      %34 = vector.load %arg8[%c0_27, %c0_28] : memref<1x1024xf32, #tpu.memory_space<vmem>>, vector<1x1024xf32>
      %35 = vector.broadcast %34 : vector<1x1024xf32> to vector<2x1024xf32>
      %36 = arith.addf %33, %35 : vector<2x1024xf32>
      %cst_29 = arith.constant 0.000000e+00 : f32
      %37 = vector.broadcast %cst_29 : f32 to vector<2x1024xf32>
      %38 = arith.maximumf %36, %37 : vector<2x1024xf32>
      %39 = arith.truncf %38 : vector<2x1024xf32> to vector<2x1024xbf16>
      %c0_30 = arith.constant 0 : index
      %c0_31 = arith.constant 0 : index
      %40 = vector.load %arg9[%c0_30, %c0_31] : memref<1024x512xbf16, #tpu.memory_space<vmem>>, vector<1024x512xbf16>
      %cst_32 = arith.constant dense<0.000000e+00> : vector<2x512xf32>
      %41 = tpu.matmul %39, %40, %cst_32 {dimension_numbers = #tpu.dot_dimension_numbers<[1], [0], [0], [1], [0, 0, 1, 1], [], []>} : vector<2x1024xbf16>, vector<1024x512xbf16>, vector<2x512xf32> -> vector<2x512xf32>
      %c0_33 = arith.constant 0 : index
      %c0_34 = arith.constant 0 : index
      %42 = vector.load %arg10[%c0_33, %c0_34] : memref<1x512xf32, #tpu.memory_space<vmem>>, vector<1x512xf32>
      %43 = vector.broadcast %42 : vector<1x512xf32> to vector<2x512xf32>
      %44 = arith.addf %41, %43 : vector<2x512xf32>
      %cst_35 = arith.constant 0.000000e+00 : f32
      %45 = vector.broadcast %cst_35 : f32 to vector<2x512xf32>
      %46 = arith.maximumf %44, %45 : vector<2x512xf32>
      %47 = arith.truncf %46 : vector<2x512xf32> to vector<2x512xbf16>
      %c0_36 = arith.constant 0 : index
      %c0_37 = arith.constant 0 : index
      %48 = vector.load %arg11[%c0_36, %c0_37] : memref<512x256xbf16, #tpu.memory_space<vmem>>, vector<512x256xbf16>
      %cst_38 = arith.constant dense<0.000000e+00> : vector<2x256xf32>
      %49 = tpu.matmul %47, %48, %cst_38 {dimension_numbers = #tpu.dot_dimension_numbers<[1], [0], [0], [1], [0, 0, 1, 1], [], []>} : vector<2x512xbf16>, vector<512x256xbf16>, vector<2x256xf32> -> vector<2x256xf32>
      %c0_39 = arith.constant 0 : index
      %c0_40 = arith.constant 0 : index
      %50 = vector.load %arg12[%c0_39, %c0_40] : memref<1x256xf32, #tpu.memory_space<vmem>>, vector<1x256xf32>
      %51 = vector.broadcast %50 : vector<1x256xf32> to vector<2x256xf32>
      %52 = arith.addf %49, %51 : vector<2x256xf32>
      %cst_41 = arith.constant 0.000000e+00 : f32
      %53 = vector.broadcast %cst_41 : f32 to vector<2x256xf32>
      %54 = arith.maximumf %52, %53 : vector<2x256xf32>
      %55 = arith.truncf %54 : vector<2x256xf32> to vector<2x256xbf16>
      %c0_42 = arith.constant 0 : index
      %c0_43 = arith.constant 0 : index
      %56 = vector.load %arg13[%c0_42, %c0_43] : memref<256x256xbf16, #tpu.memory_space<vmem>>, vector<256x256xbf16>
      %cst_44 = arith.constant dense<0.000000e+00> : vector<2x256xf32>
      %57 = tpu.matmul %55, %56, %cst_44 {dimension_numbers = #tpu.dot_dimension_numbers<[1], [0], [0], [1], [0, 0, 1, 1], [], []>} : vector<2x256xbf16>, vector<256x256xbf16>, vector<2x256xf32> -> vector<2x256xf32>
      %c0_45 = arith.constant 0 : index
      %c0_46 = arith.constant 0 : index
      %58 = vector.load %arg14[%c0_45, %c0_46] : memref<1x256xf32, #tpu.memory_space<vmem>>, vector<1x256xf32>
      %59 = vector.broadcast %58 : vector<1x256xf32> to vector<2x256xf32>
      %60 = arith.addf %57, %59 : vector<2x256xf32>
      %c0_47 = arith.constant 0 : index
      %c0_48 = arith.constant 0 : index
      %61 = vector.load %arg15[%c0_47, %c0_48] : memref<2x256xf32, #tpu.memory_space<vmem>>, vector<2x256xf32>
      tpu.vector_store %arg15[%c0_47, %c0_48], %60 {strides = array<i32>} : memref<2x256xf32, #tpu.memory_space<vmem>>, vector<2x256xf32>,
    } else {
    }
    return
  }
  func.func @transform_0(%arg0: i32, %arg1: i32) -> (i32, i32, i32) {
    %c0_i32 = arith.constant 0 : i32
    %c0_i32_0 = arith.constant 0 : i32
    return %arg0, %arg1, %c0_i32 : i32, i32, i32
  }
  func.func @transform_1(%arg0: i32, %arg1: i32) -> (i32, i32) {
    %c0_i32 = arith.constant 0 : i32
    %c0_i32_0 = arith.constant 0 : i32
    %c0_i32_1 = arith.constant 0 : i32
    return %c0_i32, %c0_i32_0 : i32, i32
  }
  func.func @transform_2(%arg0: i32, %arg1: i32) -> (i32, i32) {
    %c0_i32 = arith.constant 0 : i32
    %c0_i32_0 = arith.constant 0 : i32
    %c0_i32_1 = arith.constant 0 : i32
    return %c0_i32, %c0_i32_0 : i32, i32
  }
  func.func @transform_3(%arg0: i32, %arg1: i32) -> (i32, i32) {
    %c0_i32 = arith.constant 0 : i32
    %c0_i32_0 = arith.constant 0 : i32
    %c0_i32_1 = arith.constant 0 : i32
    return %c0_i32, %c0_i32_0 : i32, i32
  }
  func.func @transform_4(%arg0: i32, %arg1: i32) -> (i32, i32) {
    %c0_i32 = arith.constant 0 : i32
    %c0_i32_0 = arith.constant 0 : i32
    %c0_i32_1 = arith.constant 0 : i32
    return %c0_i32, %c0_i32_0 : i32, i32
  }
  func.func @transform_5(%arg0: i32, %arg1: i32) -> (i32, i32) {
    %c0_i32 = arith.constant 0 : i32
    %c0_i32_0 = arith.constant 0 : i32
    %c0_i32_1 = arith.constant 0 : i32
    return %c0_i32, %c0_i32_0 : i32, i32
  }
  func.func @transform_6(%arg0: i32, %arg1: i32) -> (i32, i32) {
    %c0_i32 = arith.constant 0 : i32
    %c0_i32_0 = arith.constant 0 : i32
    %c0_i32_1 = arith.constant 0 : i32
    return %c0_i32, %c0_i32_0 : i32, i32
  }
  func.func @transform_7(%arg0: i32, %arg1: i32) -> (i32, i32) {
    %c0_i32 = arith.constant 0 : i32
    %c0_i32_0 = arith.constant 0 : i32
    %c0_i32_1 = arith.constant 0 : i32
    return %c0_i32, %c0_i32_0 : i32, i32
  }
  func.func @transform_8(%arg0: i32, %arg1: i32) -> (i32, i32) {
    %c0_i32 = arith.constant 0 : i32
    %c0_i32_0 = arith.constant 0 : i32
    %c0_i32_1 = arith.constant 0 : i32
    return %c0_i32, %c0_i32_0 : i32, i32
  }
  func.func @transform_9(%arg0: i32, %arg1: i32) -> (i32, i32) {
    %c0_i32 = arith.constant 0 : i32
    %c0_i32_0 = arith.constant 0 : i32
    %c0_i32_1 = arith.constant 0 : i32
    return %c0_i32, %c0_i32_0 : i32, i32
  }
  func.func @transform_10(%arg0: i32, %arg1: i32) -> (i32, i32) {
    %c0_i32 = arith.constant 0 : i32
    %c0_i32_0 = arith.constant 0 : i32
    %c0_i32_1 = arith.constant 0 : i32
    return %c0_i32, %c0_i32_0 : i32, i32
  }
  func.func @transform_11(%arg0: i32, %arg1: i32) -> (i32, i32) {
    %c0_i32 = arith.constant 0 : i32
    %c0_i32_0 = arith.constant 0 : i32
    %c0_i32_1 = arith.constant 0 : i32
    return %c0_i32, %c0_i32_0 : i32, i32
  }
  func.func @transform_12(%arg0: i32, %arg1: i32) -> (i32, i32) {
    %c0_i32 = arith.constant 0 : i32
    %c0_i32_0 = arith.constant 0 : i32
    %c0_i32_1 = arith.constant 0 : i32
    return %c0_i32, %c0_i32_0 : i32, i32
  }
  func.func @transform_13(%arg0: i32, %arg1: i32) -> (i32, i32) {
    %c0_i32 = arith.constant 0 : i32
    %c0_i32_0 = arith.constant 0 : i32
    return %arg0, %c0_i32 : i32, i32
  }
}

</mosaic_0001>

<llo_original>
// kernel: stnkd_forward.1
$region0: #{stnkd_forward.1}
  #allocation0 [shape = 'u32[]', space=smem, size = 0x4, offset = 0x4, fixed_abs, tag = 'smem constant byte address 0x4 - core index']
  #allocation1 [shape = 'u32[144,128]{1,0:T(1,128)}', space=vmem, size = 0x12000, scoped, tag = 'internal scratch']
  #allocation2 [shape = 'f32[2,1024]{1,0:T(2,128)}', space=vmem, size = 0x2000, scoped, tag = 'scratch operand']
  %s0 = inlined_call_operand.vmem [shape: bf16[2,32,16], index: 0, kind: input, shape index: {}]
  %s1 = inlined_call_operand.vmem [shape: bf16[16,64], index: 1, kind: input, shape index: {}]
  %s2 = inlined_call_operand.vmem [shape: f32[1,64], index: 2, kind: input, shape index: {}]
  %s3 = inlined_call_operand.vmem [shape: bf16[64,128], index: 3, kind: input, shape index: {}]
  %s4 = inlined_call_operand.vmem [shape: f32[1,128], index: 4, kind: input, shape index: {}]
  %s5 = inlined_call_operand.vmem [shape: bf16[128,1024], index: 5, kind: input, shape index: {}]
  %s6 = inlined_call_operand.vmem [shape: f32[1,1024], index: 6, kind: input, shape index: {}]
  %s7 = inlined_call_operand.vmem [shape: bf16[1024,512], index: 7, kind: input, shape index: {}]
  %s8 = inlined_call_operand.vmem [shape: f32[1,512], index: 8, kind: input, shape index: {}]
  %s9 = inlined_call_operand.vmem [shape: bf16[512,256], index: 9, kind: input, shape index: {}]
  %s10 = inlined_call_operand.vmem [shape: f32[1,256], index: 10, kind: input, shape index: {}]
  %s11 = inlined_call_operand.vmem [shape: bf16[256,256], index: 11, kind: input, shape index: {}]
  %s12 = inlined_call_operand.vmem [shape: f32[1,256], index: 12, kind: input, shape index: {}]
  %s13 = inlined_call_operand.vmem [shape: f32[2,256], index: 13, kind: output, shape index: {}]
  %s14 = sld [smem:[#allocation0]]
  $region70: #{stnkd_forward.1} parent=0
    _
  %s16 = ssub.s32 1, %s14
  %s17 = scalar_select 0, %s16, %s14
  // Predicated region
  $region2: #{stnkd_forward.1} parent=0 // pred_check
    _
  $region3: #{stnkd_forward.1} parent=0 // pred_check_branch
    %19 = sbr.rel (0) target = $region5
  $region4: #{stnkd_forward.1} parent=0 // pred_region
    _
  $region5: #{stnkd_forward.1} parent=0 // pred_fallthru
    _
  // Predicated region
  $region6: #{stnkd_forward.1} parent=0 // pred_check
    _
  $region7: #{stnkd_forward.1} parent=0 // pred_check_branch
    %21 = sbr.rel (0) target = $region9
  $region8: #{stnkd_forward.1} parent=0 // pred_region
    _
  $region9: #{stnkd_forward.1} parent=0 // pred_fallthru
    _
  // Predicated region
  $region10: #{stnkd_forward.1} parent=0 // pred_check
    _
  $region11: #{stnkd_forward.1} parent=0 // pred_check_branch
    %23 = sbr.rel (0) target = $region13
  $region12: #{stnkd_forward.1} parent=0 // pred_region
    _
  $region13: #{stnkd_forward.1} parent=0 // pred_fallthru
    _
  // Predicated region
  $region14: #{stnkd_forward.1} parent=0 // pred_check
    _
  $region15: #{stnkd_forward.1} parent=0 // pred_check_branch
    %25 = sbr.rel (0) target = $region17
  $region16: #{stnkd_forward.1} parent=0 // pred_region
    _
  $region17: #{stnkd_forward.1} parent=0 // pred_fallthru
    _
  // Predicated region
  $region18: #{stnkd_forward.1} parent=0 // pred_check
    _
  $region19: #{stnkd_forward.1} parent=0 // pred_check_branch
    %27 = sbr.rel (0) target = $region21
  $region20: #{stnkd_forward.1} parent=0 // pred_region
    _
  $region21: #{stnkd_forward.1} parent=0 // pred_fallthru
    _
  // Predicated region
  $region22: #{stnkd_forward.1} parent=0 // pred_check
    _
  $region23: #{stnkd_forward.1} parent=0 // pred_check_branch
    %29 = sbr.rel (0) target = $region25
  $region24: #{stnkd_forward.1} parent=0 // pred_region
    _
  $region25: #{stnkd_forward.1} parent=0 // pred_fallthru
    _
  // Predicated region
  $region26: #{stnkd_forward.1} parent=0 // pred_check
    _
  $region27: #{stnkd_forward.1} parent=0 // pred_check_branch
    %31 = sbr.rel (0) target = $region29
  $region28: #{stnkd_forward.1} parent=0 // pred_region
    _
  $region29: #{stnkd_forward.1} parent=0 // pred_fallthru
    _
  // Predicated region
  $region30: #{stnkd_forward.1} parent=0 // pred_check
    _
  $region31: #{stnkd_forward.1} parent=0 // pred_check_branch
    %33 = sbr.rel (0) target = $region33
  $region32: #{stnkd_forward.1} parent=0 // pred_region
    _
  $region33: #{stnkd_forward.1} parent=0 // pred_fallthru
    _
  // Predicated region
  $region34: #{stnkd_forward.1} parent=0 // pred_check
    _
  $region35: #{stnkd_forward.1} parent=0 // pred_check_branch
    %35 = sbr.rel (0) target = $region37
  $region36: #{stnkd_forward.1} parent=0 // pred_region
    _
  $region37: #{stnkd_forward.1} parent=0 // pred_fallthru
    _
  // Predicated region
  $region38: #{stnkd_forward.1} parent=0 // pred_check
    _
  $region39: #{stnkd_forward.1} parent=0 // pred_check_branch
    %37 = sbr.rel (0) target = $region41
  $region40: #{stnkd_forward.1} parent=0 // pred_region
    _
  $region41: #{stnkd_forward.1} parent=0 // pred_fallthru
    _
  // Predicated region
  $region42: #{stnkd_forward.1} parent=0 // pred_check
    _
  $region43: #{stnkd_forward.1} parent=0 // pred_check_branch
    %39 = sbr.rel (0) target = $region45
  $region44: #{stnkd_forward.1} parent=0 // pred_region
    _
  $region45: #{stnkd_forward.1} parent=0 // pred_fallthru
    _
  // Predicated region
  $region46: #{stnkd_forward.1} parent=0 // pred_check
    _
  $region47: #{stnkd_forward.1} parent=0 // pred_check_branch
    %41 = sbr.rel (0) target = $region49
  $region48: #{stnkd_forward.1} parent=0 // pred_region
    _
  $region49: #{stnkd_forward.1} parent=0 // pred_fallthru
    _
  // Predicated region
  $region50: #{stnkd_forward.1} parent=0 // pred_check
    _
  $region51: #{stnkd_forward.1} parent=0 // pred_check_branch
    %43 = sbr.rel (0) target = $region53
  $region52: #{stnkd_forward.1} parent=0 // pred_region
    _
  $region53: #{stnkd_forward.1} parent=0 // pred_fallthru
    _
  %p45 = scmp.eq.s32.totalorder 0, 0
  // Predicated region
  $region54: #{stnkd_forward.1} parent=0 // pred_check
    %p46 = pneg %p45
  $region55: #{stnkd_forward.1} parent=0 // pred_check_branch
    %48 = sbr.rel (%p46) target = $region57
  $region56: #{stnkd_forward.1} parent=0 // pred_region
    %49 = vst [vmem:[#allocation2] sm:$0xff] -inf
    %50 = vst [vmem:[#allocation2 + $0x8] sm:$0xff] -inf
  $region57: #{stnkd_forward.1} parent=0 // pred_fallthru
    _
  %v51 = vld [vmem:[%s0] sm:$0xf]
  %v52 = vld [vmem:[%s0 + $0x4] sm:$0xf]
  %v53 = vld [vmem:[%s0 + $0x8] sm:$0xf]
  %v54 = vld [vmem:[%s0 + $0xc] sm:$0xf]
  %v55 = vld [vmem:[%s0 + $0x10] sm:$0xf]
  %v56 = vld [vmem:[%s0 + $0x14] sm:$0xf]
  %v57 = vld [vmem:[%s0 + $0x18] sm:$0xf]
  %v58 = vld [vmem:[%s0 + $0x1c] sm:$0xf]
  %v59 = vld [vmem:[%s1] sm:$0xf]
  %v60 = vld [vmem:[%s1 + $0x4] sm:$0xf]
  %v61 = vld [vmem:[%s2] sm:$0x1]
  %v63 = vlaneseq
  %v64 = vshrl.u32 %v63, 7
  %v65 = vsub.s32 0, %v64
  %v66 = vrot.slane %v61, %v65
  %v76 = vunpack.c.l.b16 %v51
  %v77 = vunpack.c.l.b16 %v52
  %v78 = vunpack.c.l.b16 %v53
  %v79 = vunpack.c.l.b16 %v54
  %v80 = vunpack.c.l.b16 %v55
  %v81 = vunpack.c.l.b16 %v56
  %v82 = vunpack.c.l.b16 %v57
  %v83 = vunpack.c.l.b16 %v58
  %v84 = vpack.c.b16 %v77, %v76
  %v85 = vpack.c.b16 %v79, %v78
  %v86 = vpack.c.b16 %v81, %v80
  %v87 = vpack.c.b16 %v83, %v82
  %v90 = vunpack.c.l.b16 %v59
  %v91 = vunpack.c.l.b16 %v60
  %v92 = vpack.c.b16 %v91, %v90
  %vm94 = vcmask 130048
  %v96 = vsel %vm94, %v84, 0
  %v99 = vsel %vm94, %v85, 0
  %v102 = vsel %vm94, %v86, 0
  %v105 = vsel %vm94, %v87, 0
  %107 = vmatprep.subr.bf16.mxu0 0
  %108 = vmatpush1.bf16.msra.mxu0 %v92
  %109 = vmatprep.subr.bf16.mxu0 0
  %110 = vmatpush1.bf16.msra.mxu0 0
  %111 = vmatprep.subr.bf16.mxu0 0
  %112 = vmatpush1.bf16.msra.mxu0 0
  %113 = vmatprep.subr.bf16.mxu0 0
  %114 = vmatpush1.bf16.msra.mxu0 0
  %115 = vmatprep.subr.bf16.mxu0 0
  %116 = vmatpush1.bf16.msra.mxu0 0
  %117 = vmatprep.subr.bf16.mxu0 0
  %118 = vmatpush1.bf16.msra.mxu0 0
  %119 = vmatprep.subr.bf16.mxu0 0
  %120 = vmatpush1.bf16.msra.mxu0 0
  %121 = vmatprep.subr.bf16.mxu0 0
  %122 = vmatpush1.bf16.msra.mxu0 0
  %123 = vmatprep.subr.bf16.mxu0 0
  %124 = vmatpush1.bf16.msra.mxu0 0
  %125 = vmatprep.subr.bf16.mxu0 0
  %126 = vmatpush1.bf16.msra.mxu0 0
  %127 = vmatprep.subr.bf16.mxu0 0
  %128 = vmatpush1.bf16.msra.mxu0 0
  %129 = vmatprep.subr.bf16.mxu0 0
  %130 = vmatpush1.bf16.msra.mxu0 0
  %131 = vmatprep.subr.bf16.mxu0 0
  %132 = vmatpush1.bf16.msra.mxu0 0
  %133 = vmatprep.subr.bf16.mxu0 0
  %134 = vmatpush1.bf16.msra.mxu0 0
  %135 = vmatprep.subr.bf16.mxu0 0
  %136 = vmatpush1.bf16.msra.mxu0 0
  %137 = vmatprep.subr.bf16.mxu0 0
  %138 = vmatpush1.bf16.msra.mxu0 0
  %139 = vmatprep.mubr.bf16.mxu0 0
  %140 = vmatmul.mubr.bf16.gmra.mrb[0].mxu0 %v96
  %v141 = vpop.f32.mrb[0].mxu0
  %v142 = vadd.f32 %v66, %v141
  %v143 = vpop.f32.mrb[0].mxu0
  %v144 = vpop.f32.mrb[0].mxu0
  %v145 = vadd.f32 %v66, %v144
  %v146 = vpop.f32.mrb[0].mxu0
  %147 = vmatprep.mubr.bf16.mxu0 0
  %148 = vmatmul.mubr.bf16.gmra.mrb[0].mxu0 %v99
  %v149 = vpop.f32.mrb[0].mxu0
  %v150 = vadd.f32 %v66, %v149
  %v151 = vpop.f32.mrb[0].mxu0
  %v152 = vpop.f32.mrb[0].mxu0
  %v153 = vadd.f32 %v66, %v152
  %v154 = vpop.f32.mrb[0].mxu0
  %155 = vmatprep.mubr.bf16.mxu0 0
  %156 = vmatmul.mubr.bf16.gmra.mrb[0].mxu0 %v102
  %v157 = vpop.f32.mrb[0].mxu0
  %v158 = vadd.f32 %v66, %v157
  %v159 = vpop.f32.mrb[0].mxu0
  %v160 = vpop.f32.mrb[0].mxu0
  %v161 = vadd.f32 %v66, %v160
  %v162 = vpop.f32.mrb[0].mxu0
  %163 = vmatprep.mubr.bf16.mxu0 0
  %164 = vmatmul.mubr.bf16.gmra.mrb[0].mxu0 %v105
  %v165 = vpop.f32.mrb[0].mxu0
  %v166 = vadd.f32 %v66, %v165
  %v167 = vpop.f32.mrb[0].mxu0
  %v168 = vpop.f32.mrb[0].mxu0
  %v169 = vadd.f32 %v66, %v168
  %v170 = vpop.f32.mrb[0].mxu0
  %171 = vdwg.mxu0
  %v172 = vmax.f32 %v142, 0.0
  %v173 = vmax.f32 %v145, 0.0
  %v174 = vmax.f32 %v150, 0.0
  %v175 = vmax.f32 %v153, 0.0
  %v176 = vmax.f32 %v158, 0.0
  %v177 = vmax.f32 %v161, 0.0
  %v178 = vmax.f32 %v166, 0.0
  %v179 = vmax.f32 %v169, 0.0
  %v180 = vpack.c.bf16 %v173, %v172
  %v181 = vpack.c.bf16 %v175, %v174
  %v182 = vpack.c.bf16 %v177, %v176
  %v183 = vpack.c.bf16 %v179, %v178
  %v184 = vld [vmem:[%s3] sm:$0xf]
  %v185 = vld [vmem:[%s3 + $0x4] sm:$0xf]
  %v186 = vld [vmem:[%s3 + $0x8] sm:$0xf]
  %v187 = vld [vmem:[%s3 + $0xc] sm:$0xf]
  %v188 = vld [vmem:[%s3 + $0x10] sm:$0xf]
  %v189 = vld [vmem:[%s3 + $0x14] sm:$0xf]
  %v190 = vld [vmem:[%s3 + $0x18] sm:$0xf]
  %v191 = vld [vmem:[%s3 + $0x1c] sm:$0xf]
  %v192 = vld [vmem:[%s4] sm:$0x1]
  %v194 = vlaneseq
  %v195 = vshrl.u32 %v194, 7
  %v196 = vsub.s32 0, %v195
  %v197 = vrot.slane %v192, %v196
  %v207 = vunpack.c.l.b16 %v184
  %v208 = vunpack.c.l.b16 %v185
  %v209 = vunpack.c.l.b16 %v186
  %v210 = vunpack.c.l.b16 %v187
  %v211 = vunpack.c.l.b16 %v188
  %v212 = vunpack.c.l.b16 %v189
  %v213 = vunpack.c.l.b16 %v190
  %v214 = vunpack.c.l.b16 %v191
  %v215 = vpack.c.b16 %v208, %v207
  %v216 = vpack.c.b16 %v210, %v209
  %v217 = vpack.c.b16 %v212, %v211
  %v218 = vpack.c.b16 %v214, %v213
  %vm223 = vcmask 523264
  %v225 = vsel %vm223, %v180, 0
  %v228 = vsel %vm223, %v181, 0
  %v231 = vsel %vm223, %v182, 0
  %v234 = vsel %vm223, %v183, 0
  %236 = vmatprep.subr.bf16.mxu0 0
  %237 = vmatpush1.bf16.msra.mxu0 %v215
  %238 = vmatprep.subr.bf16.mxu0 0
  %239 = vmatpush1.bf16.msra.mxu0 %v216
  %240 = vmatprep.subr.bf16.mxu0 0
  %241 = vmatpush1.bf16.msra.mxu0 %v217
  %242 = vmatprep.subr.bf16.mxu0 0
  %243 = vmatpush1.bf16.msra.mxu0 %v218
  %244 = vmatprep.subr.bf16.mxu0 0
  %245 = vmatpush1.bf16.msra.mxu0 0
  %246 = vmatprep.subr.bf16.mxu0 0
  %247 = vmatpush1.bf16.msra.mxu0 0
  %248 = vmatprep.subr.bf16.mxu0 0
  %249 = vmatpush1.bf16.msra.mxu0 0
  %250 = vmatprep.subr.bf16.mxu0 0
  %251 = vmatpush1.bf16.msra.mxu0 0
  %252 = vmatprep.subr.bf16.mxu0 0
  %253 = vmatpush1.bf16.msra.mxu0 0
  %254 = vmatprep.subr.bf16.mxu0 0
  %255 = vmatpush1.bf16.msra.mxu0 0
  %256 = vmatprep.subr.bf16.mxu0 0
  %257 = vmatpush1.bf16.msra.mxu0 0
  %258 = vmatprep.subr.bf16.mxu0 0
  %259 = vmatpush1.bf16.msra.mxu0 0
  %260 = vmatprep.subr.bf16.mxu0 0
  %261 = vmatpush1.bf16.msra.mxu0 0
  %262 = vmatprep.subr.bf16.mxu0 0
  %263 = vmatpush1.bf16.msra.mxu0 0
  %264 = vmatprep.subr.bf16.mxu0 0
  %265 = vmatpush1.bf16.msra.mxu0 0
  %266 = vmatprep.subr.bf16.mxu0 0
  %267 = vmatpush1.bf16.msra.mxu0 0
  %268 = vmatprep.mubr.bf16.mxu0 0
  %269 = vmatmul.mubr.bf16.gmra.mrb[0].mxu0 %v225
  %v270 = vpop.f32.mrb[0].mxu0
  %v271 = vadd.f32 %v197, %v270
  %v272 = vpop.f32.mrb[0].mxu0
  %v273 = vpop.f32.mrb[0].mxu0
  %v274 = vadd.f32 %v197, %v273
  %v275 = vpop.f32.mrb[0].mxu0
  %276 = vmatprep.mubr.bf16.mxu0 0
  %277 = vmatmul.mubr.bf16.gmra.mrb[0].mxu0 %v228
  %v278 = vpop.f32.mrb[0].mxu0
  %v279 = vadd.f32 %v197, %v278
  %v280 = vpop.f32.mrb[0].mxu0
  %v281 = vpop.f32.mrb[0].mxu0
  %v282 = vadd.f32 %v197, %v281
  %v283 = vpop.f32.mrb[0].mxu0
  %284 = vmatprep.mubr.bf16.mxu0 0
  %285 = vmatmul.mubr.bf16.gmra.mrb[0].mxu0 %v231
  %v286 = vpop.f32.mrb[0].mxu0
  %v287 = vadd.f32 %v197, %v286
  %v288 = vpop.f32.mrb[0].mxu0
  %v289 = vpop.f32.mrb[0].mxu0
  %v290 = vadd.f32 %v197, %v289
  %v291 = vpop.f32.mrb[0].mxu0
  %292 = vmatprep.mubr.bf16.mxu0 0
  %293 = vmatmul.mubr.bf16.gmra.mrb[0].mxu0 %v234
  %v294 = vpop.f32.mrb[0].mxu0
  %v295 = vadd.f32 %v197, %v294
  %v296 = vpop.f32.mrb[0].mxu0
  %v297 = vpop.f32.mrb[0].mxu0
  %v298 = vadd.f32 %v197, %v297
  %v299 = vpop.f32.mrb[0].mxu0
  %300 = vdwg.mxu0
  %v301 = vmax.f32 %v271, 0.0
  %v302 = vmax.f32 %v274, 0.0
  %v303 = vmax.f32 %v279, 0.0
  %v304 = vmax.f32 %v282, 0.0
  %v305 = vmax.f32 %v287, 0.0
  %v306 = vmax.f32 %v290, 0.0
  %v307 = vmax.f32 %v295, 0.0
  %v308 = vmax.f32 %v298, 0.0
  %v309 = vpack.c.bf16 %v302, %v301
  %v310 = vpack.c.bf16 %v304, %v303
  %v311 = vpack.c.bf16 %v306, %v305
  %v312 = vpack.c.bf16 %v308, %v307
  %v313 = vld [vmem:[%s5] sm:$0xff]
  %v314 = vld [vmem:[%s5 + $0x8] sm:$0xff]
  %v315 = vld [vmem:[%s5 + $0x10] sm:$0xff]
  %v316 = vld [vmem:[%s5 + $0x18] sm:$0xff]
  %v317 = vld [vmem:[%s5 + $0x20] sm:$0xff]
  %v318 = vld [vmem:[%s5 + $0x28] sm:$0xff]
  %v319 = vld [vmem:[%s5 + $0x30] sm:$0xff]
  %v320 = vld [vmem:[%s5 + $0x38] sm:$0xff]
  %v321 = vld [vmem:[%s5 + $0x40] sm:$0xff]
  %v322 = vld [vmem:[%s5 + $0x48] sm:$0xff]
  %v323 = vld [vmem:[%s5 + $0x50] sm:$0xff]
  %v324 = vld [vmem:[%s5 + $0x58] sm:$0xff]
  %v325 = vld [vmem:[%s5 + $0x60] sm:$0xff]
  %v326 = vld [vmem:[%s5 + $0x68] sm:$0xff]
  %v327 = vld [vmem:[%s5 + $0x70] sm:$0xff]
  %v328 = vld [vmem:[%s5 + $0x78] sm:$0xff]
  %v329 = vld [vmem:[%s5 + $0x80] sm:$0xff]
  %v330 = vld [vmem:[%s5 + $0x88] sm:$0xff]
  %v331 = vld [vmem:[%s5 + $0x90] sm:$0xff]
  %v332 = vld [vmem:[%s5 + $0x98] sm:$0xff]
  %v333 = vld [vmem:[%s5 + $0xa0] sm:$0xff]
  %v334 = vld [vmem:[%s5 + $0xa8] sm:$0xff]
  %v335 = vld [vmem:[%s5 + $0xb0] sm:$0xff]
  %v336 = vld [vmem:[%s5 + $0xb8] sm:$0xff]
  %v337 = vld [vmem:[%s5 + $0xc0] sm:$0xff]
  %v338 = vld [vmem:[%s5 + $0xc8] sm:$0xff]
  %v339 = vld [vmem:[%s5 + $0xd0] sm:$0xff]
  %v340 = vld [vmem:[%s5 + $0xd8] sm:$0xff]
  %v341 = vld [vmem:[%s5 + $0xe0] sm:$0xff]
  %v342 = vld [vmem:[%s5 + $0xe8] sm:$0xff]
  %v343 = vld [vmem:[%s5 + $0xf0] sm:$0xff]
  %v344 = vld [vmem:[%s5 + $0xf8] sm:$0xff]
  %v345 = vld [vmem:[%s5 + $0x100] sm:$0xff]
  %v346 = vld [vmem:[%s5 + $0x108] sm:$0xff]
  %v347 = vld [vmem:[%s5 + $0x110] sm:$0xff]
  %v348 = vld [vmem:[%s5 + $0x118] sm:$0xff]
  %v349 = vld [vmem:[%s5 + $0x120] sm:$0xff]
  %v350 = vld [vmem:[%s5 + $0x128] sm:$0xff]
  %v351 = vld [vmem:[%s5 + $0x130] sm:$0xff]
  %v352 = vld [vmem:[%s5 + $0x138] sm:$0xff]
  %v353 = vld [vmem:[%s5 + $0x140] sm:$0xff]
  %v354 = vld [vmem:[%s5 + $0x148] sm:$0xff]
  %v355 = vld [vmem:[%s5 + $0x150] sm:$0xff]
  %v356 = vld [vmem:[%s5 + $0x158] sm:$0xff]
  %v357 = vld [vmem:[%s5 + $0x160] sm:$0xff]
  %v358 = vld [vmem:[%s5 + $0x168] sm:$0xff]
  %v359 = vld [vmem:[%s5 + $0x170] sm:$0xff]
  %v360 = vld [vmem:[%s5 + $0x178] sm:$0xff]
  %v361 = vld [vmem:[%s5 + $0x180] sm:$0xff]
  %v362 = vld [vmem:[%s5 + $0x188] sm:$0xff]
  %v363 = vld [vmem:[%s5 + $0x190] sm:$0xff]
  %v364 = vld [vmem:[%s5 + $0x198] sm:$0xff]
  %v365 = vld [vmem:[%s5 + $0x1a0] sm:$0xff]
  %v366 = vld [vmem:[%s5 + $0x1a8] sm:$0xff]
  %v367 = vld [vmem:[%s5 + $0x1b0] sm:$0xff]
  %v368 = vld [vmem:[%s5 + $0x1b8] sm:$0xff]
  %v369 = vld [vmem:[%s5 + $0x1c0] sm:$0xff]
  %v370 = vld [vmem:[%s5 + $0x1c8] sm:$0xff]
  %v371 = vld [vmem:[%s5 + $0x1d0] sm:$0xff]
  %v372 = vld [vmem:[%s5 + $0x1d8] sm:$0xff]
  %v373 = vld [vmem:[%s5 + $0x1e0] sm:$0xff]
  %v374 = vld [vmem:[%s5 + $0x1e8] sm:$0xff]
  %v375 = vld [vmem:[%s5 + $0x1f0] sm:$0xff]
  %v376 = vld [vmem:[%s5 + $0x1f8] sm:$0xff]
  %v441 = vunpack.c.l.b16 %v313
  %v442 = vunpack.c.h.b16 %v313
  %v443 = vunpack.c.l.b16 %v314
  %v444 = vunpack.c.h.b16 %v314
  %v445 = vunpack.c.l.b16 %v315
  %v446 = vunpack.c.h.b16 %v315
  %v447 = vunpack.c.l.b16 %v316
  %v448 = vunpack.c.h.b16 %v316
  %v449 = vunpack.c.l.b16 %v317
  %v450 = vunpack.c.h.b16 %v317
  %v451 = vunpack.c.l.b16 %v318
  %v452 = vunpack.c.h.b16 %v318
  %v453 = vunpack.c.l.b16 %v319
  %v454 = vunpack.c.h.b16 %v319
  %v455 = vunpack.c.l.b16 %v320
  %v456 = vunpack.c.h.b16 %v320
  %v457 = vunpack.c.l.b16 %v321
  %v458 = vunpack.c.h.b16 %v321
  %v459 = vunpack.c.l.b16 %v322
  %v460 = vunpack.c.h.b16 %v322
  %v461 = vunpack.c.l.b16 %v323
  %v462 = vunpack.c.h.b16 %v323
  %v463 = vunpack.c.l.b16 %v324
  %v464 = vunpack.c.h.b16 %v324
  %v465 = vunpack.c.l.b16 %v325
  %v466 = vunpack.c.h.b16 %v325
  %v467 = vunpack.c.l.b16 %v326
  %v468 = vunpack.c.h.b16 %v326
  %v469 = vunpack.c.l.b16 %v327
  %v470 = vunpack.c.h.b16 %v327
  %v471 = vunpack.c.l.b16 %v328
  %v472 = vunpack.c.h.b16 %v328
  %v473 = vunpack.c.l.b16 %v329
  %v474 = vunpack.c.h.b16 %v329
  %v475 = vunpack.c.l.b16 %v330
  %v476 = vunpack.c.h.b16 %v330
  %v477 = vunpack.c.l.b16 %v331
  %v478 = vunpack.c.h.b16 %v331
  %v479 = vunpack.c.l.b16 %v332
  %v480 = vunpack.c.h.b16 %v332
  %v481 = vunpack.c.l.b16 %v333
  %v482 = vunpack.c.h.b16 %v333
  %v483 = vunpack.c.l.b16 %v334
  %v484 = vunpack.c.h.b16 %v334
  %v485 = vunpack.c.l.b16 %v335
  %v486 = vunpack.c.h.b16 %v335
  %v487 = vunpack.c.l.b16 %v336
  %v488 = vunpack.c.h.b16 %v336
  %v489 = vunpack.c.l.b16 %v337
  %v490 = vunpack.c.h.b16 %v337
  %v491 = vunpack.c.l.b16 %v338
  %v492 = vunpack.c.h.b16 %v338
  %v493 = vunpack.c.l.b16 %v339
  %v494 = vunpack.c.h.b16 %v339
  %v495 = vunpack.c.l.b16 %v340
  %v496 = vunpack.c.h.b16 %v340
  %v497 = vunpack.c.l.b16 %v341
  %v498 = vunpack.c.h.b16 %v341
  %v499 = vunpack.c.l.b16 %v342
  %v500 = vunpack.c.h.b16 %v342
  %v501 = vunpack.c.l.b16 %v343
  %v502 = vunpack.c.h.b16 %v343
  %v503 = vunpack.c.l.b16 %v344
  %v504 = vunpack.c.h.b16 %v344
  %v505 = vunpack.c.l.b16 %v345
  %v506 = vunpack.c.h.b16 %v345
  %v507 = vunpack.c.l.b16 %v346
  %v508 = vunpack.c.h.b16 %v346
  %v509 = vunpack.c.l.b16 %v347
  %v510 = vunpack.c.h.b16 %v347
  %v511 = vunpack.c.l.b16 %v348
  %v512 = vunpack.c.h.b16 %v348
  %v513 = vunpack.c.l.b16 %v349
  %v514 = vunpack.c.h.b16 %v349
  %v515 = vunpack.c.l.b16 %v350
  %v516 = vunpack.c.h.b16 %v350
  %v517 = vunpack.c.l.b16 %v351
  %v518 = vunpack.c.h.b16 %v351
  %v519 = vunpack.c.l.b16 %v352
  %v520 = vunpack.c.h.b16 %v352
  %v521 = vunpack.c.l.b16 %v353
  %v522 = vunpack.c.h.b16 %v353
  %v523 = vunpack.c.l.b16 %v354
  %v524 = vunpack.c.h.b16 %v354
  %v525 = vunpack.c.l.b16 %v355
  %v526 = vunpack.c.h.b16 %v355
  %v527 = vunpack.c.l.b16 %v356
  %v528 = vunpack.c.h.b16 %v356
  %v529 = vunpack.c.l.b16 %v357
  %v530 = vunpack.c.h.b16 %v357
  %v531 = vunpack.c.l.b16 %v358
  %v532 = vunpack.c.h.b16 %v358
  %v533 = vunpack.c.l.b16 %v359
  %v534 = vunpack.c.h.b16 %v359
  %v535 = vunpack.c.l.b16 %v360
  %v536 = vunpack.c.h.b16 %v360
  %v537 = vunpack.c.l.b16 %v361
  %v538 = vunpack.c.h.b16 %v361
  %v539 = vunpack.c.l.b16 %v362
  %v540 = vunpack.c.h.b16 %v362
  %v541 = vunpack.c.l.b16 %v363
  %v542 = vunpack.c.h.b16 %v363
  %v543 = vunpack.c.l.b16 %v364
  %v544 = vunpack.c.h.b16 %v364
  %v545 = vunpack.c.l.b16 %v365
  %v546 = vunpack.c.h.b16 %v365
  %v547 = vunpack.c.l.b16 %v366
  %v548 = vunpack.c.h.b16 %v366
  %v549 = vunpack.c.l.b16 %v367
  %v550 = vunpack.c.h.b16 %v367
  %v551 = vunpack.c.l.b16 %v368
  %v552 = vunpack.c.h.b16 %v368
  %v553 = vunpack.c.l.b16 %v369
  %v554 = vunpack.c.h.b16 %v369
  %v555 = vunpack.c.l.b16 %v370
  %v556 = vunpack.c.h.b16 %v370
  %v557 = vunpack.c.l.b16 %v371
  %v558 = vunpack.c.h.b16 %v371
  %v559 = vunpack.c.l.b16 %v372
  %v560 = vunpack.c.h.b16 %v372
  %v561 = vunpack.c.l.b16 %v373
  %v562 = vunpack.c.h.b16 %v373
  %v563 = vunpack.c.l.b16 %v374
  %v564 = vunpack.c.h.b16 %v374
  %v565 = vunpack.c.l.b16 %v375
  %v566 = vunpack.c.h.b16 %v375
  %v567 = vunpack.c.l.b16 %v376
  %v568 = vunpack.c.h.b16 %v376
  %v569 = vpack.c.b16 %v449, %v441
  %v570 = vpack.c.b16 %v450, %v442
  %v571 = vpack.c.b16 %v451, %v443
  %v572 = vpack.c.b16 %v452, %v444
  %v573 = vpack.c.b16 %v453, %v445
  %v574 = vpack.c.b16 %v454, %v446
  %v575 = vpack.c.b16 %v455, %v447
  %v576 = vpack.c.b16 %v456, %v448
  %v577 = vpack.c.b16 %v465, %v457
  %v578 = vpack.c.b16 %v466, %v458
  %v579 = vpack.c.b16 %v467, %v459
  %v580 = vpack.c.b16 %v468, %v460
  %v581 = vpack.c.b16 %v469, %v461
  %v582 = vpack.c.b16 %v470, %v462
  %v583 = vpack.c.b16 %v471, %v463
  %v584 = vpack.c.b16 %v472, %v464
  %v585 = vpack.c.b16 %v481, %v473
  %v586 = vpack.c.b16 %v482, %v474
  %v587 = vpack.c.b16 %v483, %v475
  %v588 = vpack.c.b16 %v484, %v476
  %v589 = vpack.c.b16 %v485, %v477
  %v590 = vpack.c.b16 %v486, %v478
  %v591 = vpack.c.b16 %v487, %v479
  %v592 = vpack.c.b16 %v488, %v480
  %v593 = vpack.c.b16 %v497, %v489
  %v594 = vpack.c.b16 %v498, %v490
  %v595 = vpack.c.b16 %v499, %v491
  %v596 = vpack.c.b16 %v500, %v492
  %v597 = vpack.c.b16 %v501, %v493
  %v598 = vpack.c.b16 %v502, %v494
  %v599 = vpack.c.b16 %v503, %v495
  %v600 = vpack.c.b16 %v504, %v496
  %v601 = vpack.c.b16 %v513, %v505
  %v602 = vpack.c.b16 %v514, %v506
  %v603 = vpack.c.b16 %v515, %v507
  %v604 = vpack.c.b16 %v516, %v508
  %v605 = vpack.c.b16 %v517, %v509
  %v606 = vpack.c.b16 %v518, %v510
  %v607 = vpack.c.b16 %v519, %v511
  %v608 = vpack.c.b16 %v520, %v512
  %v609 = vpack.c.b16 %v529, %v521
  %v610 = vpack.c.b16 %v530, %v522
  %v611 = vpack.c.b16 %v531, %v523
  %v612 = vpack.c.b16 %v532, %v524
  %v613 = vpack.c.b16 %v533, %v525
  %v614 = vpack.c.b16 %v534, %v526
  %v615 = vpack.c.b16 %v535, %v527
  %v616 = vpack.c.b16 %v536, %v528
  %v617 = vpack.c.b16 %v545, %v537
  %v618 = vpack.c.b16 %v546, %v538
  %v619 = vpack.c.b16 %v547, %v539
  %v620 = vpack.c.b16 %v548, %v540
  %v621 = vpack.c.b16 %v549, %v541
  %v622 = vpack.c.b16 %v550, %v542
  %v623 = vpack.c.b16 %v551, %v543
  %v624 = vpack.c.b16 %v552, %v544
  %v625 = vpack.c.b16 %v561, %v553
  %v626 = vpack.c.b16 %v562, %v554
  %v627 = vpack.c.b16 %v563, %v555
  %v628 = vpack.c.b16 %v564, %v556
  %v629 = vpack.c.b16 %v565, %v557
  %v630 = vpack.c.b16 %v566, %v558
  %v631 = vpack.c.b16 %v567, %v559
  %v632 = vpack.c.b16 %v568, %v560
  %697 = vmatprep.subr.bf16.mxu0 %v570
  %698 = vmatpush1.bf16.msra.mxu0 %v569
  %699 = vmatprep.subr.bf16.mxu0 %v578
  %700 = vmatpush1.bf16.msra.mxu0 %v577
  %701 = vmatprep.subr.bf16.mxu0 %v586
  %702 = vmatpush1.bf16.msra.mxu0 %v585
  %703 = vmatprep.subr.bf16.mxu0 %v594
  %704 = vmatpush1.bf16.msra.mxu0 %v593
  %705 = vmatprep.subr.bf16.mxu0 %v602
  %706 = vmatpush1.bf16.msra.mxu0 %v601
  %707 = vmatprep.subr.bf16.mxu0 %v610
  %708 = vmatpush1.bf16.msra.mxu0 %v609
  %709 = vmatprep.subr.bf16.mxu0 %v618
  %710 = vmatpush1.bf16.msra.mxu0 %v617
  %711 = vmatprep.subr.bf16.mxu0 %v626
  %712 = vmatpush1.bf16.msra.mxu0 %v625
  %713 = vmatprep.subr.bf16.mxu0 0
  %714 = vmatpush1.bf16.msra.mxu0 0
  %715 = vmatprep.subr.bf16.mxu0 0
  %716 = vmatpush1.bf16.msra.mxu0 0
  %717 = vmatprep.subr.bf16.mxu0 0
  %718 = vmatpush1.bf16.msra.mxu0 0
  %719 = vmatprep.subr.bf16.mxu0 0
  %720 = vmatpush1.bf16.msra.mxu0 0
  %721 = vmatprep.subr.bf16.mxu0 0
  %722 = vmatpush1.bf16.msra.mxu0 0
  %723 = vmatprep.subr.bf16.mxu0 0
  %724 = vmatpush1.bf16.msra.mxu0 0
  %725 = vmatprep.subr.bf16.mxu0 0
  %726 = vmatpush1.bf16.msra.mxu0 0
  %727 = vmatprep.subr.bf16.mxu0 0
  %728 = vmatpush1.bf16.msra.mxu0 0
  %729 = vmatprep.mubr.bf16.mxu0 0
  %730 = vmatmul.mubr.bf16.gmra.mrb[0].mxu0 %v309
  %v731 = vpop.f32.mrb[0].mxu0
  %v732 = vadd.f32 0.0, %v731
  %v733 = vpop.f32.mrb[0].mxu0
  %v734 = vadd.f32 0.0, %v733
  %v735 = vpop.f32.mrb[0].mxu0
  %v736 = vadd.f32 0.0, %v735
  %v737 = vpop.f32.mrb[0].mxu0
  %v738 = vadd.f32 0.0, %v737
  %739 = vmatprep.mubr.bf16.mxu0 0
  %740 = vmatmul.mubr.bf16.gmra.mrb[0].mxu0 %v310
  %v741 = vpop.f32.mrb[0].mxu0
  %v742 = vadd.f32 0.0, %v741
  %v743 = vpop.f32.mrb[0].mxu0
  %v744 = vadd.f32 0.0, %v743
  %v745 = vpop.f32.mrb[0].mxu0
  %v746 = vadd.f32 0.0, %v745
  %v747 = vpop.f32.mrb[0].mxu0
  %v748 = vadd.f32 0.0, %v747
  %749 = vmatprep.mubr.bf16.mxu0 0
  %750 = vmatmul.mubr.bf16.gmra.mrb[0].mxu0 %v311
  %v751 = vpop.f32.mrb[0].mxu0
  %v752 = vadd.f32 0.0, %v751
  %v753 = vpop.f32.mrb[0].mxu0
  %v754 = vadd.f32 0.0, %v753
  %v755 = vpop.f32.mrb[0].mxu0
  %v756 = vadd.f32 0.0, %v755
  %v757 = vpop.f32.mrb[0].mxu0
  %v758 = vadd.f32 0.0, %v757
  %759 = vmatprep.mubr.bf16.mxu0 0
  %760 = vmatmul.mubr.bf16.gmra.mrb[0].mxu0 %v312
  %v761 = vpop.f32.mrb[0].mxu0
  %v762 = vadd.f32 0.0, %v761
  %v763 = vpop.f32.mrb[0].mxu0
  %v764 = vadd.f32 0.0, %v763
  %v765 = vpop.f32.mrb[0].mxu0
  %v766 = vadd.f32 0.0, %v765
  %v767 = vpop.f32.mrb[0].mxu0
  %v768 = vadd.f32 0.0, %v767
  %769 = vdwg.mxu0
  %770 = vmatprep.subr.bf16.mxu0 %v572
  %771 = vmatpush1.bf16.msra.mxu0 %v571
  %772 = vmatprep.subr.bf16.mxu0 %v580
  %773 = vmatpush1.bf16.msra.mxu0 %v579
  %774 = vmatprep.subr.bf16.mxu0 %v588
  %775 = vmatpush1.bf16.msra.mxu0 %v587
  %776 = vmatprep.subr.bf16.mxu0 %v596
  %777 = vmatpush1.bf16.msra.mxu0 %v595
  %778 = vmatprep.subr.bf16.mxu0 %v604
  %779 = vmatpush1.bf16.msra.mxu0 %v603
  %780 = vmatprep.subr.bf16.mxu0 %v612
  %781 = vmatpush1.bf16.msra.mxu0 %v611
  %782 = vmatprep.subr.bf16.mxu0 %v620
  %783 = vmatpush1.bf16.msra.mxu0 %v619
  %784 = vmatprep.subr.bf16.mxu0 %v628
  %785 = vmatpush1.bf16.msra.mxu0 %v627
  %786 = vmatprep.subr.bf16.mxu0 0
  %787 = vmatpush1.bf16.msra.mxu0 0
  %788 = vmatprep.subr.bf16.mxu0 0
  %789 = vmatpush1.bf16.msra.mxu0 0
  %790 = vmatprep.subr.bf16.mxu0 0
  %791 = vmatpush1.bf16.msra.mxu0 0
  %792 = vmatprep.subr.bf16.mxu0 0
  %793 = vmatpush1.bf16.msra.mxu0 0
  %794 = vmatprep.subr.bf16.mxu0 0
  %795 = vmatpush1.bf16.msra.mxu0 0
  %796 = vmatprep.subr.bf16.mxu0 0
  %797 = vmatpush1.bf16.msra.mxu0 0
  %798 = vmatprep.subr.bf16.mxu0 0
  %799 = vmatpush1.bf16.msra.mxu0 0
  %800 = vmatprep.subr.bf16.mxu0 0
  %801 = vmatpush1.bf16.msra.mxu0 0
  %802 = vmatprep.mubr.bf16.mxu0 0
  %803 = vmatmul.mubr.bf16.gmra.mrb[0].mxu0 %v309
  %v804 = vpop.f32.mrb[0].mxu0
  %v805 = vadd.f32 0.0, %v804
  %v806 = vpop.f32.mrb[0].mxu0
  %v807 = vadd.f32 0.0, %v806
  %v808 = vpop.f32.mrb[0].mxu0
  %v809 = vadd.f32 0.0, %v808
  %v810 = vpop.f32.mrb[0].mxu0
  %v811 = vadd.f32 0.0, %v810
  %812 = vmatprep.mubr.bf16.mxu0 0
  %813 = vmatmul.mubr.bf16.gmra.mrb[0].mxu0 %v310
  %v814 = vpop.f32.mrb[0].mxu0
  %v815 = vadd.f32 0.0, %v814
  %v816 = vpop.f32.mrb[0].mxu0
  %v817 = vadd.f32 0.0, %v816
  %v818 = vpop.f32.mrb[0].mxu0
  %v819 = vadd.f32 0.0, %v818
  %v820 = vpop.f32.mrb[0].mxu0
  %v821 = vadd.f32 0.0, %v820
  %822 = vmatprep.mubr.bf16.mxu0 0
  %823 = vmatmul.mubr.bf16.gmra.mrb[0].mxu0 %v311
  %v824 = vpop.f32.mrb[0].mxu0
  %v825 = vadd.f32 0.0, %v824
  %v826 = vpop.f32.mrb[0].mxu0
  %v827 = vadd.f32 0.0, %v826
  %v828 = vpop.f32.mrb[0].mxu0
  %v829 = vadd.f32 0.0, %v828
  %v830 = vpop.f32.mrb[0].mxu0
  %v831 = vadd.f32 0.0, %v830
  %832 = vmatprep.mubr.bf16.mxu0 0
  %833 = vmatmul.mubr.bf16.gmra.mrb[0].mxu0 %v312
  %v834 = vpop.f32.mrb[0].mxu0
  %v835 = vadd.f32 0.0, %v834
  %v836 = vpop.f32.mrb[0].mxu0
  %v837 = vadd.f32 0.0, %v836
  %v838 = vpop.f32.mrb[0].mxu0
  %v839 = vadd.f32 0.0, %v838
  %v840 = vpop.f32.mrb[0].mxu0
  %v841 = vadd.f32 0.0, %v840
  %842 = vdwg.mxu0
  %843 = vmatprep.subr.bf16.mxu0 %v574
  %844 = vmatpush1.bf16.msra.mxu0 %v573
  %845 = vmatprep.subr.bf16.mxu0 %v582
  %846 = vmatpush1.bf16.msra.mxu0 %v581
  %847 = vmatprep.subr.bf16.mxu0 %v590
  %848 = vmatpush1.bf16.msra.mxu0 %v589
  %849 = vmatprep.subr.bf16.mxu0 %v598
  %850 = vmatpush1.bf16.msra.mxu0 %v597
  %851 = vmatprep.subr.bf16.mxu0 %v606
  %852 = vmatpush1.bf16.msra.mxu0 %v605
  %853 = vmatprep.subr.bf16.mxu0 %v614
  %854 = vmatpush1.bf16.msra.mxu0 %v613
  %855 = vmatprep.subr.bf16.mxu0 %v622
  %856 = vmatpush1.bf16.msra.mxu0 %v621
  %857 = vmatprep.subr.bf16.mxu0 %v630
  %858 = vmatpush1.bf16.msra.mxu0 %v629
  %859 = vmatprep.subr.bf16.mxu0 0
  %860 = vmatpush1.bf16.msra.mxu0 0
  %861 = vmatprep.subr.bf16.mxu0 0
  %862 = vmatpush1.bf16.msra.mxu0 0
  %863 = vmatprep.subr.bf16.mxu0 0
  %864 = vmatpush1.bf16.msra.mxu0 0
  %865 = vmatprep.subr.bf16.mxu0 0
  %866 = vmatpush1.bf16.msra.mxu0 0
  %867 = vmatprep.subr.bf16.mxu0 0
  %868 = vmatpush1.bf16.msra.mxu0 0
  %869 = vmatprep.subr.bf16.mxu0 0
  %870 = vmatpush1.bf16.msra.mxu0 0
  %871 = vmatprep.subr.bf16.mxu0 0
  %872 = vmatpush1.bf16.msra.mxu0 0
  %873 = vmatprep.subr.bf16.mxu0 0
  %874 = vmatpush1.bf16.msra.mxu0 0
  %875 = vmatprep.mubr.bf16.mxu0 0
  %876 = vmatmul.mubr.bf16.gmra.mrb[0].mxu0 %v309
  %v877 = vpop.f32.mrb[0].mxu0
  %v878 = vadd.f32 0.0, %v877
  %v879 = vpop.f32.mrb[0].mxu0
  %v880 = vadd.f32 0.0, %v879
  %v881 = vpop.f32.mrb[0].mxu0
  %v882 = vadd.f32 0.0, %v881
  %v883 = vpop.f32.mrb[0].mxu0
  %v884 = vadd.f32 0.0, %v883
  %885 = vmatprep.mubr.bf16.mxu0 0
  %886 = vmatmul.mubr.bf16.gmra.mrb[0].mxu0 %v310
  %v887 = vpop.f32.mrb[0].mxu0
  %v888 = vadd.f32 0.0, %v887
  %v889 = vpop.f32.mrb[0].mxu0
  %v890 = vadd.f32 0.0, %v889
  %v891 = vpop.f32.mrb[0].mxu0
  %v892 = vadd.f32 0.0, %v891
  %v893 = vpop.f32.mrb[0].mxu0
  %v894 = vadd.f32 0.0, %v893
  %895 = vmatprep.mubr.bf16.mxu0 0
  %896 = vmatmul.mubr.bf16.gmra.mrb[0].mxu0 %v311
  %v897 = vpop.f32.mrb[0].mxu0
  %v898 = vadd.f32 0.0, %v897
  %v899 = vpop.f32.mrb[0].mxu0
  %v900 = vadd.f32 0.0, %v899
  %v901 = vpop.f32.mrb[0].mxu0
  %v902 = vadd.f32 0.0, %v901
  %v903 = vpop.f32.mrb[0].mxu0
  %v904 = vadd.f32 0.0, %v903
  %905 = vmatprep.mubr.bf16.mxu0 0
  %906 = vmatmul.mubr.bf16.gmra.mrb[0].mxu0 %v312
  %v907 = vpop.f32.mrb[0].mxu0
  %v908 = vadd.f32 0.0, %v907
  %v909 = vpop.f32.mrb[0].mxu0
  %v910 = vadd.f32 0.0, %v909
  %v911 = vpop.f32.mrb[0].mxu0
  %v912 = vadd.f32 0.0, %v911
  %v913 = vpop.f32.mrb[0].mxu0
  %v914 = vadd.f32 0.0, %v913
  %915 = vdwg.mxu0
  %916 = vmatprep.subr.bf16.mxu0 %v576
  %917 = vmatpush1.bf16.msra.mxu0 %v575
  %918 = vmatprep.subr.bf16.mxu0 %v584
  %919 = vmatpush1.bf16.msra.mxu0 %v583
  %920 = vmatprep.subr.bf16.mxu0 %v592
  %921 = vmatpush1.bf16.msra.mxu0 %v591
  %922 = vmatprep.subr.bf16.mxu0 %v600
  %923 = vmatpush1.bf16.msra.mxu0 %v599
  %924 = vmatprep.subr.bf16.mxu0 %v608
  %925 = vmatpush1.bf16.msra.mxu0 %v607
  %926 = vmatprep.subr.bf16.mxu0 %v616
  %927 = vmatpush1.bf16.msra.mxu0 %v615
  %928 = vmatprep.subr.bf16.mxu0 %v624
  %929 = vmatpush1.bf16.msra.mxu0 %v623
  %930 = vmatprep.subr.bf16.mxu0 %v632
  %931 = vmatpush1.bf16.msra.mxu0 %v631
  %932 = vmatprep.subr.bf16.mxu0 0
  %933 = vmatpush1.bf16.msra.mxu0 0
  %934 = vmatprep.subr.bf16.mxu0 0
  %935 = vmatpush1.bf16.msra.mxu0 0
  %936 = vmatprep.subr.bf16.mxu0 0
  %937 = vmatpush1.bf16.msra.mxu0 0
  %938 = vmatprep.subr.bf16.mxu0 0
  %939 = vmatpush1.bf16.msra.mxu0 0
  %940 = vmatprep.subr.bf16.mxu0 0
  %941 = vmatpush1.bf16.msra.mxu0 0
  %942 = vmatprep.subr.bf16.mxu0 0
  %943 = vmatpush1.bf16.msra.mxu0 0
  %944 = vmatprep.subr.bf16.mxu0 0
  %945 = vmatpush1.bf16.msra.mxu0 0
  %946 = vmatprep.subr.bf16.mxu0 0
  %947 = vmatpush1.bf16.msra.mxu0 0
  %948 = vmatprep.mubr.bf16.mxu0 0
  %949 = vmatmul.mubr.bf16.gmra.mrb[0].mxu0 %v309
  %v950 = vpop.f32.mrb[0].mxu0
  %v951 = vadd.f32 0.0, %v950
  %v952 = vpop.f32.mrb[0].mxu0
  %v953 = vadd.f32 0.0, %v952
  %v954 = vpop.f32.mrb[0].mxu0
  %v955 = vadd.f32 0.0, %v954
  %v956 = vpop.f32.mrb[0].mxu0
  %v957 = vadd.f32 0.0, %v956
  %958 = vmatprep.mubr.bf16.mxu0 0
  %959 = vmatmul.mubr.bf16.gmra.mrb[0].mxu0 %v310
  %v960 = vpop.f32.mrb[0].mxu0
  %v961 = vadd.f32 0.0, %v960
  %v962 = vpop.f32.mrb[0].mxu0
  %v963 = vadd.f32 0.0, %v962
  %v964 = vpop.f32.mrb[0].mxu0
  %v965 = vadd.f32 0.0, %v964
  %v966 = vpop.f32.mrb[0].mxu0
  %v967 = vadd.f32 0.0, %v966
  %968 = vmatprep.mubr.bf16.mxu0 0
  %969 = vmatmul.mubr.bf16.gmra.mrb[0].mxu0 %v311
  %v970 = vpop.f32.mrb[0].mxu0
  %v971 = vadd.f32 0.0, %v970
  %v972 = vpop.f32.mrb[0].mxu0
  %v973 = vadd.f32 0.0, %v972
  %v974 = vpop.f32.mrb[0].mxu0
  %v975 = vadd.f32 0.0, %v974
  %v976 = vpop.f32.mrb[0].mxu0
  %v977 = vadd.f32 0.0, %v976
  %978 = vmatprep.mubr.bf16.mxu0 0
  %979 = vmatmul.mubr.bf16.gmra.mrb[0].mxu0 %v312
  %v980 = vpop.f32.mrb[0].mxu0
  %v981 = vadd.f32 0.0, %v980
  %v982 = vpop.f32.mrb[0].mxu0
  %v983 = vadd.f32 0.0, %v982
  %v984 = vpop.f32.mrb[0].mxu0
  %v985 = vadd.f32 0.0, %v984
  %v986 = vpop.f32.mrb[0].mxu0
  %v987 = vadd.f32 0.0, %v986
  %988 = vdwg.mxu0
  %v989 = vmax.f32 %v732, %v736
  %v990 = vmax.f32 %v989, %v742
  %v991 = vmax.f32 %v990, %v746
  %v992 = vrot.slane %v991, 4
  %v993 = vmax.f32 %v991, %v992
  %v994 = vrot.slane %v993, 2
  %v995 = vmax.f32 %v993, %v994
  %v996 = vrot.slane %v995, 1
  %v997 = vmax.f32 %v995, %v996
  %v998 = vmax.f32 %v734, %v738
  %v999 = vmax.f32 %v998, %v744
  %v1000 = vmax.f32 %v999, %v748
  %v1001 = vrot.slane %v1000, 4
  %v1002 = vmax.f32 %v1000, %v1001
  %v1003 = vrot.slane %v1002, 2
  %v1004 = vmax.f32 %v1002, %v1003
  %v1005 = vrot.slane %v1004, 1
  %v1006 = vmax.f32 %v1004, %v1005
  %v1007 = vmax.f32 %v805, %v809
  %v1008 = vmax.f32 %v1007, %v815
  %v1009 = vmax.f32 %v1008, %v819
  %v1010 = vrot.slane %v1009, 4
  %v1011 = vmax.f32 %v1009, %v1010
  %v1012 = vrot.slane %v1011, 2
  %v1013 = vmax.f32 %v1011, %v1012
  %v1014 = vrot.slane %v1013, 1
  %v1015 = vmax.f32 %v1013, %v1014
  %v1016 = vmax.f32 %v807, %v811
  %v1017 = vmax.f32 %v1016, %v817
  %v1018 = vmax.f32 %v1017, %v821
  %v1019 = vrot.slane %v1018, 4
  %v1020 = vmax.f32 %v1018, %v1019
  %v1021 = vrot.slane %v1020, 2
  %v1022 = vmax.f32 %v1020, %v1021
  %v1023 = vrot.slane %v1022, 1
  %v1024 = vmax.f32 %v1022, %v1023
  %v1025 = vmax.f32 %v878, %v882
  %v1026 = vmax.f32 %v1025, %v888
  %v1027 = vmax.f32 %v1026, %v892
  %v1028 = vrot.slane %v1027, 4
  %v1029 = vmax.f32 %v1027, %v1028
  %v1030 = vrot.slane %v1029, 2
  %v1031 = vmax.f32 %v1029, %v1030
  %v1032 = vrot.slane %v1031, 1
  %v1033 = vmax.f32 %v1031, %v1032
  %v1034 = vmax.f32 %v880, %v884
  %v1035 = vmax.f32 %v1034, %v890
  %v1036 = vmax.f32 %v1035, %v894
  %v1037 = vrot.slane %v1036, 4
  %v1038 = vmax.f32 %v1036, %v1037
  %v1039 = vrot.slane %v1038, 2
  %v1040 = vmax.f32 %v1038, %v1039
  %v1041 = vrot.slane %v1040, 1
  %v1042 = vmax.f32 %v1040, %v1041
  %v1043 = vmax.f32 %v951, %v955
  %v1044 = vmax.f32 %v1043, %v961
  %v1045 = vmax.f32 %v1044, %v965
  %v1046 = vrot.slane %v1045, 4
  %v1047 = vmax.f32 %v1045, %v1046
  %v1048 = vrot.slane %v1047, 2
  %v1049 = vmax.f32 %v1047, %v1048
  %v1050 = vrot.slane %v1049, 1
  %v1051 = vmax.f32 %v1049, %v1050
  %v1052 = vmax.f32 %v953, %v957
  %v1053 = vmax.f32 %v1052, %v963
  %v1054 = vmax.f32 %v1053, %v967
  %v1055 = vrot.slane %v1054, 4
  %v1056 = vmax.f32 %v1054, %v1055
  %v1057 = vrot.slane %v1056, 2
  %v1058 = vmax.f32 %v1056, %v1057
  %v1059 = vrot.slane %v1058, 1
  %v1060 = vmax.f32 %v1058, %v1059
  %v1061 = vmax.f32 %v752, %v756
  %v1062 = vmax.f32 %v1061, %v762
  %v1063 = vmax.f32 %v1062, %v766
  %v1064 = vrot.slane %v1063, 4
  %v1065 = vmax.f32 %v1063, %v1064
  %v1066 = vrot.slane %v1065, 2
  %v1067 = vmax.f32 %v1065, %v1066
  %v1068 = vrot.slane %v1067, 1
  %v1069 = vmax.f32 %v1067, %v1068
  %v1070 = vmax.f32 %v754, %v758
  %v1071 = vmax.f32 %v1070, %v764
  %v1072 = vmax.f32 %v1071, %v768
  %v1073 = vrot.slane %v1072, 4
  %v1074 = vmax.f32 %v1072, %v1073
  %v1075 = vrot.slane %v1074, 2
  %v1076 = vmax.f32 %v1074, %v1075
  %v1077 = vrot.slane %v1076, 1
  %v1078 = vmax.f32 %v1076, %v1077
  %v1079 = vmax.f32 %v825, %v829
  %v1080 = vmax.f32 %v1079, %v835
  %v1081 = vmax.f32 %v1080, %v839
  %v1082 = vrot.slane %v1081, 4
  %v1083 = vmax.f32 %v1081, %v1082
  %v1084 = vrot.slane %v1083, 2
  %v1085 = vmax.f32 %v1083, %v1084
  %v1086 = vrot.slane %v1085, 1
  %v1087 = vmax.f32 %v1085, %v1086
  %v1088 = vmax.f32 %v827, %v831
  %v1089 = vmax.f32 %v1088, %v837
  %v1090 = vmax.f32 %v1089, %v841
  %v1091 = vrot.slane %v1090, 4
  %v1092 = vmax.f32 %v1090, %v1091
  %v1093 = vrot.slane %v1092, 2
  %v1094 = vmax.f32 %v1092, %v1093
  %v1095 = vrot.slane %v1094, 1
  %v1096 = vmax.f32 %v1094, %v1095
  %v1097 = vmax.f32 %v898, %v902
  %v1098 = vmax.f32 %v1097, %v908
  %v1099 = vmax.f32 %v1098, %v912
  %v1100 = vrot.slane %v1099, 4
  %v1101 = vmax.f32 %v1099, %v1100
  %v1102 = vrot.slane %v1101, 2
  %v1103 = vmax.f32 %v1101, %v1102
  %v1104 = vrot.slane %v1103, 1
  %v1105 = vmax.f32 %v1103, %v1104
  %v1106 = vmax.f32 %v900, %v904
  %v1107 = vmax.f32 %v1106, %v910
  %v1108 = vmax.f32 %v1107, %v914
  %v1109 = vrot.slane %v1108, 4
  %v1110 = vmax.f32 %v1108, %v1109
  %v1111 = vrot.slane %v1110, 2
  %v1112 = vmax.f32 %v1110, %v1111
  %v1113 = vrot.slane %v1112, 1
  %v1114 = vmax.f32 %v1112, %v1113
  %v1115 = vmax.f32 %v971, %v975
  %v1116 = vmax.f32 %v1115, %v981
  %v1117 = vmax.f32 %v1116, %v985
  %v1118 = vrot.slane %v1117, 4
  %v1119 = vmax.f32 %v1117, %v1118
  %v1120 = vrot.slane %v1119, 2
  %v1121 = vmax.f32 %v1119, %v1120
  %v1122 = vrot.slane %v1121, 1
  %v1123 = vmax.f32 %v1121, %v1122
  %v1124 = vmax.f32 %v973, %v977
  %v1125 = vmax.f32 %v1124, %v983
  %v1126 = vmax.f32 %v1125, %v987
  %v1127 = vrot.slane %v1126, 4
  %v1128 = vmax.f32 %v1126, %v1127
  %v1129 = vrot.slane %v1128, 2
  %v1130 = vmax.f32 %v1128, %v1129
  %v1131 = vrot.slane %v1130, 1
  %v1132 = vmax.f32 %v1130, %v1131
  %v1133 = vld [vmem:[#allocation2] sm:$0xff]
  %v1134 = vld [vmem:[#allocation2 + $0x8] sm:$0xff]
  %v1151 = vcombine.low %v997, %v1006
  %v1152 = vcombine.low %v1015, %v1024
  %v1154 = vunpack.c.l.s4 1983009808
  %v1155 = vunpack.c.0.s8 %v1154
  %v1156 = vlaneseq
  %v1157 = vshrl.u32 %v1156, 7
  %v1158 = vsub.s32 %v1155, %v1157
  %v1159 = vrot.slane %v1151, %v1158
  %v1161 = vunpack.c.l.s4 1983009808
  %v1162 = vunpack.c.0.s8 %v1161
  %v1163 = vlaneseq
  %v1164 = vshrl.u32 %v1163, 7
  %v1165 = vsub.s32 %v1162, %v1164
  %v1166 = vrot.slane %v1152, %v1165
  %v1167 = vcombine.low %v1159, %v1166
  %v1168 = vcombine.low %v1033, %v1042
  %v1169 = vcombine.low %v1051, %v1060
  %v1171 = vunpack.c.l.s4 1983009808
  %v1172 = vunpack.c.0.s8 %v1171
  %v1173 = vlaneseq
  %v1174 = vshrl.u32 %v1173, 7
  %v1175 = vsub.s32 %v1172, %v1174
  %v1176 = vrot.slane %v1168, %v1175
  %v1178 = vunpack.c.l.s4 1983009808
  %v1179 = vunpack.c.0.s8 %v1178
  %v1180 = vlaneseq
  %v1181 = vshrl.u32 %v1180, 7
  %v1182 = vsub.s32 %v1179, %v1181
  %v1183 = vrot.slane %v1169, %v1182
  %v1184 = vcombine.low %v1176, %v1183
  %v1185 = vcombine.low %v1069, %v1078
  %v1186 = vcombine.low %v1087, %v1096
  %v1188 = vunpack.c.l.s4 1983009808
  %v1189 = vunpack.c.0.s8 %v1188
  %v1190 = vlaneseq
  %v1191 = vshrl.u32 %v1190, 7
  %v1192 = vsub.s32 %v1189, %v1191
  %v1193 = vrot.slane %v1185, %v1192
  %v1195 = vunpack.c.l.s4 1983009808
  %v1196 = vunpack.c.0.s8 %v1195
  %v1197 = vlaneseq
  %v1198 = vshrl.u32 %v1197, 7
  %v1199 = vsub.s32 %v1196, %v1198
  %v1200 = vrot.slane %v1186, %v1199
  %v1201 = vcombine.low %v1193, %v1200
  %v1202 = vcombine.low %v1105, %v1114
  %v1203 = vcombine.low %v1123, %v1132
  %v1205 = vunpack.c.l.s4 1983009808
  %v1206 = vunpack.c.0.s8 %v1205
  %v1207 = vlaneseq
  %v1208 = vshrl.u32 %v1207, 7
  %v1209 = vsub.s32 %v1206, %v1208
  %v1210 = vrot.slane %v1202, %v1209
  %v1212 = vunpack.c.l.s4 1983009808
  %v1213 = vunpack.c.0.s8 %v1212
  %v1214 = vlaneseq
  %v1215 = vshrl.u32 %v1214, 7
  %v1216 = vsub.s32 %v1213, %v1215
  %v1217 = vrot.slane %v1203, %v1216
  %v1218 = vcombine.low %v1210, %v1217
  %vm1219 = vcmask 1044484
  %v1220 = vsel %vm1219, %v1167, %v1167
  %vm1221 = vcmask 1046534
  %v1222 = vsel %vm1221, %v1167, %v1220
  %v1223 = vrot.slane %v1201, 7
  %vm1224 = vcmask 1041409
  %v1225 = vsel %vm1224, %v1223, %v1222
  %vm1226 = vcmask 1043459
  %v1227 = vsel %vm1226, %v1223, %v1225
  %vm1228 = vcmask 1045509
  %v1229 = vsel %vm1228, %v1223, %v1227
  %vm1230 = vcmask 1047559
  %v1231 = vsel %vm1230, %v1223, %v1229
  %v1232 = vsel %vm1219, %v1184, %v1184
  %v1233 = vsel %vm1221, %v1184, %v1232
  %v1234 = vrot.slane %v1218, 7
  %v1235 = vsel %vm1224, %v1234, %v1233
  %v1236 = vsel %vm1226, %v1234, %v1235
  %v1237 = vsel %vm1228, %v1234, %v1236
  %v1238 = vsel %vm1230, %v1234, %v1237
  %v1241 = vmax.f32 %v1133, %v1231
  %v1242 = vmax.f32 %v1134, %v1238
  %1243 = vst [vmem:[#allocation2] sm:$0xff] %v1241
  %1244 = vst [vmem:[#allocation2 + $0x8] sm:$0xff] %v1242
  // Predicated region
  $region58: #{stnkd_forward.1} parent=0 // pred_check
    %p1245 = pneg %p45
  $region59: #{stnkd_forward.1} parent=0 // pred_check_branch
    %1247 = sbr.rel (%p1245) target = $region61
  $region60: #{stnkd_forward.1} parent=0 // pred_region
    %v1248 = vld [vmem:[#allocation2] sm:$0xff]
    %v1249 = vld [vmem:[#allocation2 + $0x8] sm:$0xff]
    %v1250 = vld [vmem:[%s6] sm:$0xff]
    %v1252 = vlaneseq
    %v1253 = vshrl.u32 %v1252, 7
    %v1254 = vsub.s32 0, %v1253
    %v1255 = vrot.slane %v1250, %v1254
    %v1256 = vlaneseq
    %v1257 = vshrl.u32 %v1256, 7
    %v1258 = vsub.s32 1, %v1257
    %v1259 = vrot.slane %v1250, %v1258
    %v1260 = vlaneseq
    %v1261 = vshrl.u32 %v1260, 7
    %v1262 = vsub.s32 2, %v1261
    %v1263 = vrot.slane %v1250, %v1262
    %v1264 = vlaneseq
    %v1265 = vshrl.u32 %v1264, 7
    %v1266 = vsub.s32 3, %v1265
    %v1267 = vrot.slane %v1250, %v1266
    %v1268 = vlaneseq
    %v1269 = vshrl.u32 %v1268, 7
    %v1270 = vsub.s32 4, %v1269
    %v1271 = vrot.slane %v1250, %v1270
    %v1272 = vlaneseq
    %v1273 = vshrl.u32 %v1272, 7
    %v1274 = vsub.s32 5, %v1273
    %v1275 = vrot.slane %v1250, %v1274
    %v1276 = vlaneseq
    %v1277 = vshrl.u32 %v1276, 7
    %v1278 = vsub.s32 6, %v1277
    %v1279 = vrot.slane %v1250, %v1278
    %v1280 = vlaneseq
    %v1281 = vshrl.u32 %v1280, 7
    %v1282 = vsub.s32 7, %v1281
    %v1283 = vrot.slane %v1250, %v1282
    %v1284 = vcombine.low %v1255, %v1259
    %v1285 = vcombine.low %v1263, %v1267
    %v1287 = vunpack.c.l.s4 1983009808
    %v1288 = vunpack.c.0.s8 %v1287
    %v1289 = vlaneseq
    %v1290 = vshrl.u32 %v1289, 7
    %v1291 = vsub.s32 %v1288, %v1290
    %v1292 = vrot.slane %v1284, %v1291
    %v1294 = vunpack.c.l.s4 1983009808
    %v1295 = vunpack.c.0.s8 %v1294
    %v1296 = vlaneseq
    %v1297 = vshrl.u32 %v1296, 7
    %v1298 = vsub.s32 %v1295, %v1297
    %v1299 = vrot.slane %v1285, %v1298
    %v1300 = vcombine.low %v1292, %v1299
    %v1301 = vcombine.low %v1271, %v1275
    %v1302 = vcombine.low %v1279, %v1283
    %v1304 = vunpack.c.l.s4 1983009808
    %v1305 = vunpack.c.0.s8 %v1304
    %v1306 = vlaneseq
    %v1307 = vshrl.u32 %v1306, 7
    %v1308 = vsub.s32 %v1305, %v1307
    %v1309 = vrot.slane %v1301, %v1308
    %v1311 = vunpack.c.l.s4 1983009808
    %v1312 = vunpack.c.0.s8 %v1311
    %v1313 = vlaneseq
    %v1314 = vshrl.u32 %v1313, 7
    %v1315 = vsub.s32 %v1312, %v1314
    %v1316 = vrot.slane %v1302, %v1315
    %v1317 = vcombine.low %v1309, %v1316
    %v1320 = vadd.f32 %v1248, %v1300
    %v1321 = vadd.f32 %v1249, %v1317
    %v1322 = vmax.f32 %v1320, 0.0
    %v1323 = vmax.f32 %v1321, 0.0
    %v1326 = vcombine.high %v1322, %v1322
    %v1328 = vunpack.c.l.s4 1983009808
    %v1329 = vunpack.c.0.s8 %v1328
    %v1330 = vlaneseq
    %v1331 = vshrl.u32 %v1330, 7
    %v1332 = vsub.s32 %v1329, %v1331
    %v1333 = vrot.slane %v1322, %v1332
    %v1335 = vunpack.c.l.s4 1983009808
    %v1336 = vunpack.c.0.s8 %v1335
    %v1337 = vlaneseq
    %v1338 = vshrl.u32 %v1337, 7
    %v1339 = vsub.s32 %v1336, %v1338
    %v1340 = vrot.slane %v1326, %v1339
    %v1341 = vcombine.high %v1333, %v1333
    %v1342 = vcombine.high %v1340, %v1340
    %v1343 = vcombine.high %v1323, %v1323
    %v1345 = vunpack.c.l.s4 1983009808
    %v1346 = vunpack.c.0.s8 %v1345
    %v1347 = vlaneseq
    %v1348 = vshrl.u32 %v1347, 7
    %v1349 = vsub.s32 %v1346, %v1348
    %v1350 = vrot.slane %v1323, %v1349
    %v1352 = vunpack.c.l.s4 1983009808
    %v1353 = vunpack.c.0.s8 %v1352
    %v1354 = vlaneseq
    %v1355 = vshrl.u32 %v1354, 7
    %v1356 = vsub.s32 %v1353, %v1355
    %v1357 = vrot.slane %v1343, %v1356
    %v1358 = vcombine.high %v1350, %v1350
    %v1359 = vcombine.high %v1357, %v1357
    %v1368 = vpack.c.bf16 %v1333, %v1333
    %v1369 = vpack.c.bf16 %v1341, %v1341
    %v1370 = vpack.c.bf16 %v1340, %v1340
    %v1371 = vpack.c.bf16 %v1342, %v1342
    %v1372 = vpack.c.bf16 %v1350, %v1350
    %v1373 = vpack.c.bf16 %v1358, %v1358
    %v1374 = vpack.c.bf16 %v1357, %v1357
    %v1375 = vpack.c.bf16 %v1359, %v1359
    %v1376 = vld [vmem:[%s7] sm:$0xff]
    %v1377 = vld [vmem:[%s7 + $0x8] sm:$0xff]
    %v1378 = vld [vmem:[%s7 + $0x10] sm:$0xff]
    %v1379 = vld [vmem:[%s7 + $0x18] sm:$0xff]
    %v1380 = vld [vmem:[%s7 + $0x20] sm:$0xff]
    %v1381 = vld [vmem:[%s7 + $0x28] sm:$0xff]
    %v1382 = vld [vmem:[%s7 + $0x30] sm:$0xff]
    %v1383 = vld [vmem:[%s7 + $0x38] sm:$0xff]
    %v1384 = vld [vmem:[%s7 + $0x40] sm:$0xff]
    %v1385 = vld [vmem:[%s7 + $0x48] sm:$0xff]
    %v1386 = vld [vmem:[%s7 + $0x50] sm:$0xff]
    %v1387 = vld [vmem:[%s7 + $0x58] sm:$0xff]
    %v1388 = vld [vmem:[%s7 + $0x60] sm:$0xff]
    %v1389 = vld [vmem:[%s7 + $0x68] sm:$0xff]
    %v1390 = vld [vmem:[%s7 + $0x70] sm:$0xff]
    %v1391 = vld [vmem:[%s7 + $0x78] sm:$0xff]
    %v1392 = vld [vmem:[%s7 + $0x80] sm:$0xff]
    %v1393 = vld [vmem:[%s7 + $0x88] sm:$0xff]
    %v1394 = vld [vmem:[%s7 + $0x90] sm:$0xff]
    %v1395 = vld [vmem:[%s7 + $0x98] sm:$0xff]
    %v1396 = vld [vmem:[%s7 + $0xa0] sm:$0xff]
    %v1397 = vld [vmem:[%s7 + $0xa8] sm:$0xff]
    %v1398 = vld [vmem:[%s7 + $0xb0] sm:$0xff]
    %v1399 = vld [vmem:[%s7 + $0xb8] sm:$0xff]
    %v1400 = vld [vmem:[%s7 + $0xc0] sm:$0xff]
    %v1401 = vld [vmem:[%s7 + $0xc8] sm:$0xff]
    %v1402 = vld [vmem:[%s7 + $0xd0] sm:$0xff]
    %v1403 = vld [vmem:[%s7 + $0xd8] sm:$0xff]
    %v1404 = vld [vmem:[%s7 + $0xe0] sm:$0xff]
    %v1405 = vld [vmem:[%s7 + $0xe8] sm:$0xff]
    %v1406 = vld [vmem:[%s7 + $0xf0] sm:$0xff]
    %v1407 = vld [vmem:[%s7 + $0xf8] sm:$0xff]
    %v1408 = vld [vmem:[%s7 + $0x100] sm:$0xff]
    %v1409 = vld [vmem:[%s7 + $0x108] sm:$0xff]
    %v1410 = vld [vmem:[%s7 + $0x110] sm:$0xff]
    %v1411 = vld [vmem:[%s7 + $0x118] sm:$0xff]
    %v1412 = vld [vmem:[%s7 + $0x120] sm:$0xff]
    %v1413 = vld [vmem:[%s7 + $0x128] sm:$0xff]
    %v1414 = vld [vmem:[%s7 + $0x130] sm:$0xff]
    %v1415 = vld [vmem:[%s7 + $0x138] sm:$0xff]
    %v1416 = vld [vmem:[%s7 + $0x140] sm:$0xff]
    %v1417 = vld [vmem:[%s7 + $0x148] sm:$0xff]
    %v1418 = vld [vmem:[%s7 + $0x150] sm:$0xff]
    %v1419 = vld [vmem:[%s7 + $0x158] sm:$0xff]
    %v1420 = vld [vmem:[%s7 + $0x160] sm:$0xff]
    %v1421 = vld [vmem:[%s7 + $0x168] sm:$0xff]
    %v1422 = vld [vmem:[%s7 + $0x170] sm:$0xff]
    %v1423 = vld [vmem:[%s7 + $0x178] sm:$0xff]
    %v1424 = vld [vmem:[%s7 + $0x180] sm:$0xff]
    %v1425 = vld [vmem:[%s7 + $0x188] sm:$0xff]
    %v1426 = vld [vmem:[%s7 + $0x190] sm:$0xff]
    %v1427 = vld [vmem:[%s7 + $0x198] sm:$0xff]
    %v1428 = vld [vmem:[%s7 + $0x1a0] sm:$0xff]
    %v1429 = vld [vmem:[%s7 + $0x1a8] sm:$0xff]
    %v1430 = vld [vmem:[%s7 + $0x1b0] sm:$0xff]
    %v1431 = vld [vmem:[%s7 + $0x1b8] sm:$0xff]
    %v1432 = vld [vmem:[%s7 + $0x1c0] sm:$0xff]
    %v1433 = vld [vmem:[%s7 + $0x1c8] sm:$0xff]
    %v1434 = vld [vmem:[%s7 + $0x1d0] sm:$0xff]
    %v1435 = vld [vmem:[%s7 + $0x1d8] sm:$0xff]
    %v1436 = vld [vmem:[%s7 + $0x1e0] sm:$0xff]
    %v1437 = vld [vmem:[%s7 + $0x1e8] sm:$0xff]
    %v1438 = vld [vmem:[%s7 + $0x1f0] sm:$0xff]
    %v1439 = vld [vmem:[%s7 + $0x1f8] sm:$0xff]
    %v1440 = vld [vmem:[%s7 + $0x200] sm:$0xff]
    %v1441 = vld [vmem:[%s7 + $0x208] sm:$0xff]
    %v1442 = vld [vmem:[%s7 + $0x210] sm:$0xff]
    %v1443 = vld [vmem:[%s7 + $0x218] sm:$0xff]
    %v1444 = vld [vmem:[%s7 + $0x220] sm:$0xff]
    %v1445 = vld [vmem:[%s7 + $0x228] sm:$0xff]
    %v1446 = vld [vmem:[%s7 + $0x230] sm:$0xff]
    %v1447 = vld [vmem:[%s7 + $0x238] sm:$0xff]
    %v1448 = vld [vmem:[%s7 + $0x240] sm:$0xff]
    %v1449 = vld [vmem:[%s7 + $0x248] sm:$0xff]
    %v1450 = vld [vmem:[%s7 + $0x250] sm:$0xff]
    %v1451 = vld [vmem:[%s7 + $0x258] sm:$0xff]
    %v1452 = vld [vmem:[%s7 + $0x260] sm:$0xff]
    %v1453 = vld [vmem:[%s7 + $0x268] sm:$0xff]
    %v1454 = vld [vmem:[%s7 + $0x270] sm:$0xff]
    %v1455 = vld [vmem:[%s7 + $0x278] sm:$0xff]
    %v1456 = vld [vmem:[%s7 + $0x280] sm:$0xff]
    %v1457 = vld [vmem:[%s7 + $0x288] sm:$0xff]
    %v1458 = vld [vmem:[%s7 + $0x290] sm:$0xff]
    %v1459 = vld [vmem:[%s7 + $0x298] sm:$0xff]
    %v1460 = vld [vmem:[%s7 + $0x2a0] sm:$0xff]
    %v1461 = vld [vmem:[%s7 + $0x2a8] sm:$0xff]
    %v1462 = vld [vmem:[%s7 + $0x2b0] sm:$0xff]
    %v1463 = vld [vmem:[%s7 + $0x2b8] sm:$0xff]
    %v1464 = vld [vmem:[%s7 + $0x2c0] sm:$0xff]
    %v1465 = vld [vmem:[%s7 + $0x2c8] sm:$0xff]
    %v1466 = vld [vmem:[%s7 + $0x2d0] sm:$0xff]
    %v1467 = vld [vmem:[%s7 + $0x2d8] sm:$0xff]
    %v1468 = vld [vmem:[%s7 + $0x2e0] sm:$0xff]
    %v1469 = vld [vmem:[%s7 + $0x2e8] sm:$0xff]
    %v1470 = vld [vmem:[%s7 + $0x2f0] sm:$0xff]
    %v1471 = vld [vmem:[%s7 + $0x2f8] sm:$0xff]
    %v1472 = vld [vmem:[%s7 + $0x300] sm:$0xff]
    %v1473 = vld [vmem:[%s7 + $0x308] sm:$0xff]
    %v1474 = vld [vmem:[%s7 + $0x310] sm:$0xff]
    %v1475 = vld [vmem:[%s7 + $0x318] sm:$0xff]
    %v1476 = vld [vmem:[%s7 + $0x320] sm:$0xff]
    %v1477 = vld [vmem:[%s7 + $0x328] sm:$0xff]
    %v1478 = vld [vmem:[%s7 + $0x330] sm:$0xff]
    %v1479 = vld [vmem:[%s7 + $0x338] sm:$0xff]
    %v1480 = vld [vmem:[%s7 + $0x340] sm:$0xff]
    %v1481 = vld [vmem:[%s7 + $0x348] sm:$0xff]
    %v1482 = vld [vmem:[%s7 + $0x350] sm:$0xff]
    %v1483 = vld [vmem:[%s7 + $0x358] sm:$0xff]
    %v1484 = vld [vmem:[%s7 + $0x360] sm:$0xff]
    %v1485 = vld [vmem:[%s7 + $0x368] sm:$0xff]
    %v1486 = vld [vmem:[%s7 + $0x370] sm:$0xff]
    %v1487 = vld [vmem:[%s7 + $0x378] sm:$0xff]
    %v1488 = vld [vmem:[%s7 + $0x380] sm:$0xff]
    %v1489 = vld [vmem:[%s7 + $0x388] sm:$0xff]
    %v1490 = vld [vmem:[%s7 + $0x390] sm:$0xff]
    %v1491 = vld [vmem:[%s7 + $0x398] sm:$0xff]
    %v1492 = vld [vmem:[%s7 + $0x3a0] sm:$0xff]
    %v1493 = vld [vmem:[%s7 + $0x3a8] sm:$0xff]
    %v1494 = vld [vmem:[%s7 + $0x3b0] sm:$0xff]
    %v1495 = vld [vmem:[%s7 + $0x3b8] sm:$0xff]
    %v1496 = vld [vmem:[%s7 + $0x3c0] sm:$0xff]
    %v1497 = vld [vmem:[%s7 + $0x3c8] sm:$0xff]
    %v1498 = vld [vmem:[%s7 + $0x3d0] sm:$0xff]
    %v1499 = vld [vmem:[%s7 + $0x3d8] sm:$0xff]
    %v1500 = vld [vmem:[%s7 + $0x3e0] sm:$0xff]
    %v1501 = vld [vmem:[%s7 + $0x3e8] sm:$0xff]
    %v1502 = vld [vmem:[%s7 + $0x3f0] sm:$0xff]
    %v1503 = vld [vmem:[%s7 + $0x3f8] sm:$0xff]
    %v1504 = vld [vmem:[%s7 + $0x400] sm:$0xff]
    %v1505 = vld [vmem:[%s7 + $0x408] sm:$0xff]
    %v1506 = vld [vmem:[%s7 + $0x410] sm:$0xff]
    %v1507 = vld [vmem:[%s7 + $0x418] sm:$0xff]
    %v1508 = vld [vmem:[%s7 + $0x420] sm:$0xff]
    %v1509 = vld [vmem:[%s7 + $0x428] sm:$0xff]
    %v1510 = vld [vmem:[%s7 + $0x430] sm:$0xff]
    %v1511 = vld [vmem:[%s7 + $0x438] sm:$0xff]
    %v1512 = vld [vmem:[%s7 + $0x440] sm:$0xff]
    %v1513 = vld [vmem:[%s7 + $0x448] sm:$0xff]
    %v1514 = vld [vmem:[%s7 + $0x450] sm:$0xff]
    %v1515 = vld [vmem:[%s7 + $0x458] sm:$0xff]
    %v1516 = vld [vmem:[%s7 + $0x460] sm:$0xff]
    %v1517 = vld [vmem:[%s7 + $0x468] sm:$0xff]
    %v1518 = vld [vmem:[%s7 + $0x470] sm:$0xff]
    %v1519 = vld [vmem:[%s7 + $0x478] sm:$0xff]
    %v1520 = vld [vmem:[%s7 + $0x480] sm:$0xff]
    %v1521 = vld [vmem:[%s7 + $0x488] sm:$0xff]
    %v1522 = vld [vmem:[%s7 + $0x490] sm:$0xff]
    %v1523 = vld [vmem:[%s7 + $0x498] sm:$0xff]
    %v1524 = vld [vmem:[%s7 + $0x4a0] sm:$0xff]
    %v1525 = vld [vmem:[%s7 + $0x4a8] sm:$0xff]
    %v1526 = vld [vmem:[%s7 + $0x4b0] sm:$0xff]
    %v1527 = vld [vmem:[%s7 + $0x4b8] sm:$0xff]
    %v1528 = vld [vmem:[%s7 + $0x4c0] sm:$0xff]
    %v1529 = vld [vmem:[%s7 + $0x4c8] sm:$0xff]
    %v1530 = vld [vmem:[%s7 + $0x4d0] sm:$0xff]
    %v1531 = vld [vmem:[%s7 + $0x4d8] sm:$0xff]
    %v1532 = vld [vmem:[%s7 + $0x4e0] sm:$0xff]
    %v1533 = vld [vmem:[%s7 + $0x4e8] sm:$0xff]
    %v1534 = vld [vmem:[%s7 + $0x4f0] sm:$0xff]
    %v1535 = vld [vmem:[%s7 + $0x4f8] sm:$0xff]
    %v1536 = vld [vmem:[%s7 + $0x500] sm:$0xff]
    %v1537 = vld [vmem:[%s7 + $0x508] sm:$0xff]
    %v1538 = vld [vmem:[%s7 + $0x510] sm:$0xff]
    %v1539 = vld [vmem:[%s7 + $0x518] sm:$0xff]
    %v1540 = vld [vmem:[%s7 + $0x520] sm:$0xff]
    %v1541 = vld [vmem:[%s7 + $0x528] sm:$0xff]
    %v1542 = vld [vmem:[%s7 + $0x530] sm:$0xff]
    %v1543 = vld [vmem:[%s7 + $0x538] sm:$0xff]
    %v1544 = vld [vmem:[%s7 + $0x540] sm:$0xff]
    %v1545 = vld [vmem:[%s7 + $0x548] sm:$0xff]
    %v1546 = vld [vmem:[%s7 + $0x550] sm:$0xff]
    %v1547 = vld [vmem:[%s7 + $0x558] sm:$0xff]
    %v1548 = vld [vmem:[%s7 + $0x560] sm:$0xff]
    %v1549 = vld [vmem:[%s7 + $0x568] sm:$0xff]
    %v1550 = vld [vmem:[%s7 + $0x570] sm:$0xff]
    %v1551 = vld [vmem:[%s7 + $0x578] sm:$0xff]
    %v1552 = vld [vmem:[%s7 + $0x580] sm:$0xff]
    %v1553 = vld [vmem:[%s7 + $0x588] sm:$0xff]
    %v1554 = vld [vmem:[%s7 + $0x590] sm:$0xff]
    %v1555 = vld [vmem:[%s7 + $0x598] sm:$0xff]
    %v1556 = vld [vmem:[%s7 + $0x5a0] sm:$0xff]
    %v1557 = vld [vmem:[%s7 + $0x5a8] sm:$0xff]
    %v1558 = vld [vmem:[%s7 + $0x5b0] sm:$0xff]
    %v1559 = vld [vmem:[%s7 + $0x5b8] sm:$0xff]
    %v1560 = vld [vmem:[%s7 + $0x5c0] sm:$0xff]
    %v1561 = vld [vmem:[%s7 + $0x5c8] sm:$0xff]
    %v1562 = vld [vmem:[%s7 + $0x5d0] sm:$0xff]
    %v1563 = vld [vmem:[%s7 + $0x5d8] sm:$0xff]
    %v1564 = vld [vmem:[%s7 + $0x5e0] sm:$0xff]
    %v1565 = vld [vmem:[%s7 + $0x5e8] sm:$0xff]
    %v1566 = vld [vmem:[%s7 + $0x5f0] sm:$0xff]
    %v1567 = vld [vmem:[%s7 + $0x5f8] sm:$0xff]
    %v1568 = vld [vmem:[%s7 + $0x600] sm:$0xff]
    %v1569 = vld [vmem:[%s7 + $0x608] sm:$0xff]
    %v1570 = vld [vmem:[%s7 + $0x610] sm:$0xff]
    %v1571 = vld [vmem:[%s7 + $0x618] sm:$0xff]
    %v1572 = vld [vmem:[%s7 + $0x620] sm:$0xff]
    %v1573 = vld [vmem:[%s7 + $0x628] sm:$0xff]
    %v1574 = vld [vmem:[%s7 + $0x630] sm:$0xff]
    %v1575 = vld [vmem:[%s7 + $0x638] sm:$0xff]
    %v1576 = vld [vmem:[%s7 + $0x640] sm:$0xff]
    %v1577 = vld [vmem:[%s7 + $0x648] sm:$0xff]
    %v1578 = vld [vmem:[%s7 + $0x650] sm:$0xff]
    %v1579 = vld [vmem:[%s7 + $0x658] sm:$0xff]
    %v1580 = vld [vmem:[%s7 + $0x660] sm:$0xff]
    %v1581 = vld [vmem:[%s7 + $0x668] sm:$0xff]
    %v1582 = vld [vmem:[%s7 + $0x670] sm:$0xff]
    %v1583 = vld [vmem:[%s7 + $0x678] sm:$0xff]
    %v1584 = vld [vmem:[%s7 + $0x680] sm:$0xff]
    %v1585 = vld [vmem:[%s7 + $0x688] sm:$0xff]
    %v1586 = vld [vmem:[%s7 + $0x690] sm:$0xff]
    %v1587 = vld [vmem:[%s7 + $0x698] sm:$0xff]
    %v1588 = vld [vmem:[%s7 + $0x6a0] sm:$0xff]
    %v1589 = vld [vmem:[%s7 + $0x6a8] sm:$0xff]
    %v1590 = vld [vmem:[%s7 + $0x6b0] sm:$0xff]
    %v1591 = vld [vmem:[%s7 + $0x6b8] sm:$0xff]
    %v1592 = vld [vmem:[%s7 + $0x6c0] sm:$0xff]
    %v1593 = vld [vmem:[%s7 + $0x6c8] sm:$0xff]
    %v1594 = vld [vmem:[%s7 + $0x6d0] sm:$0xff]
    %v1595 = vld [vmem:[%s7 + $0x6d8] sm:$0xff]
    %v1596 = vld [vmem:[%s7 + $0x6e0] sm:$0xff]
    %v1597 = vld [vmem:[%s7 + $0x6e8] sm:$0xff]
    %v1598 = vld [vmem:[%s7 + $0x6f0] sm:$0xff]
    %v1599 = vld [vmem:[%s7 + $0x6f8] sm:$0xff]
    %v1600 = vld [vmem:[%s7 + $0x700] sm:$0xff]
    %v1601 = vld [vmem:[%s7 + $0x708] sm:$0xff]
    %v1602 = vld [vmem:[%s7 + $0x710] sm:$0xff]
    %v1603 = vld [vmem:[%s7 + $0x718] sm:$0xff]
    %v1604 = vld [vmem:[%s7 + $0x720] sm:$0xff]
    %v1605 = vld [vmem:[%s7 + $0x728] sm:$0xff]
    %v1606 = vld [vmem:[%s7 + $0x730] sm:$0xff]
    %v1607 = vld [vmem:[%s7 + $0x738] sm:$0xff]
    %v1608 = vld [vmem:[%s7 + $0x740] sm:$0xff]
    %v1609 = vld [vmem:[%s7 + $0x748] sm:$0xff]
    %v1610 = vld [vmem:[%s7 + $0x750] sm:$0xff]
    %v1611 = vld [vmem:[%s7 + $0x758] sm:$0xff]
    %v1612 = vld [vmem:[%s7 + $0x760] sm:$0xff]
    %v1613 = vld [vmem:[%s7 + $0x768] sm:$0xff]
    %v1614 = vld [vmem:[%s7 + $0x770] sm:$0xff]
    %v1615 = vld [vmem:[%s7 + $0x778] sm:$0xff]
    %v1616 = vld [vmem:[%s7 + $0x780] sm:$0xff]
    %v1617 = vld [vmem:[%s7 + $0x788] sm:$0xff]
    %v1618 = vld [vmem:[%s7 + $0x790] sm:$0xff]
    %v1619 = vld [vmem:[%s7 + $0x798] sm:$0xff]
    %v1620 = vld [vmem:[%s7 + $0x7a0] sm:$0xff]
    %v1621 = vld [vmem:[%s7 + $0x7a8] sm:$0xff]
    %v1622 = vld [vmem:[%s7 + $0x7b0] sm:$0xff]
    %v1623 = vld [vmem:[%s7 + $0x7b8] sm:$0xff]
    %v1624 = vld [vmem:[%s7 + $0x7c0] sm:$0xff]
    %v1625 = vld [vmem:[%s7 + $0x7c8] sm:$0xff]
    %v1626 = vld [vmem:[%s7 + $0x7d0] sm:$0xff]
    %v1627 = vld [vmem:[%s7 + $0x7d8] sm:$0xff]
    %v1628 = vld [vmem:[%s7 + $0x7e0] sm:$0xff]
    %v1629 = vld [vmem:[%s7 + $0x7e8] sm:$0xff]
    %v1630 = vld [vmem:[%s7 + $0x7f0] sm:$0xff]
    %v1631 = vld [vmem:[%s7 + $0x7f8] sm:$0xff]
    %v1632 = vld [vmem:[%s8] sm:$0xf]
    %v1634 = vlaneseq
    %v1635 = vshrl.u32 %v1634, 7
    %v1636 = vsub.s32 0, %v1635
    %v1637 = vrot.slane %v1632, %v1636
    %v1638 = vlaneseq
    %v1639 = vshrl.u32 %v1638, 7
    %v1640 = vsub.s32 1, %v1639
    %v1641 = vrot.slane %v1632, %v1640
    %v1642 = vlaneseq
    %v1643 = vshrl.u32 %v1642, 7
    %v1644 = vsub.s32 2, %v1643
    %v1645 = vrot.slane %v1632, %v1644
    %v1646 = vlaneseq
    %v1647 = vshrl.u32 %v1646, 7
    %v1648 = vsub.s32 3, %v1647
    %v1649 = vrot.slane %v1632, %v1648
    %v1910 = vunpack.c.l.b16 %v1376
    %v1911 = vunpack.c.h.b16 %v1376
    %v1912 = vunpack.c.l.b16 %v1377
    %v1913 = vunpack.c.h.b16 %v1377
    %v1914 = vunpack.c.l.b16 %v1378
    %v1915 = vunpack.c.h.b16 %v1378
    %v1916 = vunpack.c.l.b16 %v1379
    %v1917 = vunpack.c.h.b16 %v1379
    %v1918 = vunpack.c.l.b16 %v1380
    %v1919 = vunpack.c.h.b16 %v1380
    %v1920 = vunpack.c.l.b16 %v1381
    %v1921 = vunpack.c.h.b16 %v1381
    %v1922 = vunpack.c.l.b16 %v1382
    %v1923 = vunpack.c.h.b16 %v1382
    %v1924 = vunpack.c.l.b16 %v1383
    %v1925 = vunpack.c.h.b16 %v1383
    %v1926 = vunpack.c.l.b16 %v1384
    %v1927 = vunpack.c.h.b16 %v1384
    %v1928 = vunpack.c.l.b16 %v1385
    %v1929 = vunpack.c.h.b16 %v1385
    %v1930 = vunpack.c.l.b16 %v1386
    %v1931 = vunpack.c.h.b16 %v1386
    %v1932 = vunpack.c.l.b16 %v1387
    %v1933 = vunpack.c.h.b16 %v1387
    %v1934 = vunpack.c.l.b16 %v1388
    %v1935 = vunpack.c.h.b16 %v1388
    %v1936 = vunpack.c.l.b16 %v1389
    %v1937 = vunpack.c.h.b16 %v1389
    %v1938 = vunpack.c.l.b16 %v1390
    %v1939 = vunpack.c.h.b16 %v1390
    %v1940 = vunpack.c.l.b16 %v1391
    %v1941 = vunpack.c.h.b16 %v1391
    %v1942 = vunpack.c.l.b16 %v1392
    %v1943 = vunpack.c.h.b16 %v1392
    %v1944 = vunpack.c.l.b16 %v1393
    %v1945 = vunpack.c.h.b16 %v1393
    %v1946 = vunpack.c.l.b16 %v1394
    %v1947 = vunpack.c.h.b16 %v1394
    %v1948 = vunpack.c.l.b16 %v1395
    %v1949 = vunpack.c.h.b16 %v1395
    %v1950 = vunpack.c.l.b16 %v1396
    %v1951 = vunpack.c.h.b16 %v1396
    %v1952 = vunpack.c.l.b16 %v1397
    %v1953 = vunpack.c.h.b16 %v1397
    %v1954 = vunpack.c.l.b16 %v1398
    %v1955 = vunpack.c.h.b16 %v1398
    %v1956 = vunpack.c.l.b16 %v1399
    %v1957 = vunpack.c.h.b16 %v1399
    %v1958 = vunpack.c.l.b16 %v1400
    %v1959 = vunpack.c.h.b16 %v1400
    %v1960 = vunpack.c.l.b16 %v1401
    %v1961 = vunpack.c.h.b16 %v1401
    %v1962 = vunpack.c.l.b16 %v1402
    %v1963 = vunpack.c.h.b16 %v1402
    %v1964 = vunpack.c.l.b16 %v1403
    %v1965 = vunpack.c.h.b16 %v1403
    %v1966 = vunpack.c.l.b16 %v1404
    %v1967 = vunpack.c.h.b16 %v1404
    %v1968 = vunpack.c.l.b16 %v1405
    %v1969 = vunpack.c.h.b16 %v1405
    %v1970 = vunpack.c.l.b16 %v1406
    %v1971 = vunpack.c.h.b16 %v1406
    %v1972 = vunpack.c.l.b16 %v1407
    %v1973 = vunpack.c.h.b16 %v1407
    %v1974 = vunpack.c.l.b16 %v1408
    %v1975 = vunpack.c.h.b16 %v1408
    %v1976 = vunpack.c.l.b16 %v1409
    %v1977 = vunpack.c.h.b16 %v1409
    %v1978 = vunpack.c.l.b16 %v1410
    %v1979 = vunpack.c.h.b16 %v1410
    %v1980 = vunpack.c.l.b16 %v1411
    %v1981 = vunpack.c.h.b16 %v1411
    %v1982 = vunpack.c.l.b16 %v1412
    %v1983 = vunpack.c.h.b16 %v1412
    %v1984 = vunpack.c.l.b16 %v1413
    %v1985 = vunpack.c.h.b16 %v1413
    %v1986 = vunpack.c.l.b16 %v1414
    %v1987 = vunpack.c.h.b16 %v1414
    %v1988 = vunpack.c.l.b16 %v1415
    %v1989 = vunpack.c.h.b16 %v1415
    %v1990 = vunpack.c.l.b16 %v1416
    %v1991 = vunpack.c.h.b16 %v1416
    %v1992 = vunpack.c.l.b16 %v1417
    %v1993 = vunpack.c.h.b16 %v1417
    %v1994 = vunpack.c.l.b16 %v1418
    %v1995 = vunpack.c.h.b16 %v1418
    %v1996 = vunpack.c.l.b16 %v1419
    %v1997 = vunpack.c.h.b16 %v1419
    %v1998 = vunpack.c.l.b16 %v1420
    %v1999 = vunpack.c.h.b16 %v1420
    %v2000 = vunpack.c.l.b16 %v1421
    %v2001 = vunpack.c.h.b16 %v1421
    %v2002 = vunpack.c.l.b16 %v1422
    %v2003 = vunpack.c.h.b16 %v1422
    %v2004 = vunpack.c.l.b16 %v1423
    %v2005 = vunpack.c.h.b16 %v1423
    %v2006 = vunpack.c.l.b16 %v1424
    %v2007 = vunpack.c.h.b16 %v1424
    %v2008 = vunpack.c.l.b16 %v1425
    %v2009 = vunpack.c.h.b16 %v1425
    %v2010 = vunpack.c.l.b16 %v1426
    %v2011 = vunpack.c.h.b16 %v1426
    %v2012 = vunpack.c.l.b16 %v1427
    %v2013 = vunpack.c.h.b16 %v1427
    %v2014 = vunpack.c.l.b16 %v1428
    %v2015 = vunpack.c.h.b16 %v1428
    %v2016 = vunpack.c.l.b16 %v1429
    %v2017 = vunpack.c.h.b16 %v1429
    %v2018 = vunpack.c.l.b16 %v1430
    %v2019 = vunpack.c.h.b16 %v1430
    %v2020 = vunpack.c.l.b16 %v1431
    %v2021 = vunpack.c.h.b16 %v1431
    %v2022 = vunpack.c.l.b16 %v1432
    %v2023 = vunpack.c.h.b16 %v1432
    %v2024 = vunpack.c.l.b16 %v1433
    %v2025 = vunpack.c.h.b16 %v1433
    %v2026 = vunpack.c.l.b16 %v1434
    %v2027 = vunpack.c.h.b16 %v1434
    %v2028 = vunpack.c.l.b16 %v1435
    %v2029 = vunpack.c.h.b16 %v1435
    %v2030 = vunpack.c.l.b16 %v1436
    %v2031 = vunpack.c.h.b16 %v1436
    %v2032 = vunpack.c.l.b16 %v1437
    %v2033 = vunpack.c.h.b16 %v1437
    %v2034 = vunpack.c.l.b16 %v1438
    %v2035 = vunpack.c.h.b16 %v1438
    %v2036 = vunpack.c.l.b16 %v1439
    %v2037 = vunpack.c.h.b16 %v1439
    %v2038 = vunpack.c.l.b16 %v1440
    %v2039 = vunpack.c.h.b16 %v1440
    %v2040 = vunpack.c.l.b16 %v1441
    %v2041 = vunpack.c.h.b16 %v1441
    %v2042 = vunpack.c.l.b16 %v1442
    %v2043 = vunpack.c.h.b16 %v1442
    %v2044 = vunpack.c.l.b16 %v1443
    %v2045 = vunpack.c.h.b16 %v1443
    %v2046 = vunpack.c.l.b16 %v1444
    %v2047 = vunpack.c.h.b16 %v1444
    %v2048 = vunpack.c.l.b16 %v1445
    %v2049 = vunpack.c.h.b16 %v1445
    %v2050 = vunpack.c.l.b16 %v1446
    %v2051 = vunpack.c.h.b16 %v1446
    %v2052 = vunpack.c.l.b16 %v1447
    %v2053 = vunpack.c.h.b16 %v1447
    %v2054 = vunpack.c.l.b16 %v1448
    %v2055 = vunpack.c.h.b16 %v1448
    %v2056 = vunpack.c.l.b16 %v1449
    %v2057 = vunpack.c.h.b16 %v1449
    %v2058 = vunpack.c.l.b16 %v1450
    %v2059 = vunpack.c.h.b16 %v1450
    %v2060 = vunpack.c.l.b16 %v1451
    %v2061 = vunpack.c.h.b16 %v1451
    %v2062 = vunpack.c.l.b16 %v1452
    %v2063 = vunpack.c.h.b16 %v1452
    %v2064 = vunpack.c.l.b16 %v1453
    %v2065 = vunpack.c.h.b16 %v1453
    %v2066 = vunpack.c.l.b16 %v1454
    %v2067 = vunpack.c.h.b16 %v1454
    %v2068 = vunpack.c.l.b16 %v1455
    %v2069 = vunpack.c.h.b16 %v1455
    %v2070 = vunpack.c.l.b16 %v1456
    %v2071 = vunpack.c.h.b16 %v1456
    %v2072 = vunpack.c.l.b16 %v1457
    %v2073 = vunpack.c.h.b16 %v1457
    %v2074 = vunpack.c.l.b16 %v1458
    %v2075 = vunpack.c.h.b16 %v1458
    %v2076 = vunpack.c.l.b16 %v1459
    %v2077 = vunpack.c.h.b16 %v1459
    %v2078 = vunpack.c.l.b16 %v1460
    %v2079 = vunpack.c.h.b16 %v1460
    %v2080 = vunpack.c.l.b16 %v1461
    %v2081 = vunpack.c.h.b16 %v1461
    %v2082 = vunpack.c.l.b16 %v1462
    %v2083 = vunpack.c.h.b16 %v1462
    %v2084 = vunpack.c.l.b16 %v1463
    %v2085 = vunpack.c.h.b16 %v1463
    %v2086 = vunpack.c.l.b16 %v1464
    %v2087 = vunpack.c.h.b16 %v1464
    %v2088 = vunpack.c.l.b16 %v1465
    %v2089 = vunpack.c.h.b16 %v1465
    %v2090 = vunpack.c.l.b16 %v1466
    %v2091 = vunpack.c.h.b16 %v1466
    %v2092 = vunpack.c.l.b16 %v1467
    %v2093 = vunpack.c.h.b16 %v1467
    %v2094 = vunpack.c.l.b16 %v1468
    %v2095 = vunpack.c.h.b16 %v1468
    %v2096 = vunpack.c.l.b16 %v1469
    %v2097 = vunpack.c.h.b16 %v1469
    %v2098 = vunpack.c.l.b16 %v1470
    %v2099 = vunpack.c.h.b16 %v1470
    %v2100 = vunpack.c.l.b16 %v1471
    %v2101 = vunpack.c.h.b16 %v1471
    %v2102 = vunpack.c.l.b16 %v1472
    %v2103 = vunpack.c.h.b16 %v1472
    %v2104 = vunpack.c.l.b16 %v1473
    %v2105 = vunpack.c.h.b16 %v1473
    %v2106 = vunpack.c.l.b16 %v1474
    %v2107 = vunpack.c.h.b16 %v1474
    %v2108 = vunpack.c.l.b16 %v1475
    %v2109 = vunpack.c.h.b16 %v1475
    %v2110 = vunpack.c.l.b16 %v1476
    %v2111 = vunpack.c.h.b16 %v1476
    %v2112 = vunpack.c.l.b16 %v1477
    %v2113 = vunpack.c.h.b16 %v1477
    %v2114 = vunpack.c.l.b16 %v1478
    %v2115 = vunpack.c.h.b16 %v1478
    %v2116 = vunpack.c.l.b16 %v1479
    %v2117 = vunpack.c.h.b16 %v1479
    %v2118 = vunpack.c.l.b16 %v1480
    %v2119 = vunpack.c.h.b16 %v1480
    %v2120 = vunpack.c.l.b16 %v1481
    %v2121 = vunpack.c.h.b16 %v1481
    %v2122 = vunpack.c.l.b16 %v1482
    %v2123 = vunpack.c.h.b16 %v1482
    %v2124 = vunpack.c.l.b16 %v1483
    %v2125 = vunpack.c.h.b16 %v1483
    %v2126 = vunpack.c.l.b16 %v1484
    %v2127 = vunpack.c.h.b16 %v1484
    %v2128 = vunpack.c.l.b16 %v1485
    %v2129 = vunpack.c.h.b16 %v1485
    %v2130 = vunpack.c.l.b16 %v1486
    %v2131 = vunpack.c.h.b16 %v1486
    %v2132 = vunpack.c.l.b16 %v1487
    %v2133 = vunpack.c.h.b16 %v1487
    %v2134 = vunpack.c.l.b16 %v1488
    %v2135 = vunpack.c.h.b16 %v1488
    %v2136 = vunpack.c.l.b16 %v1489
    %v2137 = vunpack.c.h.b16 %v1489
    %v2138 = vunpack.c.l.b16 %v1490
    %v2139 = vunpack.c.h.b16 %v1490
    %v2140 = vunpack.c.l.b16 %v1491
    %v2141 = vunpack.c.h.b16 %v1491
    %v2142 = vunpack.c.l.b16 %v1492
    %v2143 = vunpack.c.h.b16 %v1492
    %v2144 = vunpack.c.l.b16 %v1493
    %v2145 = vunpack.c.h.b16 %v1493
    %v2146 = vunpack.c.l.b16 %v1494
    %v2147 = vunpack.c.h.b16 %v1494
    %v2148 = vunpack.c.l.b16 %v1495
    %v2149 = vunpack.c.h.b16 %v1495
    %v2150 = vunpack.c.l.b16 %v1496
    %v2151 = vunpack.c.h.b16 %v1496
    %v2152 = vunpack.c.l.b16 %v1497
    %v2153 = vunpack.c.h.b16 %v1497
    %v2154 = vunpack.c.l.b16 %v1498
    %v2155 = vunpack.c.h.b16 %v1498
    %v2156 = vunpack.c.l.b16 %v1499
    %v2157 = vunpack.c.h.b16 %v1499
    %v2158 = vunpack.c.l.b16 %v1500
    %v2159 = vunpack.c.h.b16 %v1500
    %v2160 = vunpack.c.l.b16 %v1501
    %v2161 = vunpack.c.h.b16 %v1501
    %v2162 = vunpack.c.l.b16 %v1502
    %v2163 = vunpack.c.h.b16 %v1502
    %v2164 = vunpack.c.l.b16 %v1503
    %v2165 = vunpack.c.h.b16 %v1503
    %v2166 = vunpack.c.l.b16 %v1504
    %v2167 = vunpack.c.h.b16 %v1504
    %v2168 = vunpack.c.l.b16 %v1505
    %v2169 = vunpack.c.h.b16 %v1505
    %v2170 = vunpack.c.l.b16 %v1506
    %v2171 = vunpack.c.h.b16 %v1506
    %v2172 = vunpack.c.l.b16 %v1507
    %v2173 = vunpack.c.h.b16 %v1507
    %v2174 = vunpack.c.l.b16 %v1508
    %v2175 = vunpack.c.h.b16 %v1508
    %v2176 = vunpack.c.l.b16 %v1509
    %v2177 = vunpack.c.h.b16 %v1509
    %v2178 = vunpack.c.l.b16 %v1510
    %v2179 = vunpack.c.h.b16 %v1510
    %v2180 = vunpack.c.l.b16 %v1511
    %v2181 = vunpack.c.h.b16 %v1511
    %v2182 = vunpack.c.l.b16 %v1512
    %v2183 = vunpack.c.h.b16 %v1512
    %v2184 = vunpack.c.l.b16 %v1513
    %v2185 = vunpack.c.h.b16 %v1513
    %v2186 = vunpack.c.l.b16 %v1514
    %v2187 = vunpack.c.h.b16 %v1514
    %v2188 = vunpack.c.l.b16 %v1515
    %v2189 = vunpack.c.h.b16 %v1515
    %v2190 = vunpack.c.l.b16 %v1516
    %v2191 = vunpack.c.h.b16 %v1516
    %v2192 = vunpack.c.l.b16 %v1517
    %v2193 = vunpack.c.h.b16 %v1517
    %v2194 = vunpack.c.l.b16 %v1518
    %v2195 = vunpack.c.h.b16 %v1518
    %v2196 = vunpack.c.l.b16 %v1519
    %v2197 = vunpack.c.h.b16 %v1519
    %v2198 = vunpack.c.l.b16 %v1520
    %v2199 = vunpack.c.h.b16 %v1520
    %v2200 = vunpack.c.l.b16 %v1521
    %v2201 = vunpack.c.h.b16 %v1521
    %v2202 = vunpack.c.l.b16 %v1522
    %v2203 = vunpack.c.h.b16 %v1522
    %v2204 = vunpack.c.l.b16 %v1523
    %v2205 = vunpack.c.h.b16 %v1523
    %v2206 = vunpack.c.l.b16 %v1524
    %v2207 = vunpack.c.h.b16 %v1524
    %v2208 = vunpack.c.l.b16 %v1525
    %v2209 = vunpack.c.h.b16 %v1525
    %v2210 = vunpack.c.l.b16 %v1526
    %v2211 = vunpack.c.h.b16 %v1526
    %v2212 = vunpack.c.l.b16 %v1527
    %v2213 = vunpack.c.h.b16 %v1527
    %v2214 = vunpack.c.l.b16 %v1528
    %v2215 = vunpack.c.h.b16 %v1528
    %v2216 = vunpack.c.l.b16 %v1529
    %v2217 = vunpack.c.h.b16 %v1529
    %v2218 = vunpack.c.l.b16 %v1530
    %v2219 = vunpack.c.h.b16 %v1530
    %v2220 = vunpack.c.l.b16 %v1531
    %v2221 = vunpack.c.h.b16 %v1531
    %v2222 = vunpack.c.l.b16 %v1532
    %v2223 = vunpack.c.h.b16 %v1532
    %v2224 = vunpack.c.l.b16 %v1533
    %v2225 = vunpack.c.h.b16 %v1533
    %v2226 = vunpack.c.l.b16 %v1534
    %v2227 = vunpack.c.h.b16 %v1534
    %v2228 = vunpack.c.l.b16 %v1535
    %v2229 = vunpack.c.h.b16 %v1535
    %v2230 = vunpack.c.l.b16 %v1536
    %v2231 = vunpack.c.h.b16 %v1536
    %v2232 = vunpack.c.l.b16 %v1537
    %v2233 = vunpack.c.h.b16 %v1537
    %v2234 = vunpack.c.l.b16 %v1538
    %v2235 = vunpack.c.h.b16 %v1538
    %v2236 = vunpack.c.l.b16 %v1539
    %v2237 = vunpack.c.h.b16 %v1539
    %v2238 = vunpack.c.l.b16 %v1540
    %v2239 = vunpack.c.h.b16 %v1540
    %v2240 = vunpack.c.l.b16 %v1541
    %v2241 = vunpack.c.h.b16 %v1541
    %v2242 = vunpack.c.l.b16 %v1542
    %v2243 = vunpack.c.h.b16 %v1542
    %v2244 = vunpack.c.l.b16 %v1543
    %v2245 = vunpack.c.h.b16 %v1543
    %v2246 = vunpack.c.l.b16 %v1544
    %v2247 = vunpack.c.h.b16 %v1544
    %v2248 = vunpack.c.l.b16 %v1545
    %v2249 = vunpack.c.h.b16 %v1545
    %v2250 = vunpack.c.l.b16 %v1546
    %v2251 = vunpack.c.h.b16 %v1546
    %v2252 = vunpack.c.l.b16 %v1547
    %v2253 = vunpack.c.h.b16 %v1547
    %v2254 = vunpack.c.l.b16 %v1548
    %v2255 = vunpack.c.h.b16 %v1548
    %v2256 = vunpack.c.l.b16 %v1549
    %v2257 = vunpack.c.h.b16 %v1549
    %v2258 = vunpack.c.l.b16 %v1550
    %v2259 = vunpack.c.h.b16 %v1550
    %v2260 = vunpack.c.l.b16 %v1551
    %v2261 = vunpack.c.h.b16 %v1551
    %v2262 = vunpack.c.l.b16 %v1552
    %v2263 = vunpack.c.h.b16 %v1552
    %v2264 = vunpack.c.l.b16 %v1553
    %v2265 = vunpack.c.h.b16 %v1553
    %v2266 = vunpack.c.l.b16 %v1554
    %v2267 = vunpack.c.h.b16 %v1554
    %v2268 = vunpack.c.l.b16 %v1555
    %v2269 = vunpack.c.h.b16 %v1555
    %v2270 = vunpack.c.l.b16 %v1556
    %v2271 = vunpack.c.h.b16 %v1556
    %v2272 = vunpack.c.l.b16 %v1557
    %v2273 = vunpack.c.h.b16 %v1557
    %v2274 = vunpack.c.l.b16 %v1558
    %v2275 = vunpack.c.h.b16 %v1558
    %v2276 = vunpack.c.l.b16 %v1559
    %v2277 = vunpack.c.h.b16 %v1559
    %v2278 = vunpack.c.l.b16 %v1560
    %v2279 = vunpack.c.h.b16 %v1560
    %v2280 = vunpack.c.l.b16 %v1561
    %v2281 = vunpack.c.h.b16 %v1561
    %v2282 = vunpack.c.l.b16 %v1562
    %v2283 = vunpack.c.h.b16 %v1562
    %v2284 = vunpack.c.l.b16 %v1563
    %v2285 = vunpack.c.h.b16 %v1563
    %v2286 = vunpack.c.l.b16 %v1564
    %v2287 = vunpack.c.h.b16 %v1564
    %v2288 = vunpack.c.l.b16 %v1565
    %v2289 = vunpack.c.h.b16 %v1565
    %v2290 = vunpack.c.l.b16 %v1566
    %v2291 = vunpack.c.h.b16 %v1566
    %v2292 = vunpack.c.l.b16 %v1567
    %v2293 = vunpack.c.h.b16 %v1567
    %v2294 = vunpack.c.l.b16 %v1568
    %v2295 = vunpack.c.h.b16 %v1568
    %v2296 = vunpack.c.l.b16 %v1569
    %v2297 = vunpack.c.h.b16 %v1569
    %v2298 = vunpack.c.l.b16 %v1570
    %v2299 = vunpack.c.h.b16 %v1570
    %v2300 = vunpack.c.l.b16 %v1571
    %v2301 = vunpack.c.h.b16 %v1571
    %v2302 = vunpack.c.l.b16 %v1572
    %v2303 = vunpack.c.h.b16 %v1572
    %v2304 = vunpack.c.l.b16 %v1573
    %v2305 = vunpack.c.h.b16 %v1573
    %v2306 = vunpack.c.l.b16 %v1574
    %v2307 = vunpack.c.h.b16 %v1574
    %v2308 = vunpack.c.l.b16 %v1575
    %v2309 = vunpack.c.h.b16 %v1575
    %v2310 = vunpack.c.l.b16 %v1576
    %v2311 = vunpack.c.h.b16 %v1576
    %v2312 = vunpack.c.l.b16 %v1577
    %v2313 = vunpack.c.h.b16 %v1577
    %v2314 = vunpack.c.l.b16 %v1578
    %v2315 = vunpack.c.h.b16 %v1578
    %v2316 = vunpack.c.l.b16 %v1579
    %v2317 = vunpack.c.h.b16 %v1579
    %v2318 = vunpack.c.l.b16 %v1580
    %v2319 = vunpack.c.h.b16 %v1580
    %v2320 = vunpack.c.l.b16 %v1581
    %v2321 = vunpack.c.h.b16 %v1581
    %v2322 = vunpack.c.l.b16 %v1582
    %v2323 = vunpack.c.h.b16 %v1582
    %v2324 = vunpack.c.l.b16 %v1583
    %v2325 = vunpack.c.h.b16 %v1583
    %v2326 = vunpack.c.l.b16 %v1584
    %v2327 = vunpack.c.h.b16 %v1584
    %v2328 = vunpack.c.l.b16 %v1585
    %v2329 = vunpack.c.h.b16 %v1585
    %v2330 = vunpack.c.l.b16 %v1586
    %v2331 = vunpack.c.h.b16 %v1586
    %v2332 = vunpack.c.l.b16 %v1587
    %v2333 = vunpack.c.h.b16 %v1587
    %v2334 = vunpack.c.l.b16 %v1588
    %v2335 = vunpack.c.h.b16 %v1588
    %v2336 = vunpack.c.l.b16 %v1589
    %v2337 = vunpack.c.h.b16 %v1589
    %v2338 = vunpack.c.l.b16 %v1590
    %v2339 = vunpack.c.h.b16 %v1590
    %v2340 = vunpack.c.l.b16 %v1591
    %v2341 = vunpack.c.h.b16 %v1591
    %v2342 = vunpack.c.l.b16 %v1592
    %v2343 = vunpack.c.h.b16 %v1592
    %v2344 = vunpack.c.l.b16 %v1593
    %v2345 = vunpack.c.h.b16 %v1593
    %v2346 = vunpack.c.l.b16 %v1594
    %v2347 = vunpack.c.h.b16 %v1594
    %v2348 = vunpack.c.l.b16 %v1595
    %v2349 = vunpack.c.h.b16 %v1595
    %v2350 = vunpack.c.l.b16 %v1596
    %v2351 = vunpack.c.h.b16 %v1596
    %v2352 = vunpack.c.l.b16 %v1597
    %v2353 = vunpack.c.h.b16 %v1597
    %v2354 = vunpack.c.l.b16 %v1598
    %v2355 = vunpack.c.h.b16 %v1598
    %v2356 = vunpack.c.l.b16 %v1599
    %v2357 = vunpack.c.h.b16 %v1599
    %v2358 = vunpack.c.l.b16 %v1600
    %v2359 = vunpack.c.h.b16 %v1600
    %v2360 = vunpack.c.l.b16 %v1601
    %v2361 = vunpack.c.h.b16 %v1601
    %v2362 = vunpack.c.l.b16 %v1602
    %v2363 = vunpack.c.h.b16 %v1602
    %v2364 = vunpack.c.l.b16 %v1603
    %v2365 = vunpack.c.h.b16 %v1603
    %v2366 = vunpack.c.l.b16 %v1604
    %v2367 = vunpack.c.h.b16 %v1604
    %v2368 = vunpack.c.l.b16 %v1605
    %v2369 = vunpack.c.h.b16 %v1605
    %v2370 = vunpack.c.l.b16 %v1606
    %v2371 = vunpack.c.h.b16 %v1606
    %v2372 = vunpack.c.l.b16 %v1607
    %v2373 = vunpack.c.h.b16 %v1607
    %v2374 = vunpack.c.l.b16 %v1608
    %v2375 = vunpack.c.h.b16 %v1608
    %v2376 = vunpack.c.l.b16 %v1609
    %v2377 = vunpack.c.h.b16 %v1609
    %v2378 = vunpack.c.l.b16 %v1610
    %v2379 = vunpack.c.h.b16 %v1610
    %v2380 = vunpack.c.l.b16 %v1611
    %v2381 = vunpack.c.h.b16 %v1611
    %v2382 = vunpack.c.l.b16 %v1612
    %v2383 = vunpack.c.h.b16 %v1612
    %v2384 = vunpack.c.l.b16 %v1613
    %v2385 = vunpack.c.h.b16 %v1613
    %v2386 = vunpack.c.l.b16 %v1614
    %v2387 = vunpack.c.h.b16 %v1614
    %v2388 = vunpack.c.l.b16 %v1615
    %v2389 = vunpack.c.h.b16 %v1615
    %v2390 = vunpack.c.l.b16 %v1616
    %v2391 = vunpack.c.h.b16 %v1616
    %v2392 = vunpack.c.l.b16 %v1617
    %v2393 = vunpack.c.h.b16 %v1617
    %v2394 = vunpack.c.l.b16 %v1618
    %v2395 = vunpack.c.h.b16 %v1618
    %v2396 = vunpack.c.l.b16 %v1619
    %v2397 = vunpack.c.h.b16 %v1619
    %v2398 = vunpack.c.l.b16 %v1620
    %v2399 = vunpack.c.h.b16 %v1620
    %v2400 = vunpack.c.l.b16 %v1621
    %v2401 = vunpack.c.h.b16 %v1621
    %v2402 = vunpack.c.l.b16 %v1622
    %v2403 = vunpack.c.h.b16 %v1622
    %v2404 = vunpack.c.l.b16 %v1623
    %v2405 = vunpack.c.h.b16 %v1623
    %v2406 = vunpack.c.l.b16 %v1624
    %v2407 = vunpack.c.h.b16 %v1624
    %v2408 = vunpack.c.l.b16 %v1625
    %v2409 = vunpack.c.h.b16 %v1625
    %v2410 = vunpack.c.l.b16 %v1626
    %v2411 = vunpack.c.h.b16 %v1626
    %v2412 = vunpack.c.l.b16 %v1627
    %v2413 = vunpack.c.h.b16 %v1627
    %v2414 = vunpack.c.l.b16 %v1628
    %v2415 = vunpack.c.h.b16 %v1628
    %v2416 = vunpack.c.l.b16 %v1629
    %v2417 = vunpack.c.h.b16 %v1629
    %v2418 = vunpack.c.l.b16 %v1630
    %v2419 = vunpack.c.h.b16 %v1630
    %v2420 = vunpack.c.l.b16 %v1631
    %v2421 = vunpack.c.h.b16 %v1631
    %v2422 = vpack.c.b16 %v1914, %v1910
    %v2423 = vpack.c.b16 %v1915, %v1911
    %v2424 = vpack.c.b16 %v1916, %v1912
    %v2425 = vpack.c.b16 %v1917, %v1913
    %v2426 = vpack.c.b16 %v1922, %v1918
    %v2427 = vpack.c.b16 %v1923, %v1919
    %v2428 = vpack.c.b16 %v1924, %v1920
    %v2429 = vpack.c.b16 %v1925, %v1921
    %v2430 = vpack.c.b16 %v1930, %v1926
    %v2431 = vpack.c.b16 %v1931, %v1927
    %v2432 = vpack.c.b16 %v1932, %v1928
    %v2433 = vpack.c.b16 %v1933, %v1929
    %v2434 = vpack.c.b16 %v1938, %v1934
    %v2435 = vpack.c.b16 %v1939, %v1935
    %v2436 = vpack.c.b16 %v1940, %v1936
    %v2437 = vpack.c.b16 %v1941, %v1937
    %v2438 = vpack.c.b16 %v1946, %v1942
    %v2439 = vpack.c.b16 %v1947, %v1943
    %v2440 = vpack.c.b16 %v1948, %v1944
    %v2441 = vpack.c.b16 %v1949, %v1945
    %v2442 = vpack.c.b16 %v1954, %v1950
    %v2443 = vpack.c.b16 %v1955, %v1951
    %v2444 = vpack.c.b16 %v1956, %v1952
    %v2445 = vpack.c.b16 %v1957, %v1953
    %v2446 = vpack.c.b16 %v1962, %v1958
    %v2447 = vpack.c.b16 %v1963, %v1959
    %v2448 = vpack.c.b16 %v1964, %v1960
    %v2449 = vpack.c.b16 %v1965, %v1961
    %v2450 = vpack.c.b16 %v1970, %v1966
    %v2451 = vpack.c.b16 %v1971, %v1967
    %v2452 = vpack.c.b16 %v1972, %v1968
    %v2453 = vpack.c.b16 %v1973, %v1969
    %v2454 = vpack.c.b16 %v1978, %v1974
    %v2455 = vpack.c.b16 %v1979, %v1975
    %v2456 = vpack.c.b16 %v1980, %v1976
    %v2457 = vpack.c.b16 %v1981, %v1977
    %v2458 = vpack.c.b16 %v1986, %v1982
    %v2459 = vpack.c.b16 %v1987, %v1983
    %v2460 = vpack.c.b16 %v1988, %v1984
    %v2461 = vpack.c.b16 %v1989, %v1985
    %v2462 = vpack.c.b16 %v1994, %v1990
    %v2463 = vpack.c.b16 %v1995, %v1991
    %v2464 = vpack.c.b16 %v1996, %v1992
    %v2465 = vpack.c.b16 %v1997, %v1993
    %v2466 = vpack.c.b16 %v2002, %v1998
    %v2467 = vpack.c.b16 %v2003, %v1999
    %v2468 = vpack.c.b16 %v2004, %v2000
    %v2469 = vpack.c.b16 %v2005, %v2001
    %v2470 = vpack.c.b16 %v2010, %v2006
    %v2471 = vpack.c.b16 %v2011, %v2007
    %v2472 = vpack.c.b16 %v2012, %v2008
    %v2473 = vpack.c.b16 %v2013, %v2009
    %v2474 = vpack.c.b16 %v2018, %v2014
    %v2475 = vpack.c.b16 %v2019, %v2015
    %v2476 = vpack.c.b16 %v2020, %v2016
    %v2477 = vpack.c.b16 %v2021, %v2017
    %v2478 = vpack.c.b16 %v2026, %v2022
    %v2479 = vpack.c.b16 %v2027, %v2023
    %v2480 = vpack.c.b16 %v2028, %v2024
    %v2481 = vpack.c.b16 %v2029, %v2025
    %v2482 = vpack.c.b16 %v2034, %v2030
    %v2483 = vpack.c.b16 %v2035, %v2031
    %v2484 = vpack.c.b16 %v2036, %v2032
    %v2485 = vpack.c.b16 %v2037, %v2033
    %v2486 = vpack.c.b16 %v2042, %v2038
    %v2487 = vpack.c.b16 %v2043, %v2039
    %v2488 = vpack.c.b16 %v2044, %v2040
    %v2489 = vpack.c.b16 %v2045, %v2041
    %v2490 = vpack.c.b16 %v2050, %v2046
    %v2491 = vpack.c.b16 %v2051, %v2047
    %v2492 = vpack.c.b16 %v2052, %v2048
    %v2493 = vpack.c.b16 %v2053, %v2049
    %v2494 = vpack.c.b16 %v2058, %v2054
    %v2495 = vpack.c.b16 %v2059, %v2055
    %v2496 = vpack.c.b16 %v2060, %v2056
    %v2497 = vpack.c.b16 %v2061, %v2057
    %v2498 = vpack.c.b16 %v2066, %v2062
    %v2499 = vpack.c.b16 %v2067, %v2063
    %v2500 = vpack.c.b16 %v2068, %v2064
    %v2501 = vpack.c.b16 %v2069, %v2065
    %v2502 = vpack.c.b16 %v2074, %v2070
    %v2503 = vpack.c.b16 %v2075, %v2071
    %v2504 = vpack.c.b16 %v2076, %v2072
    %v2505 = vpack.c.b16 %v2077, %v2073
    %v2506 = vpack.c.b16 %v2082, %v2078
    %v2507 = vpack.c.b16 %v2083, %v2079
    %v2508 = vpack.c.b16 %v2084, %v2080
    %v2509 = vpack.c.b16 %v2085, %v2081
    %v2510 = vpack.c.b16 %v2090, %v2086
    %v2511 = vpack.c.b16 %v2091, %v2087
    %v2512 = vpack.c.b16 %v2092, %v2088
    %v2513 = vpack.c.b16 %v2093, %v2089
    %v2514 = vpack.c.b16 %v2098, %v2094
    %v2515 = vpack.c.b16 %v2099, %v2095
    %v2516 = vpack.c.b16 %v2100, %v2096
    %v2517 = vpack.c.b16 %v2101, %v2097
    %v2518 = vpack.c.b16 %v2106, %v2102
    %v2519 = vpack.c.b16 %v2107, %v2103
    %v2520 = vpack.c.b16 %v2108, %v2104
    %v2521 = vpack.c.b16 %v2109, %v2105
    %v2522 = vpack.c.b16 %v2114, %v2110
    %v2523 = vpack.c.b16 %v2115, %v2111
    %v2524 = vpack.c.b16 %v2116, %v2112
    %v2525 = vpack.c.b16 %v2117, %v2113
    %v2526 = vpack.c.b16 %v2122, %v2118
    %v2527 = vpack.c.b16 %v2123, %v2119
    %v2528 = vpack.c.b16 %v2124, %v2120
    %v2529 = vpack.c.b16 %v2125, %v2121
    %v2530 = vpack.c.b16 %v2130, %v2126
    %v2531 = vpack.c.b16 %v2131, %v2127
    %v2532 = vpack.c.b16 %v2132, %v2128
    %v2533 = vpack.c.b16 %v2133, %v2129
    %v2534 = vpack.c.b16 %v2138, %v2134
    %v2535 = vpack.c.b16 %v2139, %v2135
    %v2536 = vpack.c.b16 %v2140, %v2136
    %v2537 = vpack.c.b16 %v2141, %v2137
    %v2538 = vpack.c.b16 %v2146, %v2142
    %v2539 = vpack.c.b16 %v2147, %v2143
    %v2540 = vpack.c.b16 %v2148, %v2144
    %v2541 = vpack.c.b16 %v2149, %v2145
    %v2542 = vpack.c.b16 %v2154, %v2150
    %v2543 = vpack.c.b16 %v2155, %v2151
    %v2544 = vpack.c.b16 %v2156, %v2152
    %v2545 = vpack.c.b16 %v2157, %v2153
    %v2546 = vpack.c.b16 %v2162, %v2158
    %v2547 = vpack.c.b16 %v2163, %v2159
    %v2548 = vpack.c.b16 %v2164, %v2160
    %v2549 = vpack.c.b16 %v2165, %v2161
    %v2550 = vpack.c.b16 %v2170, %v2166
    %v2551 = vpack.c.b16 %v2171, %v2167
    %v2552 = vpack.c.b16 %v2172, %v2168
    %v2553 = vpack.c.b16 %v2173, %v2169
    %v2554 = vpack.c.b16 %v2178, %v2174
    %v2555 = vpack.c.b16 %v2179, %v2175
    %v2556 = vpack.c.b16 %v2180, %v2176
    %v2557 = vpack.c.b16 %v2181, %v2177
    %v2558 = vpack.c.b16 %v2186, %v2182
    %v2559 = vpack.c.b16 %v2187, %v2183
    %v2560 = vpack.c.b16 %v2188, %v2184
    %v2561 = vpack.c.b16 %v2189, %v2185
    %v2562 = vpack.c.b16 %v2194, %v2190
    %v2563 = vpack.c.b16 %v2195, %v2191
    %v2564 = vpack.c.b16 %v2196, %v2192
    %v2565 = vpack.c.b16 %v2197, %v2193
    %v2566 = vpack.c.b16 %v2202, %v2198
    %v2567 = vpack.c.b16 %v2203, %v2199
    %v2568 = vpack.c.b16 %v2204, %v2200
    %v2569 = vpack.c.b16 %v2205, %v2201
    %v2570 = vpack.c.b16 %v2210, %v2206
    %v2571 = vpack.c.b16 %v2211, %v2207
    %v2572 = vpack.c.b16 %v2212, %v2208
    %v2573 = vpack.c.b16 %v2213, %v2209
    %v2574 = vpack.c.b16 %v2218, %v2214
    %v2575 = vpack.c.b16 %v2219, %v2215
    %v2576 = vpack.c.b16 %v2220, %v2216
    %v2577 = vpack.c.b16 %v2221, %v2217
    %v2578 = vpack.c.b16 %v2226, %v2222
    %v2579 = vpack.c.b16 %v2227, %v2223
    %v2580 = vpack.c.b16 %v2228, %v2224
    %v2581 = vpack.c.b16 %v2229, %v2225
    %v2582 = vpack.c.b16 %v2234, %v2230
    %v2583 = vpack.c.b16 %v2235, %v2231
    %v2584 = vpack.c.b16 %v2236, %v2232
    %v2585 = vpack.c.b16 %v2237, %v2233
    %v2586 = vpack.c.b16 %v2242, %v2238
    %v2587 = vpack.c.b16 %v2243, %v2239
    %v2588 = vpack.c.b16 %v2244, %v2240
    %v2589 = vpack.c.b16 %v2245, %v2241
    %v2590 = vpack.c.b16 %v2250, %v2246
    %v2591 = vpack.c.b16 %v2251, %v2247
    %v2592 = vpack.c.b16 %v2252, %v2248
    %v2593 = vpack.c.b16 %v2253, %v2249
    %v2594 = vpack.c.b16 %v2258, %v2254
    %v2595 = vpack.c.b16 %v2259, %v2255
    %v2596 = vpack.c.b16 %v2260, %v2256
    %v2597 = vpack.c.b16 %v2261, %v2257
    %v2598 = vpack.c.b16 %v2266, %v2262
    %v2599 = vpack.c.b16 %v2267, %v2263
    %v2600 = vpack.c.b16 %v2268, %v2264
    %v2601 = vpack.c.b16 %v2269, %v2265
    %v2602 = vpack.c.b16 %v2274, %v2270
    %v2603 = vpack.c.b16 %v2275, %v2271
    %v2604 = vpack.c.b16 %v2276, %v2272
    %v2605 = vpack.c.b16 %v2277, %v2273
    %v2606 = vpack.c.b16 %v2282, %v2278
    %v2607 = vpack.c.b16 %v2283, %v2279
    %v2608 = vpack.c.b16 %v2284, %v2280
    %v2609 = vpack.c.b16 %v2285, %v2281
    %v2610 = vpack.c.b16 %v2290, %v2286
    %v2611 = vpack.c.b16 %v2291, %v2287
    %v2612 = vpack.c.b16 %v2292, %v2288
    %v2613 = vpack.c.b16 %v2293, %v2289
    %v2614 = vpack.c.b16 %v2298, %v2294
    %v2615 = vpack.c.b16 %v2299, %v2295
    %v2616 = vpack.c.b16 %v2300, %v2296
    %v2617 = vpack.c.b16 %v2301, %v2297
    %v2618 = vpack.c.b16 %v2306, %v2302
    %v2619 = vpack.c.b16 %v2307, %v2303
    %v2620 = vpack.c.b16 %v2308, %v2304
    %v2621 = vpack.c.b16 %v2309, %v2305
    %v2622 = vpack.c.b16 %v2314, %v2310
    %v2623 = vpack.c.b16 %v2315, %v2311
    %v2624 = vpack.c.b16 %v2316, %v2312
    %v2625 = vpack.c.b16 %v2317, %v2313
    %v2626 = vpack.c.b16 %v2322, %v2318
    %v2627 = vpack.c.b16 %v2323, %v2319
    %v2628 = vpack.c.b16 %v2324, %v2320
    %v2629 = vpack.c.b16 %v2325, %v2321
    %v2630 = vpack.c.b16 %v2330, %v2326
    %v2631 = vpack.c.b16 %v2331, %v2327
    %v2632 = vpack.c.b16 %v2332, %v2328
    %v2633 = vpack.c.b16 %v2333, %v2329
    %v2634 = vpack.c.b16 %v2338, %v2334
    %v2635 = vpack.c.b16 %v2339, %v2335
    %v2636 = vpack.c.b16 %v2340, %v2336
    %v2637 = vpack.c.b16 %v2341, %v2337
    %v2638 = vpack.c.b16 %v2346, %v2342
    %v2639 = vpack.c.b16 %v2347, %v2343
    %v2640 = vpack.c.b16 %v2348, %v2344
    %v2641 = vpack.c.b16 %v2349, %v2345
    %v2642 = vpack.c.b16 %v2354, %v2350
    %v2643 = vpack.c.b16 %v2355, %v2351
    %v2644 = vpack.c.b16 %v2356, %v2352
    %v2645 = vpack.c.b16 %v2357, %v2353
    %v2646 = vpack.c.b16 %v2362, %v2358
    %v2647 = vpack.c.b16 %v2363, %v2359
    %v2648 = vpack.c.b16 %v2364, %v2360
    %v2649 = vpack.c.b16 %v2365, %v2361
    %v2650 = vpack.c.b16 %v2370, %v2366
    %v2651 = vpack.c.b16 %v2371, %v2367
    %v2652 = vpack.c.b16 %v2372, %v2368
    %v2653 = vpack.c.b16 %v2373, %v2369
    %v2654 = vpack.c.b16 %v2378, %v2374
    %v2655 = vpack.c.b16 %v2379, %v2375
    %v2656 = vpack.c.b16 %v2380, %v2376
    %v2657 = vpack.c.b16 %v2381, %v2377
    %v2658 = vpack.c.b16 %v2386, %v2382
    %v2659 = vpack.c.b16 %v2387, %v2383
    %v2660 = vpack.c.b16 %v2388, %v2384
    %v2661 = vpack.c.b16 %v2389, %v2385
    %v2662 = vpack.c.b16 %v2394, %v2390
    %v2663 = vpack.c.b16 %v2395, %v2391
    %v2664 = vpack.c.b16 %v2396, %v2392
    %v2665 = vpack.c.b16 %v2397, %v2393
    %v2666 = vpack.c.b16 %v2402, %v2398
    %v2667 = vpack.c.b16 %v2403, %v2399
    %v2668 = vpack.c.b16 %v2404, %v2400
    %v2669 = vpack.c.b16 %v2405, %v2401
    %v2670 = vpack.c.b16 %v2410, %v2406
    %v2671 = vpack.c.b16 %v2411, %v2407
    %v2672 = vpack.c.b16 %v2412, %v2408
    %v2673 = vpack.c.b16 %v2413, %v2409
    %v2674 = vpack.c.b16 %v2418, %v2414
    %v2675 = vpack.c.b16 %v2419, %v2415
    %v2676 = vpack.c.b16 %v2420, %v2416
    %v2677 = vpack.c.b16 %v2421, %v2417
    %2934 = vmatprep.subr.bf16.mxu0 %v2423
    %2935 = vmatpush1.bf16.msra.mxu0 %v2422
    %2936 = vmatprep.subr.bf16.mxu0 %v2427
    %2937 = vmatpush1.bf16.msra.mxu0 %v2426
    %2938 = vmatprep.subr.bf16.mxu0 %v2431
    %2939 = vmatpush1.bf16.msra.mxu0 %v2430
    %2940 = vmatprep.subr.bf16.mxu0 %v2435
    %2941 = vmatpush1.bf16.msra.mxu0 %v2434
    %2942 = vmatprep.subr.bf16.mxu0 %v2439
    %2943 = vmatpush1.bf16.msra.mxu0 %v2438
    %2944 = vmatprep.subr.bf16.mxu0 %v2443
    %2945 = vmatpush1.bf16.msra.mxu0 %v2442
    %2946 = vmatprep.subr.bf16.mxu0 %v2447
    %2947 = vmatpush1.bf16.msra.mxu0 %v2446
    %2948 = vmatprep.subr.bf16.mxu0 %v2451
    %2949 = vmatpush1.bf16.msra.mxu0 %v2450
    %2950 = vmatprep.subr.bf16.mxu0 %v2455
    %2951 = vmatpush1.bf16.msra.mxu0 %v2454
    %2952 = vmatprep.subr.bf16.mxu0 %v2459
    %2953 = vmatpush1.bf16.msra.mxu0 %v2458
    %2954 = vmatprep.subr.bf16.mxu0 %v2463
    %2955 = vmatpush1.bf16.msra.mxu0 %v2462
    %2956 = vmatprep.subr.bf16.mxu0 %v2467
    %2957 = vmatpush1.bf16.msra.mxu0 %v2466
    %2958 = vmatprep.subr.bf16.mxu0 %v2471
    %2959 = vmatpush1.bf16.msra.mxu0 %v2470
    %2960 = vmatprep.subr.bf16.mxu0 %v2475
    %2961 = vmatpush1.bf16.msra.mxu0 %v2474
    %2962 = vmatprep.subr.bf16.mxu0 %v2479
    %2963 = vmatpush1.bf16.msra.mxu0 %v2478
    %2964 = vmatprep.subr.bf16.mxu0 %v2483
    %2965 = vmatpush1.bf16.msra.mxu0 %v2482
    %2966 = vmatprep.mubr.bf16.mxu0 %v1369
    %2967 = vmatmul.mubr.bf16.gmra.mrb[0].mxu0 %v1368
    %v2968 = vpop.f32.mrb[0].mxu0
    %v2969 = vadd.f32 %v1637, %v2968
    %v2970 = vpop.f32.mrb[0].mxu0
    %v2971 = vadd.f32 %v1641, %v2970
    %v2972 = vpop.f32.mrb[0].mxu0
    %v2973 = vpop.f32.mrb[0].mxu0
    %2974 = vdwg.mxu0
    %2975 = vmatprep.subr.bf16.mxu0 %v2487
    %2976 = vmatpush1.bf16.msra.mxu0 %v2486
    %2977 = vmatprep.subr.bf16.mxu0 %v2491
    %2978 = vmatpush1.bf16.msra.mxu0 %v2490
    %2979 = vmatprep.subr.bf16.mxu0 %v2495
    %2980 = vmatpush1.bf16.msra.mxu0 %v2494
    %2981 = vmatprep.subr.bf16.mxu0 %v2499
    %2982 = vmatpush1.bf16.msra.mxu0 %v2498
    %2983 = vmatprep.subr.bf16.mxu0 %v2503
    %2984 = vmatpush1.bf16.msra.mxu0 %v2502
    %2985 = vmatprep.subr.bf16.mxu0 %v2507
    %2986 = vmatpush1.bf16.msra.mxu0 %v2506
    %2987 = vmatprep.subr.bf16.mxu0 %v2511
    %2988 = vmatpush1.bf16.msra.mxu0 %v2510
    %2989 = vmatprep.subr.bf16.mxu0 %v2515
    %2990 = vmatpush1.bf16.msra.mxu0 %v2514
    %2991 = vmatprep.subr.bf16.mxu0 %v2519
    %2992 = vmatpush1.bf16.msra.mxu0 %v2518
    %2993 = vmatprep.subr.bf16.mxu0 %v2523
    %2994 = vmatpush1.bf16.msra.mxu0 %v2522
    %2995 = vmatprep.subr.bf16.mxu0 %v2527
    %2996 = vmatpush1.bf16.msra.mxu0 %v2526
    %2997 = vmatprep.subr.bf16.mxu0 %v2531
    %2998 = vmatpush1.bf16.msra.mxu0 %v2530
    %2999 = vmatprep.subr.bf16.mxu0 %v2535
    %3000 = vmatpush1.bf16.msra.mxu0 %v2534
    %3001 = vmatprep.subr.bf16.mxu0 %v2539
    %3002 = vmatpush1.bf16.msra.mxu0 %v2538
    %3003 = vmatprep.subr.bf16.mxu0 %v2543
    %3004 = vmatpush1.bf16.msra.mxu0 %v2542
    %3005 = vmatprep.subr.bf16.mxu0 %v2547
    %3006 = vmatpush1.bf16.msra.mxu0 %v2546
    %3007 = vmatprep.mubr.bf16.mxu0 %v1371
    %3008 = vmatmul.mubr.bf16.gmra.mrb[0].mxu0 %v1370
    %v3009 = vpop.f32.mrb[0].mxu0
    %v3010 = vadd.f32 %v2969, %v3009
    %v3011 = vpop.f32.mrb[0].mxu0
    %v3012 = vadd.f32 %v2971, %v3011
    %v3013 = vpop.f32.mrb[0].mxu0
    %v3014 = vpop.f32.mrb[0].mxu0
    %3015 = vdwg.mxu0
    %3016 = vmatprep.subr.bf16.mxu0 %v2551
    %3017 = vmatpush1.bf16.msra.mxu0 %v2550
    %3018 = vmatprep.subr.bf16.mxu0 %v2555
    %3019 = vmatpush1.bf16.msra.mxu0 %v2554
    %3020 = vmatprep.subr.bf16.mxu0 %v2559
    %3021 = vmatpush1.bf16.msra.mxu0 %v2558
    %3022 = vmatprep.subr.bf16.mxu0 %v2563
    %3023 = vmatpush1.bf16.msra.mxu0 %v2562
    %3024 = vmatprep.subr.bf16.mxu0 %v2567
    %3025 = vmatpush1.bf16.msra.mxu0 %v2566
    %3026 = vmatprep.subr.bf16.mxu0 %v2571
    %3027 = vmatpush1.bf16.msra.mxu0 %v2570
    %3028 = vmatprep.subr.bf16.mxu0 %v2575
    %3029 = vmatpush1.bf16.msra.mxu0 %v2574
    %3030 = vmatprep.subr.bf16.mxu0 %v2579
    %3031 = vmatpush1.bf16.msra.mxu0 %v2578
    %3032 = vmatprep.subr.bf16.mxu0 %v2583
    %3033 = vmatpush1.bf16.msra.mxu0 %v2582
    %3034 = vmatprep.subr.bf16.mxu0 %v2587
    %3035 = vmatpush1.bf16.msra.mxu0 %v2586
    %3036 = vmatprep.subr.bf16.mxu0 %v2591
    %3037 = vmatpush1.bf16.msra.mxu0 %v2590
    %3038 = vmatprep.subr.bf16.mxu0 %v2595
    %3039 = vmatpush1.bf16.msra.mxu0 %v2594
    %3040 = vmatprep.subr.bf16.mxu0 %v2599
    %3041 = vmatpush1.bf16.msra.mxu0 %v2598
    %3042 = vmatprep.subr.bf16.mxu0 %v2603
    %3043 = vmatpush1.bf16.msra.mxu0 %v2602
    %3044 = vmatprep.subr.bf16.mxu0 %v2607
    %3045 = vmatpush1.bf16.msra.mxu0 %v2606
    %3046 = vmatprep.subr.bf16.mxu0 %v2611
    %3047 = vmatpush1.bf16.msra.mxu0 %v2610
    %3048 = vmatprep.mubr.bf16.mxu0 %v1373
    %3049 = vmatmul.mubr.bf16.gmra.mrb[0].mxu0 %v1372
    %v3050 = vpop.f32.mrb[0].mxu0
    %v3051 = vadd.f32 %v3010, %v3050
    %v3052 = vpop.f32.mrb[0].mxu0
    %v3053 = vadd.f32 %v3012, %v3052
    %v3054 = vpop.f32.mrb[0].mxu0
    %v3055 = vpop.f32.mrb[0].mxu0
    %3056 = vdwg.mxu0
    %3057 = vmatprep.subr.bf16.mxu0 %v2615
    %3058 = vmatpush1.bf16.msra.mxu0 %v2614
    %3059 = vmatprep.subr.bf16.mxu0 %v2619
    %3060 = vmatpush1.bf16.msra.mxu0 %v2618
    %3061 = vmatprep.subr.bf16.mxu0 %v2623
    %3062 = vmatpush1.bf16.msra.mxu0 %v2622
    %3063 = vmatprep.subr.bf16.mxu0 %v2627
    %3064 = vmatpush1.bf16.msra.mxu0 %v2626
    %3065 = vmatprep.subr.bf16.mxu0 %v2631
    %3066 = vmatpush1.bf16.msra.mxu0 %v2630
    %3067 = vmatprep.subr.bf16.mxu0 %v2635
    %3068 = vmatpush1.bf16.msra.mxu0 %v2634
    %3069 = vmatprep.subr.bf16.mxu0 %v2639
    %3070 = vmatpush1.bf16.msra.mxu0 %v2638
    %3071 = vmatprep.subr.bf16.mxu0 %v2643
    %3072 = vmatpush1.bf16.msra.mxu0 %v2642
    %3073 = vmatprep.subr.bf16.mxu0 %v2647
    %3074 = vmatpush1.bf16.msra.mxu0 %v2646
    %3075 = vmatprep.subr.bf16.mxu0 %v2651
    %3076 = vmatpush1.bf16.msra.mxu0 %v2650
    %3077 = vmatprep.subr.bf16.mxu0 %v2655
    %3078 = vmatpush1.bf16.msra.mxu0 %v2654
    %3079 = vmatprep.subr.bf16.mxu0 %v2659
    %3080 = vmatpush1.bf16.msra.mxu0 %v2658
    %3081 = vmatprep.subr.bf16.mxu0 %v2663
    %3082 = vmatpush1.bf16.msra.mxu0 %v2662
    %3083 = vmatprep.subr.bf16.mxu0 %v2667
    %3084 = vmatpush1.bf16.msra.mxu0 %v2666
    %3085 = vmatprep.subr.bf16.mxu0 %v2671
    %3086 = vmatpush1.bf16.msra.mxu0 %v2670
    %3087 = vmatprep.subr.bf16.mxu0 %v2675
    %3088 = vmatpush1.bf16.msra.mxu0 %v2674
    %3089 = vmatprep.mubr.bf16.mxu0 %v1375
    %3090 = vmatmul.mubr.bf16.gmra.mrb[0].mxu0 %v1374
    %v3091 = vpop.f32.mrb[0].mxu0
    %v3092 = vadd.f32 %v3051, %v3091
    %v3093 = vpop.f32.mrb[0].mxu0
    %v3094 = vadd.f32 %v3053, %v3093
    %v3095 = vpop.f32.mrb[0].mxu0
    %v3096 = vpop.f32.mrb[0].mxu0
    %3097 = vdwg.mxu0
    %3098 = vmatprep.subr.bf16.mxu0 %v2425
    %3099 = vmatpush1.bf16.msra.mxu0 %v2424
    %3100 = vmatprep.subr.bf16.mxu0 %v2429
    %3101 = vmatpush1.bf16.msra.mxu0 %v2428
    %3102 = vmatprep.subr.bf16.mxu0 %v2433
    %3103 = vmatpush1.bf16.msra.mxu0 %v2432
    %3104 = vmatprep.subr.bf16.mxu0 %v2437
    %3105 = vmatpush1.bf16.msra.mxu0 %v2436
    %3106 = vmatprep.subr.bf16.mxu0 %v2441
    %3107 = vmatpush1.bf16.msra.mxu0 %v2440
    %3108 = vmatprep.subr.bf16.mxu0 %v2445
    %3109 = vmatpush1.bf16.msra.mxu0 %v2444
    %3110 = vmatprep.subr.bf16.mxu0 %v2449
    %3111 = vmatpush1.bf16.msra.mxu0 %v2448
    %3112 = vmatprep.subr.bf16.mxu0 %v2453
    %3113 = vmatpush1.bf16.msra.mxu0 %v2452
    %3114 = vmatprep.subr.bf16.mxu0 %v2457
    %3115 = vmatpush1.bf16.msra.mxu0 %v2456
    %3116 = vmatprep.subr.bf16.mxu0 %v2461
    %3117 = vmatpush1.bf16.msra.mxu0 %v2460
    %3118 = vmatprep.subr.bf16.mxu0 %v2465
    %3119 = vmatpush1.bf16.msra.mxu0 %v2464
    %3120 = vmatprep.subr.bf16.mxu0 %v2469
    %3121 = vmatpush1.bf16.msra.mxu0 %v2468
    %3122 = vmatprep.subr.bf16.mxu0 %v2473
    %3123 = vmatpush1.bf16.msra.mxu0 %v2472
    %3124 = vmatprep.subr.bf16.mxu0 %v2477
    %3125 = vmatpush1.bf16.msra.mxu0 %v2476
    %3126 = vmatprep.subr.bf16.mxu0 %v2481
    %3127 = vmatpush1.bf16.msra.mxu0 %v2480
    %3128 = vmatprep.subr.bf16.mxu0 %v2485
    %3129 = vmatpush1.bf16.msra.mxu0 %v2484
    %3130 = vmatprep.mubr.bf16.mxu0 %v1369
    %3131 = vmatmul.mubr.bf16.gmra.mrb[0].mxu0 %v1368
    %v3132 = vpop.f32.mrb[0].mxu0
    %v3133 = vadd.f32 %v1645, %v3132
    %v3134 = vpop.f32.mrb[0].mxu0
    %v3135 = vadd.f32 %v1649, %v3134
    %v3136 = vpop.f32.mrb[0].mxu0
    %v3137 = vpop.f32.mrb[0].mxu0
    %3138 = vdwg.mxu0
    %3139 = vmatprep.subr.bf16.mxu0 %v2489
    %3140 = vmatpush1.bf16.msra.mxu0 %v2488
    %3141 = vmatprep.subr.bf16.mxu0 %v2493
    %3142 = vmatpush1.bf16.msra.mxu0 %v2492
    %3143 = vmatprep.subr.bf16.mxu0 %v2497
    %3144 = vmatpush1.bf16.msra.mxu0 %v2496
    %3145 = vmatprep.subr.bf16.mxu0 %v2501
    %3146 = vmatpush1.bf16.msra.mxu0 %v2500
    %3147 = vmatprep.subr.bf16.mxu0 %v2505
    %3148 = vmatpush1.bf16.msra.mxu0 %v2504
    %3149 = vmatprep.subr.bf16.mxu0 %v2509
    %3150 = vmatpush1.bf16.msra.mxu0 %v2508
    %3151 = vmatprep.subr.bf16.mxu0 %v2513
    %3152 = vmatpush1.bf16.msra.mxu0 %v2512
    %3153 = vmatprep.subr.bf16.mxu0 %v2517
    %3154 = vmatpush1.bf16.msra.mxu0 %v2516
    %3155 = vmatprep.subr.bf16.mxu0 %v2521
    %3156 = vmatpush1.bf16.msra.mxu0 %v2520
    %3157 = vmatprep.subr.bf16.mxu0 %v2525
    %3158 = vmatpush1.bf16.msra.mxu0 %v2524
    %3159 = vmatprep.subr.bf16.mxu0 %v2529
    %3160 = vmatpush1.bf16.msra.mxu0 %v2528
    %3161 = vmatprep.subr.bf16.mxu0 %v2533
    %3162 = vmatpush1.bf16.msra.mxu0 %v2532
    %3163 = vmatprep.subr.bf16.mxu0 %v2537
    %3164 = vmatpush1.bf16.msra.mxu0 %v2536
    %3165 = vmatprep.subr.bf16.mxu0 %v2541
    %3166 = vmatpush1.bf16.msra.mxu0 %v2540
    %3167 = vmatprep.subr.bf16.mxu0 %v2545
    %3168 = vmatpush1.bf16.msra.mxu0 %v2544
    %3169 = vmatprep.subr.bf16.mxu0 %v2549
    %3170 = vmatpush1.bf16.msra.mxu0 %v2548
    %3171 = vmatprep.mubr.bf16.mxu0 %v1371
    %3172 = vmatmul.mubr.bf16.gmra.mrb[0].mxu0 %v1370
    %v3173 = vpop.f32.mrb[0].mxu0
    %v3174 = vadd.f32 %v3133, %v3173
    %v3175 = vpop.f32.mrb[0].mxu0
    %v3176 = vadd.f32 %v3135, %v3175
    %v3177 = vpop.f32.mrb[0].mxu0
    %v3178 = vpop.f32.mrb[0].mxu0
    %3179 = vdwg.mxu0
    %3180 = vmatprep.subr.bf16.mxu0 %v2553
    %3181 = vmatpush1.bf16.msra.mxu0 %v2552
    %3182 = vmatprep.subr.bf16.mxu0 %v2557
    %3183 = vmatpush1.bf16.msra.mxu0 %v2556
    %3184 = vmatprep.subr.bf16.mxu0 %v2561
    %3185 = vmatpush1.bf16.msra.mxu0 %v2560
    %3186 = vmatprep.subr.bf16.mxu0 %v2565
    %3187 = vmatpush1.bf16.msra.mxu0 %v2564
    %3188 = vmatprep.subr.bf16.mxu0 %v2569
    %3189 = vmatpush1.bf16.msra.mxu0 %v2568
    %3190 = vmatprep.subr.bf16.mxu0 %v2573
    %3191 = vmatpush1.bf16.msra.mxu0 %v2572
    %3192 = vmatprep.subr.bf16.mxu0 %v2577
    %3193 = vmatpush1.bf16.msra.mxu0 %v2576
    %3194 = vmatprep.subr.bf16.mxu0 %v2581
    %3195 = vmatpush1.bf16.msra.mxu0 %v2580
    %3196 = vmatprep.subr.bf16.mxu0 %v2585
    %3197 = vmatpush1.bf16.msra.mxu0 %v2584
    %3198 = vmatprep.subr.bf16.mxu0 %v2589
    %3199 = vmatpush1.bf16.msra.mxu0 %v2588
    %3200 = vmatprep.subr.bf16.mxu0 %v2593
    %3201 = vmatpush1.bf16.msra.mxu0 %v2592
    %3202 = vmatprep.subr.bf16.mxu0 %v2597
    %3203 = vmatpush1.bf16.msra.mxu0 %v2596
    %3204 = vmatprep.subr.bf16.mxu0 %v2601
    %3205 = vmatpush1.bf16.msra.mxu0 %v2600
    %3206 = vmatprep.subr.bf16.mxu0 %v2605
    %3207 = vmatpush1.bf16.msra.mxu0 %v2604
    %3208 = vmatprep.subr.bf16.mxu0 %v2609
    %3209 = vmatpush1.bf16.msra.mxu0 %v2608
    %3210 = vmatprep.subr.bf16.mxu0 %v2613
    %3211 = vmatpush1.bf16.msra.mxu0 %v2612
    %3212 = vmatprep.mubr.bf16.mxu0 %v1373
    %3213 = vmatmul.mubr.bf16.gmra.mrb[0].mxu0 %v1372
    %v3214 = vpop.f32.mrb[0].mxu0
    %v3215 = vadd.f32 %v3174, %v3214
    %v3216 = vpop.f32.mrb[0].mxu0
    %v3217 = vadd.f32 %v3176, %v3216
    %v3218 = vpop.f32.mrb[0].mxu0
    %v3219 = vpop.f32.mrb[0].mxu0
    %3220 = vdwg.mxu0
    %3221 = vmatprep.subr.bf16.mxu0 %v2617
    %3222 = vmatpush1.bf16.msra.mxu0 %v2616
    %3223 = vmatprep.subr.bf16.mxu0 %v2621
    %3224 = vmatpush1.bf16.msra.mxu0 %v2620
    %3225 = vmatprep.subr.bf16.mxu0 %v2625
    %3226 = vmatpush1.bf16.msra.mxu0 %v2624
    %3227 = vmatprep.subr.bf16.mxu0 %v2629
    %3228 = vmatpush1.bf16.msra.mxu0 %v2628
    %3229 = vmatprep.subr.bf16.mxu0 %v2633
    %3230 = vmatpush1.bf16.msra.mxu0 %v2632
    %3231 = vmatprep.subr.bf16.mxu0 %v2637
    %3232 = vmatpush1.bf16.msra.mxu0 %v2636
    %3233 = vmatprep.subr.bf16.mxu0 %v2641
    %3234 = vmatpush1.bf16.msra.mxu0 %v2640
    %3235 = vmatprep.subr.bf16.mxu0 %v2645
    %3236 = vmatpush1.bf16.msra.mxu0 %v2644
    %3237 = vmatprep.subr.bf16.mxu0 %v2649
    %3238 = vmatpush1.bf16.msra.mxu0 %v2648
    %3239 = vmatprep.subr.bf16.mxu0 %v2653
    %3240 = vmatpush1.bf16.msra.mxu0 %v2652
    %3241 = vmatprep.subr.bf16.mxu0 %v2657
    %3242 = vmatpush1.bf16.msra.mxu0 %v2656
    %3243 = vmatprep.subr.bf16.mxu0 %v2661
    %3244 = vmatpush1.bf16.msra.mxu0 %v2660
    %3245 = vmatprep.subr.bf16.mxu0 %v2665
    %3246 = vmatpush1.bf16.msra.mxu0 %v2664
    %3247 = vmatprep.subr.bf16.mxu0 %v2669
    %3248 = vmatpush1.bf16.msra.mxu0 %v2668
    %3249 = vmatprep.subr.bf16.mxu0 %v2673
    %3250 = vmatpush1.bf16.msra.mxu0 %v2672
    %3251 = vmatprep.subr.bf16.mxu0 %v2677
    %3252 = vmatpush1.bf16.msra.mxu0 %v2676
    %3253 = vmatprep.mubr.bf16.mxu0 %v1375
    %3254 = vmatmul.mubr.bf16.gmra.mrb[0].mxu0 %v1374
    %v3255 = vpop.f32.mrb[0].mxu0
    %v3256 = vadd.f32 %v3215, %v3255
    %v3257 = vpop.f32.mrb[0].mxu0
    %v3258 = vadd.f32 %v3217, %v3257
    %v3259 = vpop.f32.mrb[0].mxu0
    %v3260 = vpop.f32.mrb[0].mxu0
    %3261 = vdwg.mxu0
    %v3262 = vmax.f32 %v3092, 0.0
    %v3263 = vmax.f32 %v3094, 0.0
    %v3264 = vmax.f32 %v3256, 0.0
    %v3265 = vmax.f32 %v3258, 0.0
    %v3266 = vpack.c.bf16 %v3262, %v3262
    %v3267 = vpack.c.bf16 %v3263, %v3263
    %v3268 = vpack.c.bf16 %v3264, %v3264
    %v3269 = vpack.c.bf16 %v3265, %v3265
    %v3270 = vld [vmem:[%s9] sm:$0xff]
    %v3271 = vld [vmem:[%s9 + $0x8] sm:$0xff]
    %v3272 = vld [vmem:[%s9 + $0x10] sm:$0xff]
    %v3273 = vld [vmem:[%s9 + $0x18] sm:$0xff]
    %v3274 = vld [vmem:[%s9 + $0x20] sm:$0xff]
    %v3275 = vld [vmem:[%s9 + $0x28] sm:$0xff]
    %v3276 = vld [vmem:[%s9 + $0x30] sm:$0xff]
    %v3277 = vld [vmem:[%s9 + $0x38] sm:$0xff]
    %v3278 = vld [vmem:[%s9 + $0x40] sm:$0xff]
    %v3279 = vld [vmem:[%s9 + $0x48] sm:$0xff]
    %v3280 = vld [vmem:[%s9 + $0x50] sm:$0xff]
    %v3281 = vld [vmem:[%s9 + $0x58] sm:$0xff]
    %v3282 = vld [vmem:[%s9 + $0x60] sm:$0xff]
    %v3283 = vld [vmem:[%s9 + $0x68] sm:$0xff]
    %v3284 = vld [vmem:[%s9 + $0x70] sm:$0xff]
    %v3285 = vld [vmem:[%s9 + $0x78] sm:$0xff]
    %v3286 = vld [vmem:[%s9 + $0x80] sm:$0xff]
    %v3287 = vld [vmem:[%s9 + $0x88] sm:$0xff]
    %v3288 = vld [vmem:[%s9 + $0x90] sm:$0xff]
    %v3289 = vld [vmem:[%s9 + $0x98] sm:$0xff]
    %v3290 = vld [vmem:[%s9 + $0xa0] sm:$0xff]
    %v3291 = vld [vmem:[%s9 + $0xa8] sm:$0xff]
    %v3292 = vld [vmem:[%s9 + $0xb0] sm:$0xff]
    %v3293 = vld [vmem:[%s9 + $0xb8] sm:$0xff]
    %v3294 = vld [vmem:[%s9 + $0xc0] sm:$0xff]
    %v3295 = vld [vmem:[%s9 + $0xc8] sm:$0xff]
    %v3296 = vld [vmem:[%s9 + $0xd0] sm:$0xff]
    %v3297 = vld [vmem:[%s9 + $0xd8] sm:$0xff]
    %v3298 = vld [vmem:[%s9 + $0xe0] sm:$0xff]
    %v3299 = vld [vmem:[%s9 + $0xe8] sm:$0xff]
    %v3300 = vld [vmem:[%s9 + $0xf0] sm:$0xff]
    %v3301 = vld [vmem:[%s9 + $0xf8] sm:$0xff]
    %v3302 = vld [vmem:[%s9 + $0x100] sm:$0xff]
    %v3303 = vld [vmem:[%s9 + $0x108] sm:$0xff]
    %v3304 = vld [vmem:[%s9 + $0x110] sm:$0xff]
    %v3305 = vld [vmem:[%s9 + $0x118] sm:$0xff]
    %v3306 = vld [vmem:[%s9 + $0x120] sm:$0xff]
    %v3307 = vld [vmem:[%s9 + $0x128] sm:$0xff]
    %v3308 = vld [vmem:[%s9 + $0x130] sm:$0xff]
    %v3309 = vld [vmem:[%s9 + $0x138] sm:$0xff]
    %v3310 = vld [vmem:[%s9 + $0x140] sm:$0xff]
    %v3311 = vld [vmem:[%s9 + $0x148] sm:$0xff]
    %v3312 = vld [vmem:[%s9 + $0x150] sm:$0xff]
    %v3313 = vld [vmem:[%s9 + $0x158] sm:$0xff]
    %v3314 = vld [vmem:[%s9 + $0x160] sm:$0xff]
    %v3315 = vld [vmem:[%s9 + $0x168] sm:$0xff]
    %v3316 = vld [vmem:[%s9 + $0x170] sm:$0xff]
    %v3317 = vld [vmem:[%s9 + $0x178] sm:$0xff]
    %v3318 = vld [vmem:[%s9 + $0x180] sm:$0xff]
    %v3319 = vld [vmem:[%s9 + $0x188] sm:$0xff]
    %v3320 = vld [vmem:[%s9 + $0x190] sm:$0xff]
    %v3321 = vld [vmem:[%s9 + $0x198] sm:$0xff]
    %v3322 = vld [vmem:[%s9 + $0x1a0] sm:$0xff]
    %v3323 = vld [vmem:[%s9 + $0x1a8] sm:$0xff]
    %v3324 = vld [vmem:[%s9 + $0x1b0] sm:$0xff]
    %v3325 = vld [vmem:[%s9 + $0x1b8] sm:$0xff]
    %v3326 = vld [vmem:[%s9 + $0x1c0] sm:$0xff]
    %v3327 = vld [vmem:[%s9 + $0x1c8] sm:$0xff]
    %v3328 = vld [vmem:[%s9 + $0x1d0] sm:$0xff]
    %v3329 = vld [vmem:[%s9 + $0x1d8] sm:$0xff]
    %v3330 = vld [vmem:[%s9 + $0x1e0] sm:$0xff]
    %v3331 = vld [vmem:[%s9 + $0x1e8] sm:$0xff]
    %v3332 = vld [vmem:[%s9 + $0x1f0] sm:$0xff]
    %v3333 = vld [vmem:[%s9 + $0x1f8] sm:$0xff]
    %v3334 = vld [vmem:[%s10] sm:$0x3]
    %v3336 = vlaneseq
    %v3337 = vshrl.u32 %v3336, 7
    %v3338 = vsub.s32 0, %v3337
    %v3339 = vrot.slane %v3334, %v3338
    %v3340 = vlaneseq
    %v3341 = vshrl.u32 %v3340, 7
    %v3342 = vsub.s32 1, %v3341
    %v3343 = vrot.slane %v3334, %v3342
    %v3410 = vunpack.c.l.b16 %v3270
    %v3411 = vunpack.c.h.b16 %v3270
    %v3412 = vunpack.c.l.b16 %v3271
    %v3413 = vunpack.c.h.b16 %v3271
    %v3414 = vunpack.c.l.b16 %v3272
    %v3415 = vunpack.c.h.b16 %v3272
    %v3416 = vunpack.c.l.b16 %v3273
    %v3417 = vunpack.c.h.b16 %v3273
    %v3418 = vunpack.c.l.b16 %v3274
    %v3419 = vunpack.c.h.b16 %v3274
    %v3420 = vunpack.c.l.b16 %v3275
    %v3421 = vunpack.c.h.b16 %v3275
    %v3422 = vunpack.c.l.b16 %v3276
    %v3423 = vunpack.c.h.b16 %v3276
    %v3424 = vunpack.c.l.b16 %v3277
    %v3425 = vunpack.c.h.b16 %v3277
    %v3426 = vunpack.c.l.b16 %v3278
    %v3427 = vunpack.c.h.b16 %v3278
    %v3428 = vunpack.c.l.b16 %v3279
    %v3429 = vunpack.c.h.b16 %v3279
    %v3430 = vunpack.c.l.b16 %v3280
    %v3431 = vunpack.c.h.b16 %v3280
    %v3432 = vunpack.c.l.b16 %v3281
    %v3433 = vunpack.c.h.b16 %v3281
    %v3434 = vunpack.c.l.b16 %v3282
    %v3435 = vunpack.c.h.b16 %v3282
    %v3436 = vunpack.c.l.b16 %v3283
    %v3437 = vunpack.c.h.b16 %v3283
    %v3438 = vunpack.c.l.b16 %v3284
    %v3439 = vunpack.c.h.b16 %v3284
    %v3440 = vunpack.c.l.b16 %v3285
    %v3441 = vunpack.c.h.b16 %v3285
    %v3442 = vunpack.c.l.b16 %v3286
    %v3443 = vunpack.c.h.b16 %v3286
    %v3444 = vunpack.c.l.b16 %v3287
    %v3445 = vunpack.c.h.b16 %v3287
    %v3446 = vunpack.c.l.b16 %v3288
    %v3447 = vunpack.c.h.b16 %v3288
    %v3448 = vunpack.c.l.b16 %v3289
    %v3449 = vunpack.c.h.b16 %v3289
    %v3450 = vunpack.c.l.b16 %v3290
    %v3451 = vunpack.c.h.b16 %v3290
    %v3452 = vunpack.c.l.b16 %v3291
    %v3453 = vunpack.c.h.b16 %v3291
    %v3454 = vunpack.c.l.b16 %v3292
    %v3455 = vunpack.c.h.b16 %v3292
    %v3456 = vunpack.c.l.b16 %v3293
    %v3457 = vunpack.c.h.b16 %v3293
    %v3458 = vunpack.c.l.b16 %v3294
    %v3459 = vunpack.c.h.b16 %v3294
    %v3460 = vunpack.c.l.b16 %v3295
    %v3461 = vunpack.c.h.b16 %v3295
    %v3462 = vunpack.c.l.b16 %v3296
    %v3463 = vunpack.c.h.b16 %v3296
    %v3464 = vunpack.c.l.b16 %v3297
    %v3465 = vunpack.c.h.b16 %v3297
    %v3466 = vunpack.c.l.b16 %v3298
    %v3467 = vunpack.c.h.b16 %v3298
    %v3468 = vunpack.c.l.b16 %v3299
    %v3469 = vunpack.c.h.b16 %v3299
    %v3470 = vunpack.c.l.b16 %v3300
    %v3471 = vunpack.c.h.b16 %v3300
    %v3472 = vunpack.c.l.b16 %v3301
    %v3473 = vunpack.c.h.b16 %v3301
    %v3474 = vunpack.c.l.b16 %v3302
    %v3475 = vunpack.c.h.b16 %v3302
    %v3476 = vunpack.c.l.b16 %v3303
    %v3477 = vunpack.c.h.b16 %v3303
    %v3478 = vunpack.c.l.b16 %v3304
    %v3479 = vunpack.c.h.b16 %v3304
    %v3480 = vunpack.c.l.b16 %v3305
    %v3481 = vunpack.c.h.b16 %v3305
    %v3482 = vunpack.c.l.b16 %v3306
    %v3483 = vunpack.c.h.b16 %v3306
    %v3484 = vunpack.c.l.b16 %v3307
    %v3485 = vunpack.c.h.b16 %v3307
    %v3486 = vunpack.c.l.b16 %v3308
    %v3487 = vunpack.c.h.b16 %v3308
    %v3488 = vunpack.c.l.b16 %v3309
    %v3489 = vunpack.c.h.b16 %v3309
    %v3490 = vunpack.c.l.b16 %v3310
    %v3491 = vunpack.c.h.b16 %v3310
    %v3492 = vunpack.c.l.b16 %v3311
    %v3493 = vunpack.c.h.b16 %v3311
    %v3494 = vunpack.c.l.b16 %v3312
    %v3495 = vunpack.c.h.b16 %v3312
    %v3496 = vunpack.c.l.b16 %v3313
    %v3497 = vunpack.c.h.b16 %v3313
    %v3498 = vunpack.c.l.b16 %v3314
    %v3499 = vunpack.c.h.b16 %v3314
    %v3500 = vunpack.c.l.b16 %v3315
    %v3501 = vunpack.c.h.b16 %v3315
    %v3502 = vunpack.c.l.b16 %v3316
    %v3503 = vunpack.c.h.b16 %v3316
    %v3504 = vunpack.c.l.b16 %v3317
    %v3505 = vunpack.c.h.b16 %v3317
    %v3506 = vunpack.c.l.b16 %v3318
    %v3507 = vunpack.c.h.b16 %v3318
    %v3508 = vunpack.c.l.b16 %v3319
    %v3509 = vunpack.c.h.b16 %v3319
    %v3510 = vunpack.c.l.b16 %v3320
    %v3511 = vunpack.c.h.b16 %v3320
    %v3512 = vunpack.c.l.b16 %v3321
    %v3513 = vunpack.c.h.b16 %v3321
    %v3514 = vunpack.c.l.b16 %v3322
    %v3515 = vunpack.c.h.b16 %v3322
    %v3516 = vunpack.c.l.b16 %v3323
    %v3517 = vunpack.c.h.b16 %v3323
    %v3518 = vunpack.c.l.b16 %v3324
    %v3519 = vunpack.c.h.b16 %v3324
    %v3520 = vunpack.c.l.b16 %v3325
    %v3521 = vunpack.c.h.b16 %v3325
    %v3522 = vunpack.c.l.b16 %v3326
    %v3523 = vunpack.c.h.b16 %v3326
    %v3524 = vunpack.c.l.b16 %v3327
    %v3525 = vunpack.c.h.b16 %v3327
    %v3526 = vunpack.c.l.b16 %v3328
    %v3527 = vunpack.c.h.b16 %v3328
    %v3528 = vunpack.c.l.b16 %v3329
    %v3529 = vunpack.c.h.b16 %v3329
    %v3530 = vunpack.c.l.b16 %v3330
    %v3531 = vunpack.c.h.b16 %v3330
    %v3532 = vunpack.c.l.b16 %v3331
    %v3533 = vunpack.c.h.b16 %v3331
    %v3534 = vunpack.c.l.b16 %v3332
    %v3535 = vunpack.c.h.b16 %v3332
    %v3536 = vunpack.c.l.b16 %v3333
    %v3537 = vunpack.c.h.b16 %v3333
    %v3538 = vpack.c.b16 %v3412, %v3410
    %v3539 = vpack.c.b16 %v3413, %v3411
    %v3540 = vpack.c.b16 %v3416, %v3414
    %v3541 = vpack.c.b16 %v3417, %v3415
    %v3542 = vpack.c.b16 %v3420, %v3418
    %v3543 = vpack.c.b16 %v3421, %v3419
    %v3544 = vpack.c.b16 %v3424, %v3422
    %v3545 = vpack.c.b16 %v3425, %v3423
    %v3546 = vpack.c.b16 %v3428, %v3426
    %v3547 = vpack.c.b16 %v3429, %v3427
    %v3548 = vpack.c.b16 %v3432, %v3430
    %v3549 = vpack.c.b16 %v3433, %v3431
    %v3550 = vpack.c.b16 %v3436, %v3434
    %v3551 = vpack.c.b16 %v3437, %v3435
    %v3552 = vpack.c.b16 %v3440, %v3438
    %v3553 = vpack.c.b16 %v3441, %v3439
    %v3554 = vpack.c.b16 %v3444, %v3442
    %v3555 = vpack.c.b16 %v3445, %v3443
    %v3556 = vpack.c.b16 %v3448, %v3446
    %v3557 = vpack.c.b16 %v3449, %v3447
    %v3558 = vpack.c.b16 %v3452, %v3450
    %v3559 = vpack.c.b16 %v3453, %v3451
    %v3560 = vpack.c.b16 %v3456, %v3454
    %v3561 = vpack.c.b16 %v3457, %v3455
    %v3562 = vpack.c.b16 %v3460, %v3458
    %v3563 = vpack.c.b16 %v3461, %v3459
    %v3564 = vpack.c.b16 %v3464, %v3462
    %v3565 = vpack.c.b16 %v3465, %v3463
    %v3566 = vpack.c.b16 %v3468, %v3466
    %v3567 = vpack.c.b16 %v3469, %v3467
    %v3568 = vpack.c.b16 %v3472, %v3470
    %v3569 = vpack.c.b16 %v3473, %v3471
    %v3570 = vpack.c.b16 %v3476, %v3474
    %v3571 = vpack.c.b16 %v3477, %v3475
    %v3572 = vpack.c.b16 %v3480, %v3478
    %v3573 = vpack.c.b16 %v3481, %v3479
    %v3574 = vpack.c.b16 %v3484, %v3482
    %v3575 = vpack.c.b16 %v3485, %v3483
    %v3576 = vpack.c.b16 %v3488, %v3486
    %v3577 = vpack.c.b16 %v3489, %v3487
    %v3578 = vpack.c.b16 %v3492, %v3490
    %v3579 = vpack.c.b16 %v3493, %v3491
    %v3580 = vpack.c.b16 %v3496, %v3494
    %v3581 = vpack.c.b16 %v3497, %v3495
    %v3582 = vpack.c.b16 %v3500, %v3498
    %v3583 = vpack.c.b16 %v3501, %v3499
    %v3584 = vpack.c.b16 %v3504, %v3502
    %v3585 = vpack.c.b16 %v3505, %v3503
    %v3586 = vpack.c.b16 %v3508, %v3506
    %v3587 = vpack.c.b16 %v3509, %v3507
    %v3588 = vpack.c.b16 %v3512, %v3510
    %v3589 = vpack.c.b16 %v3513, %v3511
    %v3590 = vpack.c.b16 %v3516, %v3514
    %v3591 = vpack.c.b16 %v3517, %v3515
    %v3592 = vpack.c.b16 %v3520, %v3518
    %v3593 = vpack.c.b16 %v3521, %v3519
    %v3594 = vpack.c.b16 %v3524, %v3522
    %v3595 = vpack.c.b16 %v3525, %v3523
    %v3596 = vpack.c.b16 %v3528, %v3526
    %v3597 = vpack.c.b16 %v3529, %v3527
    %v3598 = vpack.c.b16 %v3532, %v3530
    %v3599 = vpack.c.b16 %v3533, %v3531
    %v3600 = vpack.c.b16 %v3536, %v3534
    %v3601 = vpack.c.b16 %v3537, %v3535
    %3666 = vmatprep.subr.bf16.mxu0 %v3539
    %3667 = vmatpush1.bf16.msra.mxu0 %v3538
    %3668 = vmatprep.subr.bf16.mxu0 %v3541
    %3669 = vmatpush1.bf16.msra.mxu0 %v3540
    %3670 = vmatprep.subr.bf16.mxu0 %v3543
    %3671 = vmatpush1.bf16.msra.mxu0 %v3542
    %3672 = vmatprep.subr.bf16.mxu0 %v3545
    %3673 = vmatpush1.bf16.msra.mxu0 %v3544
    %3674 = vmatprep.subr.bf16.mxu0 %v3547
    %3675 = vmatpush1.bf16.msra.mxu0 %v3546
    %3676 = vmatprep.subr.bf16.mxu0 %v3549
    %3677 = vmatpush1.bf16.msra.mxu0 %v3548
    %3678 = vmatprep.subr.bf16.mxu0 %v3551
    %3679 = vmatpush1.bf16.msra.mxu0 %v3550
    %3680 = vmatprep.subr.bf16.mxu0 %v3553
    %3681 = vmatpush1.bf16.msra.mxu0 %v3552
    %3682 = vmatprep.subr.bf16.mxu0 %v3555
    %3683 = vmatpush1.bf16.msra.mxu0 %v3554
    %3684 = vmatprep.subr.bf16.mxu0 %v3557
    %3685 = vmatpush1.bf16.msra.mxu0 %v3556
    %3686 = vmatprep.subr.bf16.mxu0 %v3559
    %3687 = vmatpush1.bf16.msra.mxu0 %v3558
    %3688 = vmatprep.subr.bf16.mxu0 %v3561
    %3689 = vmatpush1.bf16.msra.mxu0 %v3560
    %3690 = vmatprep.subr.bf16.mxu0 %v3563
    %3691 = vmatpush1.bf16.msra.mxu0 %v3562
    %3692 = vmatprep.subr.bf16.mxu0 %v3565
    %3693 = vmatpush1.bf16.msra.mxu0 %v3564
    %3694 = vmatprep.subr.bf16.mxu0 %v3567
    %3695 = vmatpush1.bf16.msra.mxu0 %v3566
    %3696 = vmatprep.subr.bf16.mxu0 %v3569
    %3697 = vmatpush1.bf16.msra.mxu0 %v3568
    %3698 = vmatprep.mubr.bf16.mxu0 %v3267
    %3699 = vmatmul.mubr.bf16.gmra.mrb[0].mxu0 %v3266
    %v3700 = vpop.f32.mrb[0].mxu0
    %v3701 = vadd.f32 %v3339, %v3700
    %v3702 = vpop.f32.mrb[0].mxu0
    %v3703 = vadd.f32 %v3343, %v3702
    %v3704 = vpop.f32.mrb[0].mxu0
    %v3705 = vpop.f32.mrb[0].mxu0
    %3706 = vdwg.mxu0
    %3707 = vmatprep.subr.bf16.mxu0 %v3571
    %3708 = vmatpush1.bf16.msra.mxu0 %v3570
    %3709 = vmatprep.subr.bf16.mxu0 %v3573
    %3710 = vmatpush1.bf16.msra.mxu0 %v3572
    %3711 = vmatprep.subr.bf16.mxu0 %v3575
    %3712 = vmatpush1.bf16.msra.mxu0 %v3574
    %3713 = vmatprep.subr.bf16.mxu0 %v3577
    %3714 = vmatpush1.bf16.msra.mxu0 %v3576
    %3715 = vmatprep.subr.bf16.mxu0 %v3579
    %3716 = vmatpush1.bf16.msra.mxu0 %v3578
    %3717 = vmatprep.subr.bf16.mxu0 %v3581
    %3718 = vmatpush1.bf16.msra.mxu0 %v3580
    %3719 = vmatprep.subr.bf16.mxu0 %v3583
    %3720 = vmatpush1.bf16.msra.mxu0 %v3582
    %3721 = vmatprep.subr.bf16.mxu0 %v3585
    %3722 = vmatpush1.bf16.msra.mxu0 %v3584
    %3723 = vmatprep.subr.bf16.mxu0 %v3587
    %3724 = vmatpush1.bf16.msra.mxu0 %v3586
    %3725 = vmatprep.subr.bf16.mxu0 %v3589
    %3726 = vmatpush1.bf16.msra.mxu0 %v3588
    %3727 = vmatprep.subr.bf16.mxu0 %v3591
    %3728 = vmatpush1.bf16.msra.mxu0 %v3590
    %3729 = vmatprep.subr.bf16.mxu0 %v3593
    %3730 = vmatpush1.bf16.msra.mxu0 %v3592
    %3731 = vmatprep.subr.bf16.mxu0 %v3595
    %3732 = vmatpush1.bf16.msra.mxu0 %v3594
    %3733 = vmatprep.subr.bf16.mxu0 %v3597
    %3734 = vmatpush1.bf16.msra.mxu0 %v3596
    %3735 = vmatprep.subr.bf16.mxu0 %v3599
    %3736 = vmatpush1.bf16.msra.mxu0 %v3598
    %3737 = vmatprep.subr.bf16.mxu0 %v3601
    %3738 = vmatpush1.bf16.msra.mxu0 %v3600
    %3739 = vmatprep.mubr.bf16.mxu0 %v3269
    %3740 = vmatmul.mubr.bf16.gmra.mrb[0].mxu0 %v3268
    %v3741 = vpop.f32.mrb[0].mxu0
    %v3742 = vadd.f32 %v3701, %v3741
    %v3743 = vpop.f32.mrb[0].mxu0
    %v3744 = vadd.f32 %v3703, %v3743
    %v3745 = vpop.f32.mrb[0].mxu0
    %v3746 = vpop.f32.mrb[0].mxu0
    %3747 = vdwg.mxu0
    %v3748 = vmax.f32 %v3742, 0.0
    %v3749 = vmax.f32 %v3744, 0.0
    %v3750 = vpack.c.bf16 %v3748, %v3748
    %v3751 = vpack.c.bf16 %v3749, %v3749
    %v3752 = vld [vmem:[%s11] sm:$0xff]
    %v3753 = vld [vmem:[%s11 + $0x8] sm:$0xff]
    %v3754 = vld [vmem:[%s11 + $0x10] sm:$0xff]
    %v3755 = vld [vmem:[%s11 + $0x18] sm:$0xff]
    %v3756 = vld [vmem:[%s11 + $0x20] sm:$0xff]
    %v3757 = vld [vmem:[%s11 + $0x28] sm:$0xff]
    %v3758 = vld [vmem:[%s11 + $0x30] sm:$0xff]
    %v3759 = vld [vmem:[%s11 + $0x38] sm:$0xff]
    %v3760 = vld [vmem:[%s11 + $0x40] sm:$0xff]
    %v3761 = vld [vmem:[%s11 + $0x48] sm:$0xff]
    %v3762 = vld [vmem:[%s11 + $0x50] sm:$0xff]
    %v3763 = vld [vmem:[%s11 + $0x58] sm:$0xff]
    %v3764 = vld [vmem:[%s11 + $0x60] sm:$0xff]
    %v3765 = vld [vmem:[%s11 + $0x68] sm:$0xff]
    %v3766 = vld [vmem:[%s11 + $0x70] sm:$0xff]
    %v3767 = vld [vmem:[%s11 + $0x78] sm:$0xff]
    %v3768 = vld [vmem:[%s11 + $0x80] sm:$0xff]
    %v3769 = vld [vmem:[%s11 + $0x88] sm:$0xff]
    %v3770 = vld [vmem:[%s11 + $0x90] sm:$0xff]
    %v3771 = vld [vmem:[%s11 + $0x98] sm:$0xff]
    %v3772 = vld [vmem:[%s11 + $0xa0] sm:$0xff]
    %v3773 = vld [vmem:[%s11 + $0xa8] sm:$0xff]
    %v3774 = vld [vmem:[%s11 + $0xb0] sm:$0xff]
    %v3775 = vld [vmem:[%s11 + $0xb8] sm:$0xff]
    %v3776 = vld [vmem:[%s11 + $0xc0] sm:$0xff]
    %v3777 = vld [vmem:[%s11 + $0xc8] sm:$0xff]
    %v3778 = vld [vmem:[%s11 + $0xd0] sm:$0xff]
    %v3779 = vld [vmem:[%s11 + $0xd8] sm:$0xff]
    %v3780 = vld [vmem:[%s11 + $0xe0] sm:$0xff]
    %v3781 = vld [vmem:[%s11 + $0xe8] sm:$0xff]
    %v3782 = vld [vmem:[%s11 + $0xf0] sm:$0xff]
    %v3783 = vld [vmem:[%s11 + $0xf8] sm:$0xff]
    %v3784 = vld [vmem:[%s12] sm:$0x3]
    %v3786 = vlaneseq
    %v3787 = vshrl.u32 %v3786, 7
    %v3788 = vsub.s32 0, %v3787
    %v3789 = vrot.slane %v3784, %v3788
    %v3790 = vlaneseq
    %v3791 = vshrl.u32 %v3790, 7
    %v3792 = vsub.s32 1, %v3791
    %v3793 = vrot.slane %v3784, %v3792
    %v3828 = vunpack.c.l.b16 %v3752
    %v3829 = vunpack.c.h.b16 %v3752
    %v3830 = vunpack.c.l.b16 %v3753
    %v3831 = vunpack.c.h.b16 %v3753
    %v3832 = vunpack.c.l.b16 %v3754
    %v3833 = vunpack.c.h.b16 %v3754
    %v3834 = vunpack.c.l.b16 %v3755
    %v3835 = vunpack.c.h.b16 %v3755
    %v3836 = vunpack.c.l.b16 %v3756
    %v3837 = vunpack.c.h.b16 %v3756
    %v3838 = vunpack.c.l.b16 %v3757
    %v3839 = vunpack.c.h.b16 %v3757
    %v3840 = vunpack.c.l.b16 %v3758
    %v3841 = vunpack.c.h.b16 %v3758
    %v3842 = vunpack.c.l.b16 %v3759
    %v3843 = vunpack.c.h.b16 %v3759
    %v3844 = vunpack.c.l.b16 %v3760
    %v3845 = vunpack.c.h.b16 %v3760
    %v3846 = vunpack.c.l.b16 %v3761
    %v3847 = vunpack.c.h.b16 %v3761
    %v3848 = vunpack.c.l.b16 %v3762
    %v3849 = vunpack.c.h.b16 %v3762
    %v3850 = vunpack.c.l.b16 %v3763
    %v3851 = vunpack.c.h.b16 %v3763
    %v3852 = vunpack.c.l.b16 %v3764
    %v3853 = vunpack.c.h.b16 %v3764
    %v3854 = vunpack.c.l.b16 %v3765
    %v3855 = vunpack.c.h.b16 %v3765
    %v3856 = vunpack.c.l.b16 %v3766
    %v3857 = vunpack.c.h.b16 %v3766
    %v3858 = vunpack.c.l.b16 %v3767
    %v3859 = vunpack.c.h.b16 %v3767
    %v3860 = vunpack.c.l.b16 %v3768
    %v3861 = vunpack.c.h.b16 %v3768
    %v3862 = vunpack.c.l.b16 %v3769
    %v3863 = vunpack.c.h.b16 %v3769
    %v3864 = vunpack.c.l.b16 %v3770
    %v3865 = vunpack.c.h.b16 %v3770
    %v3866 = vunpack.c.l.b16 %v3771
    %v3867 = vunpack.c.h.b16 %v3771
    %v3868 = vunpack.c.l.b16 %v3772
    %v3869 = vunpack.c.h.b16 %v3772
    %v3870 = vunpack.c.l.b16 %v3773
    %v3871 = vunpack.c.h.b16 %v3773
    %v3872 = vunpack.c.l.b16 %v3774
    %v3873 = vunpack.c.h.b16 %v3774
    %v3874 = vunpack.c.l.b16 %v3775
    %v3875 = vunpack.c.h.b16 %v3775
    %v3876 = vunpack.c.l.b16 %v3776
    %v3877 = vunpack.c.h.b16 %v3776
    %v3878 = vunpack.c.l.b16 %v3777
    %v3879 = vunpack.c.h.b16 %v3777
    %v3880 = vunpack.c.l.b16 %v3778
    %v3881 = vunpack.c.h.b16 %v3778
    %v3882 = vunpack.c.l.b16 %v3779
    %v3883 = vunpack.c.h.b16 %v3779
    %v3884 = vunpack.c.l.b16 %v3780
    %v3885 = vunpack.c.h.b16 %v3780
    %v3886 = vunpack.c.l.b16 %v3781
    %v3887 = vunpack.c.h.b16 %v3781
    %v3888 = vunpack.c.l.b16 %v3782
    %v3889 = vunpack.c.h.b16 %v3782
    %v3890 = vunpack.c.l.b16 %v3783
    %v3891 = vunpack.c.h.b16 %v3783
    %v3892 = vpack.c.b16 %v3830, %v3828
    %v3893 = vpack.c.b16 %v3831, %v3829
    %v3894 = vpack.c.b16 %v3834, %v3832
    %v3895 = vpack.c.b16 %v3835, %v3833
    %v3896 = vpack.c.b16 %v3838, %v3836
    %v3897 = vpack.c.b16 %v3839, %v3837
    %v3898 = vpack.c.b16 %v3842, %v3840
    %v3899 = vpack.c.b16 %v3843, %v3841
    %v3900 = vpack.c.b16 %v3846, %v3844
    %v3901 = vpack.c.b16 %v3847, %v3845
    %v3902 = vpack.c.b16 %v3850, %v3848
    %v3903 = vpack.c.b16 %v3851, %v3849
    %v3904 = vpack.c.b16 %v3854, %v3852
    %v3905 = vpack.c.b16 %v3855, %v3853
    %v3906 = vpack.c.b16 %v3858, %v3856
    %v3907 = vpack.c.b16 %v3859, %v3857
    %v3908 = vpack.c.b16 %v3862, %v3860
    %v3909 = vpack.c.b16 %v3863, %v3861
    %v3910 = vpack.c.b16 %v3866, %v3864
    %v3911 = vpack.c.b16 %v3867, %v3865
    %v3912 = vpack.c.b16 %v3870, %v3868
    %v3913 = vpack.c.b16 %v3871, %v3869
    %v3914 = vpack.c.b16 %v3874, %v3872
    %v3915 = vpack.c.b16 %v3875, %v3873
    %v3916 = vpack.c.b16 %v3878, %v3876
    %v3917 = vpack.c.b16 %v3879, %v3877
    %v3918 = vpack.c.b16 %v3882, %v3880
    %v3919 = vpack.c.b16 %v3883, %v3881
    %v3920 = vpack.c.b16 %v3886, %v3884
    %v3921 = vpack.c.b16 %v3887, %v3885
    %v3922 = vpack.c.b16 %v3890, %v3888
    %v3923 = vpack.c.b16 %v3891, %v3889
    %3956 = vmatprep.subr.bf16.mxu0 %v3893
    %3957 = vmatpush1.bf16.msra.mxu0 %v3892
    %3958 = vmatprep.subr.bf16.mxu0 %v3895
    %3959 = vmatpush1.bf16.msra.mxu0 %v3894
    %3960 = vmatprep.subr.bf16.mxu0 %v3897
    %3961 = vmatpush1.bf16.msra.mxu0 %v3896
    %3962 = vmatprep.subr.bf16.mxu0 %v3899
    %3963 = vmatpush1.bf16.msra.mxu0 %v3898
    %3964 = vmatprep.subr.bf16.mxu0 %v3901
    %3965 = vmatpush1.bf16.msra.mxu0 %v3900
    %3966 = vmatprep.subr.bf16.mxu0 %v3903
    %3967 = vmatpush1.bf16.msra.mxu0 %v3902
    %3968 = vmatprep.subr.bf16.mxu0 %v3905
    %3969 = vmatpush1.bf16.msra.mxu0 %v3904
    %3970 = vmatprep.subr.bf16.mxu0 %v3907
    %3971 = vmatpush1.bf16.msra.mxu0 %v3906
    %3972 = vmatprep.subr.bf16.mxu0 %v3909
    %3973 = vmatpush1.bf16.msra.mxu0 %v3908
    %3974 = vmatprep.subr.bf16.mxu0 %v3911
    %3975 = vmatpush1.bf16.msra.mxu0 %v3910
    %3976 = vmatprep.subr.bf16.mxu0 %v3913
    %3977 = vmatpush1.bf16.msra.mxu0 %v3912
    %3978 = vmatprep.subr.bf16.mxu0 %v3915
    %3979 = vmatpush1.bf16.msra.mxu0 %v3914
    %3980 = vmatprep.subr.bf16.mxu0 %v3917
    %3981 = vmatpush1.bf16.msra.mxu0 %v3916
    %3982 = vmatprep.subr.bf16.mxu0 %v3919
    %3983 = vmatpush1.bf16.msra.mxu0 %v3918
    %3984 = vmatprep.subr.bf16.mxu0 %v3921
    %3985 = vmatpush1.bf16.msra.mxu0 %v3920
    %3986 = vmatprep.subr.bf16.mxu0 %v3923
    %3987 = vmatpush1.bf16.msra.mxu0 %v3922
    %3988 = vmatprep.mubr.bf16.mxu0 %v3751
    %3989 = vmatmul.mubr.bf16.gmra.mrb[0].mxu0 %v3750
    %v3990 = vpop.f32.mrb[0].mxu0
    %v3991 = vadd.f32 %v3789, %v3990
    %v3992 = vpop.f32.mrb[0].mxu0
    %v3993 = vadd.f32 %v3793, %v3992
    %v3994 = vpop.f32.mrb[0].mxu0
    %v3995 = vpop.f32.mrb[0].mxu0
    %3996 = vdwg.mxu0
    %v3999 = vcombine.low %v3991, %v3993
    %v4001 = vunpack.c.l.s4 1983009808
    %v4002 = vunpack.c.0.s8 %v4001
    %v4003 = vlaneseq
    %v4004 = vshrl.u32 %v4003, 7
    %v4005 = vsub.s32 %v4002, %v4004
    %v4006 = vrot.slane %v3999, %v4005
    %4008 = vst [vmem:[%s13] sm:$0xf] %v4006
  $region61: #{stnkd_forward.1} parent=0 // pred_fallthru
    _
  // Predicated region
  $region62: #{stnkd_forward.1} parent=0 // pred_check
    _
  $region63: #{stnkd_forward.1} parent=0 // pred_check_branch
    %4010 = sbr.rel (0) target = $region65
  $region64: #{stnkd_forward.1} parent=0 // pred_region
    _
  $region65: #{stnkd_forward.1} parent=0 // pred_fallthru
    _
  // Predicated region
  $region66: #{stnkd_forward.1} parent=0 // pred_check
    _
  $region67: #{stnkd_forward.1} parent=0 // pred_check_branch
    %4012 = sbr.rel (0) target = $region69
  $region68: #{stnkd_forward.1} parent=0 // pred_region
    _
  $region69: #{stnkd_forward.1} parent=0 // pred_fallthru
    _

</llo_original>
